<compile_context>
chip_gen: v7x
topology: tpu7x:2x2x1
jax: 0.10.0
libtpu: 0.0.40
codegen_flags: <defaults>
</compile_context>

<pallas_src>
from functools import partial

import jax
import jax.numpy as jnp
from jax import lax
from jax.experimental import pallas as pl
from jax.experimental.pallas import tpu as pltpu


# --------------------------------------------------------------------------
# Kernel
# --------------------------------------------------------------------------
def _residual_block_kernel(x_ref, m1_ref, s1_ref, b1_ref,
                           m2_ref, s2_ref, b2_ref,
                           o_ref, pad_ref):
    """Fused residual block for a block of `Nb` batch elements.

    x_ref    : (Nb, H, W*C) f32      unpadded input rows (lane-dense)
    m{1,2}   : (3, W*C, W*C)         block-Toeplitz conv weights (per kh tap)
    s/b      : (1, W*C) f32          folded BN(+conv-bias) scale / bias
    o_ref    : (Nb, H, W*C)          output rows (lane-dense)
    pad_ref  : VMEM scratch (Nb, SLAB, W*C) f32, SLAB = roundup(H+2, 8);
               rows 0 and H+1 are the vertical zero padding, rows 1..H hold
               the current conv input; rows H+2..SLAB-1 are never read.
    """
    Nb, H, WC = x_ref.shape
    R = Nb * H

    cdt = m1_ref.dtype                          # compute dtype (bf16 or f32)
    prec = lax.Precision.HIGHEST if cdt == jnp.float32 else None

    def mm(a, m):
        return jnp.dot(a.astype(cdt), m, precision=prec,
                       preferred_element_type=jnp.float32)

    def rows(dh):
        # Rows dh .. dh+H-1 of every padded slab, flattened to (Nb*H, W*C).
        # H is a multiple of 8 and WC a multiple of 128, so the flatten is
        # layout-trivial; the shifted window load is a cheap sublane shift.
        return pad_ref[:, dh:dh + H, :].reshape(R, WC)

    def conv3x3(m_ref):
        # kh = 1 (center), 0 (row above), 2 (row below); horizontal taps and
        # horizontal zero padding are folded into the Toeplitz matrices.
        acc = mm(rows(1), m_ref[1])
        acc += mm(rows(0), m_ref[0])
        acc += mm(rows(2), m_ref[2])
        return acc

    # Vertical zero-padding borders: two 1-row stores per step (cheap).
    # Do NOT gate these on program_id == 0: under megacore each core owns its
    # own scratch and every step fully rewrites the interior anyway.
    pad_ref[:, 0:1, :] = jnp.zeros((Nb, 1, WC), pad_ref.dtype)
    pad_ref[:, H + 1:H + 2, :] = jnp.zeros((Nb, 1, WC), pad_ref.dtype)

    # ---- conv1 + bn1 + relu ------------------------------------------------
    x3 = x_ref[...]                              # f32; reused as the residual
    pad_ref[:, 1:H + 1, :] = x3
    acc1 = conv3x3(m1_ref)
    h1 = jnp.maximum(acc1 * s1_ref[...] + b1_ref[...], 0.0)

    # ---- conv2 + bn2 (reuse the same padded scratch; borders stay zero) ----
    pad_ref[:, 1:H + 1, :] = h1.reshape(Nb, H, WC)
    acc2 = conv3x3(m2_ref)

    # ---- residual add + relu, dense lane-width store -----------------------
    out = jnp.maximum(acc2 * s2_ref[...] + b2_ref[...] + x3.reshape(R, WC), 0.0)
    o_ref[...] = out.astype(o_ref.dtype).reshape(Nb, H, WC)


# --------------------------------------------------------------------------
# Weight / BN preprocessing (wrapper side, runs under jit)
# --------------------------------------------------------------------------
def _toeplitz_weights(w, W):
    """PyTorch conv weight (Cout, Cin, 3, 3) -> (3, W*Cin, W*Cout) block-
    Toeplitz matrices with
        M[kh, win*Cin + ci, wout*Cout + co] = w[co, ci, kh, win - wout + 1]
    and zero when the kw tap falls outside [0, 3) (i.e. the horizontal zero
    padding is folded into the matrix)."""
    Cout, Cin, _, _ = w.shape
    k = jnp.transpose(w, (2, 3, 1, 0))           # (kh, kw, Cin, Cout)
    M = jnp.zeros((3, W * Cin, W * Cout), jnp.float32)
    for kw in range(3):
        d = kw - 1
        for wout in range(W):
            win = wout + d
            if 0 <= win < W:
                M = M.at[:, win * Cin:(win + 1) * Cin,
                         wout * Cout:(wout + 1) * Cout].set(k[:, kw])
    return M


def _fold_bn(conv_bias, gamma, beta, mean, var, eps, W):
    scale = gamma / jnp.sqrt(var + eps)
    bias = scale * (conv_bias - mean) + beta
    # Tile per-channel vectors over W so they broadcast over the (W*C) lanes.
    return (jnp.tile(scale, W)[None, :].astype(jnp.float32),
            jnp.tile(bias, W)[None, :].astype(jnp.float32))


def _pick_block_n(N, H, target_rows=512, max_block=32):
    """Largest divisor of N such that R = block_n*H lands near 256-512 rows
    (good MXU M dimension) while keeping the per-step VMEM working set small
    enough for every TPU generation (v7x has 64 MiB physical VMEM)."""
    cap = max(1, min(max_block, target_rows // max(H, 1)))
    bn = min(N, cap)
    while N % bn:
        bn -= 1
    return bn


# --------------------------------------------------------------------------
# Wrappers
# --------------------------------------------------------------------------
def residual_block_nhwc(x, params, eps=1e-5, block_n=None,
                        compute_dtype=jnp.bfloat16, out_dtype=jnp.float32):
    """x: (N, H, W, C) float32.  Returns (N, H, W, C) `out_dtype`.

    Multi-block networks should call this directly (NHWC activations, and
    optionally out_dtype=jnp.bfloat16 to halve inter-block HBM traffic)."""
    N, H, W, C = x.shape
    WC = W * C

    if block_n is None:
        block_n = _pick_block_n(N, H)
    else:
        block_n = max(1, min(int(block_n), N))
        while N % block_n:
            block_n -= 1
    G = N // block_n
    # NOTE: on v7x (2 TensorCores) prefer an even G >= 2 when N allows it;
    # dimension_semantics=("parallel",) then shards the grid across both TCs.

    SLAB = ((H + 2 + 7) // 8) * 8                # per-element padded slab rows

    xr = x.reshape(N, H, WC)                     # free on contiguous NHWC

    m1 = _toeplitz_weights(params['w1'], W).astype(compute_dtype)
    m2 = _toeplitz_weights(params['w2'], W).astype(compute_dtype)
    s1, b1 = _fold_bn(params['cb1'], params['g1'], params['be1'],
                      params['m1'], params['v1'], eps, W)
    s2, b2 = _fold_bn(params['cb2'], params['g2'], params['be2'],
                      params['m2'], params['v2'], eps, W)

    def const_spec(shape):
        # Constant index_map -> block resident across grid steps; Buffered(1)
        # drops the useless second buffer (VMEM headroom, esp. on v7x).
        return pl.BlockSpec(shape, lambda n: (0,) * len(shape),
                            pipeline_mode=pl.Buffered(1))

    out = pl.pallas_call(
        _residual_block_kernel,
        out_shape=jax.ShapeDtypeStruct((N, H, WC), out_dtype),
        grid_spec=pltpu.PrefetchScalarGridSpec(
            num_scalar_prefetch=0,
            grid=(G,),
            in_specs=[
                pl.BlockSpec((block_n, H, WC), lambda n: (n, 0, 0)),
                const_spec((3, WC, WC)), const_spec((1, WC)), const_spec((1, WC)),
                const_spec((3, WC, WC)), const_spec((1, WC)), const_spec((1, WC)),
            ],
            out_specs=pl.BlockSpec((block_n, H, WC), lambda n: (n, 0, 0)),
            scratch_shapes=[pltpu.VMEM((block_n, SLAB, WC), jnp.float32)],
        ),
        compiler_params=pltpu.CompilerParams(
            dimension_semantics=("parallel",),
            vmem_limit_bytes=48 * 1024 * 1024),
    )(xr, m1, s1, b1, m2, s2, b2)

    return out.reshape(N, H, W, C)


@partial(jax.jit, static_argnames=("eps", "block_n", "compute_dtype"))
def residual_block(x_nchw, params, eps=1e-5, block_n=None,
                   compute_dtype=jnp.bfloat16):
    """PyTorch-layout entry point: (N, C, H, W) -> (N, C, H, W) float32.

    Networks with many residual blocks should keep activations in NHWC and
    call residual_block_nhwc directly, so these two transposes disappear."""
    x = jnp.transpose(x_nchw, (0, 2, 3, 1))                   # NHWC
    y = residual_block_nhwc(x, params, eps=eps, block_n=block_n,
                            compute_dtype=compute_dtype)
    return jnp.transpose(y, (0, 3, 1, 2))                     # back to NCHW


# --------------------------------------------------------------------------
# Pure-JAX reference (eval-mode BN), mirrors the PyTorch module
# --------------------------------------------------------------------------
def reference_forward(x_nchw, params, eps=1e-5):
    def conv(x, w, b):
        y = lax.conv_general_dilated(
            x, w, window_strides=(1, 1), padding=((1, 1), (1, 1)),
            dimension_numbers=('NCHW', 'OIHW', 'NCHW'),
            precision=lax.Precision.HIGHEST)
        return y + b[None, :, None, None]

    def bn(x, g, be, m, v):
        return (g[None, :, None, None] * (x - m[None, :, None, None])
                / jnp.sqrt(v[None, :, None, None] + eps)
                + be[None, :, None, None])

    h = jax.nn.relu(bn(conv(x_nchw, params['w1'], params['cb1']),
                       params['g1'], params['be1'], params['m1'], params['v1']))
    h = bn(conv(h, params['w2'], params['cb2']),
           params['g2'], params['be2'], params['m2'], params['v2'])
    return jax.nn.relu(h + x_nchw)


# --------------------------------------------------------------------------
if __name__ == "__main__":
    N, C, H, W = 2, 32, 16, 16          # num_filters = 32
    key = jax.random.PRNGKey(0)
    ks = jax.random.split(key, 13)

    wscale = 1.0 / jnp.sqrt(9.0 * C)
    params = {
        'w1':  jax.random.normal(ks[0], (C, C, 3, 3), jnp.float32) * wscale,
        'cb1': jax.random.normal(ks[1], (C,), jnp.float32) * 0.1,
        'g1':  1.0 + 0.1 * jax.random.normal(ks[2], (C,), jnp.float32),
        'be1': 0.1 * jax.random.normal(ks[3], (C,), jnp.float32),
        'm1':  0.1 * jax.random.normal(ks[4], (C,), jnp.float32),
        'v1':  1.0 + 0.1 * jax.random.uniform(ks[5], (C,), jnp.float32),
        'w2':  jax.random.normal(ks[6], (C, C, 3, 3), jnp.float32) * wscale,
        'cb2': jax.random.normal(ks[7], (C,), jnp.float32) * 0.1,
        'g2':  1.0 + 0.1 * jax.random.normal(ks[8], (C,), jnp.float32),
        'be2': 0.1 * jax.random.normal(ks[9], (C,), jnp.float32),
        'm2':  0.1 * jax.random.normal(ks[10], (C,), jnp.float32),
        'v2':  1.0 + 0.1 * jax.random.uniform(ks[11], (C,), jnp.float32),
    }
    x = jax.random.normal(ks[12], (N, C, H, W), jnp.float32)

    ref = jax.block_until_ready(reference_forward(x, params))

    # Fast path: bf16 MXU operands, f32 accumulation (loose check — bf16
    # operand rounding over the 288-deep effective contraction per conv).
    out = jax.block_until_ready(residual_block(x, params))
    assert out.shape == (N, C, H, W)
    assert jnp.allclose(out, ref, atol=5e-2, rtol=5e-2), \
        f"bf16 path max abs err {jnp.max(jnp.abs(out - ref))}"

    # Full-precision path: f32 operands + Precision.HIGHEST, tight check.
    out_f32 = jax.block_until_ready(
        residual_block(x, params, compute_dtype=jnp.float32))
    assert jnp.allclose(out_f32, ref, atol=1e-3, rtol=1e-3), \
        f"f32 path max abs err {jnp.max(jnp.abs(out_f32 - ref))}"

    print("KERNEL_OK")
</pallas_src>

<mosaic_0001>
module attributes {stable_mosaic.version = 11 : i64} {
  func.func @_residual_block_kernel(%arg0: i32, %arg1: memref<2x16x512xf32, #tpu.memory_space<vmem>>, %arg2: memref<3x512x512xbf16, #tpu.memory_space<vmem>>, %arg3: memref<1x512xf32, #tpu.memory_space<vmem>>, %arg4: memref<1x512xf32, #tpu.memory_space<vmem>>, %arg5: memref<3x512x512xbf16, #tpu.memory_space<vmem>>, %arg6: memref<1x512xf32, #tpu.memory_space<vmem>>, %arg7: memref<1x512xf32, #tpu.memory_space<vmem>>, %arg8: memref<2x16x512xf32, #tpu.memory_space<vmem>>, %arg9: memref<2x24x512xf32, #tpu.memory_space<vmem>>) attributes {dimension_semantics = [#tpu.dimension_semantics<parallel>], iteration_bounds = array<i64: 1>, scalar_prefetch = 0 : i64, scratch_operands = 1 : i64, tpu.core_type = #tpu.core_type<tc>, window_params = [{transform_indices = @transform_0, window_bounds = array<i64: 2, 16, 512>}, {pipeline_mode = #tpu.pipeline_mode<synchronous>, transform_indices = @transform_1, window_bounds = array<i64: 3, 512, 512>}, {pipeline_mode = #tpu.pipeline_mode<synchronous>, transform_indices = @transform_2, window_bounds = array<i64: 1, 512>}, {pipeline_mode = #tpu.pipeline_mode<synchronous>, transform_indices = @transform_3, window_bounds = array<i64: 1, 512>}, {pipeline_mode = #tpu.pipeline_mode<synchronous>, transform_indices = @transform_4, window_bounds = array<i64: 3, 512, 512>}, {pipeline_mode = #tpu.pipeline_mode<synchronous>, transform_indices = @transform_5, window_bounds = array<i64: 1, 512>}, {pipeline_mode = #tpu.pipeline_mode<synchronous>, transform_indices = @transform_6, window_bounds = array<i64: 1, 512>}, {transform_indices = @transform_7, window_bounds = array<i64: 2, 16, 512>}]} {
    %cst = arith.constant 0.000000e+00 : f32
    %0 = vector.broadcast %cst : f32 to vector<2x1x512xf32>
    %c0 = arith.constant 0 : index
    %c0_0 = arith.constant 0 : index
    %c0_1 = arith.constant 0 : index
    %1 = vector.load %arg9[%c0, %c0_0, %c0_1] : memref<2x24x512xf32, #tpu.memory_space<vmem>>, vector<2x1x512xf32>
    tpu.vector_store %arg9[%c0, %c0_0, %c0_1], %0 {strides = array<i32>} : memref<2x24x512xf32, #tpu.memory_space<vmem>>, vector<2x1x512xf32>,
    %cst_2 = arith.constant 0.000000e+00 : f32
    %2 = vector.broadcast %cst_2 : f32 to vector<2x1x512xf32>
    %c0_3 = arith.constant 0 : index
    %c17 = arith.constant 17 : index
    %c0_4 = arith.constant 0 : index
    %3 = vector.load %arg9[%c0_3, %c17, %c0_4] : memref<2x24x512xf32, #tpu.memory_space<vmem>>, vector<2x1x512xf32>
    tpu.vector_store %arg9[%c0_3, %c17, %c0_4], %2 {strides = array<i32>} : memref<2x24x512xf32, #tpu.memory_space<vmem>>, vector<2x1x512xf32>,
    %c0_5 = arith.constant 0 : index
    %c0_6 = arith.constant 0 : index
    %c0_7 = arith.constant 0 : index
    %4 = vector.load %arg1[%c0_5, %c0_6, %c0_7] : memref<2x16x512xf32, #tpu.memory_space<vmem>>, vector<2x16x512xf32>
    %c0_8 = arith.constant 0 : index
    %c1 = arith.constant 1 : index
    %c0_9 = arith.constant 0 : index
    %5 = vector.load %arg9[%c0_8, %c1, %c0_9] : memref<2x24x512xf32, #tpu.memory_space<vmem>>, vector<2x16x512xf32>
    tpu.vector_store %arg9[%c0_8, %c1, %c0_9], %4 {strides = array<i32>} : memref<2x24x512xf32, #tpu.memory_space<vmem>>, vector<2x16x512xf32>,
    %c0_10 = arith.constant 0 : index
    %c1_11 = arith.constant 1 : index
    %c0_12 = arith.constant 0 : index
    %6 = vector.load %arg9[%c0_10, %c1_11, %c0_12] : memref<2x24x512xf32, #tpu.memory_space<vmem>>, vector<2x16x512xf32>
    %7 = vector.shape_cast %6 : vector<2x16x512xf32> to vector<32x512xf32>
    %c1_13 = arith.constant 1 : index
    %c0_14 = arith.constant 0 : index
    %c0_15 = arith.constant 0 : index
    %8 = vector.load %arg2[%c1_13, %c0_14, %c0_15] : memref<3x512x512xbf16, #tpu.memory_space<vmem>>, vector<1x512x512xbf16>
    %9 = vector.shape_cast %8 : vector<1x512x512xbf16> to vector<512x512xbf16>
    %10 = arith.truncf %7 : vector<32x512xf32> to vector<32x512xbf16>
    %cst_16 = arith.constant dense<0.000000e+00> : vector<32x512xf32>
    %11 = tpu.matmul %10, %9, %cst_16 {dimension_numbers = #tpu.dot_dimension_numbers<[1], [0], [0], [1], [0, 0, 1, 1], [], []>} : vector<32x512xbf16>, vector<512x512xbf16>, vector<32x512xf32> -> vector<32x512xf32>
    %c0_17 = arith.constant 0 : index
    %c0_18 = arith.constant 0 : index
    %c0_19 = arith.constant 0 : index
    %12 = vector.load %arg9[%c0_17, %c0_18, %c0_19] : memref<2x24x512xf32, #tpu.memory_space<vmem>>, vector<2x16x512xf32>
    %13 = vector.shape_cast %12 : vector<2x16x512xf32> to vector<32x512xf32>
    %c0_20 = arith.constant 0 : index
    %c0_21 = arith.constant 0 : index
    %c0_22 = arith.constant 0 : index
    %14 = vector.load %arg2[%c0_20, %c0_21, %c0_22] : memref<3x512x512xbf16, #tpu.memory_space<vmem>>, vector<1x512x512xbf16>
    %15 = vector.shape_cast %14 : vector<1x512x512xbf16> to vector<512x512xbf16>
    %16 = arith.truncf %13 : vector<32x512xf32> to vector<32x512xbf16>
    %cst_23 = arith.constant dense<0.000000e+00> : vector<32x512xf32>
    %17 = tpu.matmul %16, %15, %cst_23 {dimension_numbers = #tpu.dot_dimension_numbers<[1], [0], [0], [1], [0, 0, 1, 1], [], []>} : vector<32x512xbf16>, vector<512x512xbf16>, vector<32x512xf32> -> vector<32x512xf32>
    %18 = arith.addf %11, %17 : vector<32x512xf32>
    %c0_24 = arith.constant 0 : index
    %c2 = arith.constant 2 : index
    %c0_25 = arith.constant 0 : index
    %19 = vector.load %arg9[%c0_24, %c2, %c0_25] : memref<2x24x512xf32, #tpu.memory_space<vmem>>, vector<2x16x512xf32>
    %20 = vector.shape_cast %19 : vector<2x16x512xf32> to vector<32x512xf32>
    %c2_26 = arith.constant 2 : index
    %c0_27 = arith.constant 0 : index
    %c0_28 = arith.constant 0 : index
    %21 = vector.load %arg2[%c2_26, %c0_27, %c0_28] : memref<3x512x512xbf16, #tpu.memory_space<vmem>>, vector<1x512x512xbf16>
    %22 = vector.shape_cast %21 : vector<1x512x512xbf16> to vector<512x512xbf16>
    %23 = arith.truncf %20 : vector<32x512xf32> to vector<32x512xbf16>
    %cst_29 = arith.constant dense<0.000000e+00> : vector<32x512xf32>
    %24 = tpu.matmul %23, %22, %cst_29 {dimension_numbers = #tpu.dot_dimension_numbers<[1], [0], [0], [1], [0, 0, 1, 1], [], []>} : vector<32x512xbf16>, vector<512x512xbf16>, vector<32x512xf32> -> vector<32x512xf32>
    %25 = arith.addf %18, %24 : vector<32x512xf32>
    %c0_30 = arith.constant 0 : index
    %c0_31 = arith.constant 0 : index
    %26 = vector.load %arg3[%c0_30, %c0_31] : memref<1x512xf32, #tpu.memory_space<vmem>>, vector<1x512xf32>
    %27 = vector.broadcast %26 : vector<1x512xf32> to vector<32x512xf32>
    %28 = arith.mulf %25, %27 : vector<32x512xf32>
    %c0_32 = arith.constant 0 : index
    %c0_33 = arith.constant 0 : index
    %29 = vector.load %arg4[%c0_32, %c0_33] : memref<1x512xf32, #tpu.memory_space<vmem>>, vector<1x512xf32>
    %30 = vector.broadcast %29 : vector<1x512xf32> to vector<32x512xf32>
    %31 = arith.addf %28, %30 : vector<32x512xf32>
    %cst_34 = arith.constant 0.000000e+00 : f32
    %32 = vector.broadcast %cst_34 : f32 to vector<32x512xf32>
    %33 = arith.maximumf %31, %32 : vector<32x512xf32>
    %34 = vector.shape_cast %33 : vector<32x512xf32> to vector<2x16x512xf32>
    %c0_35 = arith.constant 0 : index
    %c1_36 = arith.constant 1 : index
    %c0_37 = arith.constant 0 : index
    %35 = vector.load %arg9[%c0_35, %c1_36, %c0_37] : memref<2x24x512xf32, #tpu.memory_space<vmem>>, vector<2x16x512xf32>
    tpu.vector_store %arg9[%c0_35, %c1_36, %c0_37], %34 {strides = array<i32>} : memref<2x24x512xf32, #tpu.memory_space<vmem>>, vector<2x16x512xf32>,
    %c0_38 = arith.constant 0 : index
    %c1_39 = arith.constant 1 : index
    %c0_40 = arith.constant 0 : index
    %36 = vector.load %arg9[%c0_38, %c1_39, %c0_40] : memref<2x24x512xf32, #tpu.memory_space<vmem>>, vector<2x16x512xf32>
    %37 = vector.shape_cast %36 : vector<2x16x512xf32> to vector<32x512xf32>
    %c1_41 = arith.constant 1 : index
    %c0_42 = arith.constant 0 : index
    %c0_43 = arith.constant 0 : index
    %38 = vector.load %arg5[%c1_41, %c0_42, %c0_43] : memref<3x512x512xbf16, #tpu.memory_space<vmem>>, vector<1x512x512xbf16>
    %39 = vector.shape_cast %38 : vector<1x512x512xbf16> to vector<512x512xbf16>
    %40 = arith.truncf %37 : vector<32x512xf32> to vector<32x512xbf16>
    %cst_44 = arith.constant dense<0.000000e+00> : vector<32x512xf32>
    %41 = tpu.matmul %40, %39, %cst_44 {dimension_numbers = #tpu.dot_dimension_numbers<[1], [0], [0], [1], [0, 0, 1, 1], [], []>} : vector<32x512xbf16>, vector<512x512xbf16>, vector<32x512xf32> -> vector<32x512xf32>
    %c0_45 = arith.constant 0 : index
    %c0_46 = arith.constant 0 : index
    %c0_47 = arith.constant 0 : index
    %42 = vector.load %arg9[%c0_45, %c0_46, %c0_47] : memref<2x24x512xf32, #tpu.memory_space<vmem>>, vector<2x16x512xf32>
    %43 = vector.shape_cast %42 : vector<2x16x512xf32> to vector<32x512xf32>
    %c0_48 = arith.constant 0 : index
    %c0_49 = arith.constant 0 : index
    %c0_50 = arith.constant 0 : index
    %44 = vector.load %arg5[%c0_48, %c0_49, %c0_50] : memref<3x512x512xbf16, #tpu.memory_space<vmem>>, vector<1x512x512xbf16>
    %45 = vector.shape_cast %44 : vector<1x512x512xbf16> to vector<512x512xbf16>
    %46 = arith.truncf %43 : vector<32x512xf32> to vector<32x512xbf16>
    %cst_51 = arith.constant dense<0.000000e+00> : vector<32x512xf32>
    %47 = tpu.matmul %46, %45, %cst_51 {dimension_numbers = #tpu.dot_dimension_numbers<[1], [0], [0], [1], [0, 0, 1, 1], [], []>} : vector<32x512xbf16>, vector<512x512xbf16>, vector<32x512xf32> -> vector<32x512xf32>
    %48 = arith.addf %41, %47 : vector<32x512xf32>
    %c0_52 = arith.constant 0 : index
    %c2_53 = arith.constant 2 : index
    %c0_54 = arith.constant 0 : index
    %49 = vector.load %arg9[%c0_52, %c2_53, %c0_54] : memref<2x24x512xf32, #tpu.memory_space<vmem>>, vector<2x16x512xf32>
    %50 = vector.shape_cast %49 : vector<2x16x512xf32> to vector<32x512xf32>
    %c2_55 = arith.constant 2 : index
    %c0_56 = arith.constant 0 : index
    %c0_57 = arith.constant 0 : index
    %51 = vector.load %arg5[%c2_55, %c0_56, %c0_57] : memref<3x512x512xbf16, #tpu.memory_space<vmem>>, vector<1x512x512xbf16>
    %52 = vector.shape_cast %51 : vector<1x512x512xbf16> to vector<512x512xbf16>
    %53 = arith.truncf %50 : vector<32x512xf32> to vector<32x512xbf16>
    %cst_58 = arith.constant dense<0.000000e+00> : vector<32x512xf32>
    %54 = tpu.matmul %53, %52, %cst_58 {dimension_numbers = #tpu.dot_dimension_numbers<[1], [0], [0], [1], [0, 0, 1, 1], [], []>} : vector<32x512xbf16>, vector<512x512xbf16>, vector<32x512xf32> -> vector<32x512xf32>
    %55 = arith.addf %48, %54 : vector<32x512xf32>
    %c0_59 = arith.constant 0 : index
    %c0_60 = arith.constant 0 : index
    %56 = vector.load %arg6[%c0_59, %c0_60] : memref<1x512xf32, #tpu.memory_space<vmem>>, vector<1x512xf32>
    %57 = vector.broadcast %56 : vector<1x512xf32> to vector<32x512xf32>
    %58 = arith.mulf %55, %57 : vector<32x512xf32>
    %c0_61 = arith.constant 0 : index
    %c0_62 = arith.constant 0 : index
    %59 = vector.load %arg7[%c0_61, %c0_62] : memref<1x512xf32, #tpu.memory_space<vmem>>, vector<1x512xf32>
    %60 = vector.broadcast %59 : vector<1x512xf32> to vector<32x512xf32>
    %61 = arith.addf %58, %60 : vector<32x512xf32>
    %62 = vector.shape_cast %4 : vector<2x16x512xf32> to vector<32x512xf32>
    %63 = arith.addf %61, %62 : vector<32x512xf32>
    %cst_63 = arith.constant 0.000000e+00 : f32
    %64 = vector.broadcast %cst_63 : f32 to vector<32x512xf32>
    %65 = arith.maximumf %63, %64 : vector<32x512xf32>
    %66 = vector.shape_cast %65 : vector<32x512xf32> to vector<2x16x512xf32>
    %c0_64 = arith.constant 0 : index
    %c0_65 = arith.constant 0 : index
    %c0_66 = arith.constant 0 : index
    %67 = vector.load %arg8[%c0_64, %c0_65, %c0_66] : memref<2x16x512xf32, #tpu.memory_space<vmem>>, vector<2x16x512xf32>
    tpu.vector_store %arg8[%c0_64, %c0_65, %c0_66], %66 {strides = array<i32>} : memref<2x16x512xf32, #tpu.memory_space<vmem>>, vector<2x16x512xf32>,
    return
  }
  func.func @transform_0(%arg0: i32) -> (i32, i32, i32) {
    %c0_i32 = arith.constant 0 : i32
    %c0_i32_0 = arith.constant 0 : i32
    %c0_i32_1 = arith.constant 0 : i32
    return %arg0, %c0_i32, %c0_i32_0 : i32, i32, i32
  }
  func.func @transform_1(%arg0: i32) -> (i32, i32, i32) {
    %c0_i32 = arith.constant 0 : i32
    %c0_i32_0 = arith.constant 0 : i32
    %c0_i32_1 = arith.constant 0 : i32
    %c0_i32_2 = arith.constant 0 : i32
    return %c0_i32, %c0_i32_0, %c0_i32_1 : i32, i32, i32
  }
  func.func @transform_2(%arg0: i32) -> (i32, i32) {
    %c0_i32 = arith.constant 0 : i32
    %c0_i32_0 = arith.constant 0 : i32
    %c0_i32_1 = arith.constant 0 : i32
    return %c0_i32, %c0_i32_0 : i32, i32
  }
  func.func @transform_3(%arg0: i32) -> (i32, i32) {
    %c0_i32 = arith.constant 0 : i32
    %c0_i32_0 = arith.constant 0 : i32
    %c0_i32_1 = arith.constant 0 : i32
    return %c0_i32, %c0_i32_0 : i32, i32
  }
  func.func @transform_4(%arg0: i32) -> (i32, i32, i32) {
    %c0_i32 = arith.constant 0 : i32
    %c0_i32_0 = arith.constant 0 : i32
    %c0_i32_1 = arith.constant 0 : i32
    %c0_i32_2 = arith.constant 0 : i32
    return %c0_i32, %c0_i32_0, %c0_i32_1 : i32, i32, i32
  }
  func.func @transform_5(%arg0: i32) -> (i32, i32) {
    %c0_i32 = arith.constant 0 : i32
    %c0_i32_0 = arith.constant 0 : i32
    %c0_i32_1 = arith.constant 0 : i32
    return %c0_i32, %c0_i32_0 : i32, i32
  }
  func.func @transform_6(%arg0: i32) -> (i32, i32) {
    %c0_i32 = arith.constant 0 : i32
    %c0_i32_0 = arith.constant 0 : i32
    %c0_i32_1 = arith.constant 0 : i32
    return %c0_i32, %c0_i32_0 : i32, i32
  }
  func.func @transform_7(%arg0: i32) -> (i32, i32, i32) {
    %c0_i32 = arith.constant 0 : i32
    %c0_i32_0 = arith.constant 0 : i32
    %c0_i32_1 = arith.constant 0 : i32
    return %arg0, %c0_i32, %c0_i32_0 : i32, i32, i32
  }
}

</mosaic_0001>

<llo_original>
// kernel: tile.23
$region0: #{tile.23}
  #allocation0 [shape = 's32[1]{0}', space=sflag, size = 0x4, scoped, tag = 'scoped memory for tile.23']
  %s0 = inlined_call_operand.vmem [shape: f32[32], index: 0, kind: input, shape index: {}]
  %s1 = inlined_call_operand.vmem [shape: f32[16,32], index: 1, kind: output, shape index: {}]
  // Predicated region
  $region2: #{tile.23} parent=0 // pred_check
    _
  $region3: #{tile.23} parent=0 // pred_check_branch
    %3 = sbr.rel (0) target = $region5
  $region4: #{tile.23} parent=0 // pred_region
    _
  $region5: #{tile.23} parent=0 // pred_fallthru
    _
  %v4 = vld [vmem:[%s0] ss:$0 sm:$0xff]
  %5 = vst [vmem:[%s1] sm:$0xff] %v4
  %s6 = scalar_lea.vmem %s1, 8
  %7 = vst [vmem:[%s6] sm:$0xff] %v4

// kernel: tile.24
$region0: #{tile.24}
  %s0 = inlined_call_operand.vmem [shape: f32[16,32], index: 0, kind: input, shape index: {}]
  %s1 = inlined_call_operand.vmem [shape: f32[1,512], index: 1, kind: output, shape index: {}]
  $region1: #{tile.24} parent=0
    #allocation0 [shape = 'u8[16384]{0}', space=vmem, size = 0x4000, scoped, tag = 'scoped mem for output reshape']
    %v2 = vld [vmem:[%s0] ss:$4 sm:$0xf]
    %vm3 = vcmask 261120
    %4 = vst.msk [vmem:[#allocation0] ss:$8 sm:$0xf] %vm3, %v2
    %s5 = scalar_lea.vmem %s0, 3
    %v6 = vld [vmem:[%s5] ss:$4 sm:$0xf]
    %7 = vrot.lane.b32.xlu0 %v6, 96
    %v8 = vpop.permute.xlu0 %7
    %vm9 = vcmask 1048320
    %10 = vst.msk [vmem:[#allocation0] ss:$8 sm:$0xf] %vm9, %v8
    %s11 = scalar_lea.vmem %s0, 2
    %v12 = vld [vmem:[%s11] ss:$4 sm:$0xf]
    %13 = vrot.lane.b32.xlu0 %v12, 64
    %v14 = vpop.permute.xlu0 %13
    %vm15 = vcmask 785920
    %16 = vst.msk [vmem:[#allocation0] ss:$8 sm:$0xf] %vm15, %v14
    %s17 = scalar_lea.vmem %s0, 1
    %v18 = vld [vmem:[%s17] ss:$4 sm:$0xf]
    %19 = vrot.lane.b32.xlu0 %v18, 32
    %v20 = vpop.permute.xlu0 %19
    %vm21 = vcmask 523520
    %22 = vst.msk [vmem:[#allocation0] ss:$8 sm:$0xf] %vm21, %v20
    %s24 = sshllo.u32 0, 1
    %v26 = vld [vmem:[#allocation0] sm:%s24]
    %s27 = sshllo.u32 0, 1
    %28 = vst [vmem:[%s1] sm:%s27] %v26
    %s29 = scalar_lea.vmem [#allocation0], 8
    %v30 = vld [vmem:[%s29] sm:%s24]
    %s31 = sshllo.u32 0, 1
    %s32 = scalar_lea.vmem %s1, 1
    %33 = vst [vmem:[%s32] sm:%s31] %v30
    %s34 = scalar_lea.vmem [#allocation0], 16
    %v35 = vld [vmem:[%s34] sm:%s24]
    %s36 = sshllo.u32 0, 1
    %s37 = smul.addr 1, 2
    %s38 = scalar_lea.vmem %s1, %s37
    %39 = vst [vmem:[%s38] sm:%s36] %v35
    %s40 = scalar_lea.vmem [#allocation0], 24
    %v41 = vld [vmem:[%s40] sm:%s24]
    %s42 = sshllo.u32 0, 1
    %s43 = smul.addr 1, 3
    %s44 = scalar_lea.vmem %s1, %s43
    %45 = vst [vmem:[%s44] sm:%s42] %v41

// kernel: residual_block.1
$region0: #{residual_block.1}
  #allocation0 [shape = 'u32[]', space=smem, size = 0x4, offset = 0x4, fixed_abs, tag = 'smem constant byte address 0x4 - core index']
  #allocation1 [shape = 'u32[144,128]{1,0:T(1,128)}', space=vmem, size = 0x12000, scoped, tag = 'internal scratch']
  #allocation2 [shape = 'f32[2,24,512]{2,1,0:T(8,128)}', space=vmem, size = 0x18000, scoped, tag = 'scratch operand']
  %s0 = inlined_call_operand.vmem [shape: f32[2,16,512], index: 0, kind: input, shape index: {}]
  %s1 = inlined_call_operand.vmem [shape: bf16[3,512,512], index: 1, kind: input, shape index: {}]
  %s2 = inlined_call_operand.vmem [shape: f32[1,512], index: 2, kind: input, shape index: {}]
  %s3 = inlined_call_operand.vmem [shape: f32[1,512], index: 3, kind: input, shape index: {}]
  %s4 = inlined_call_operand.vmem [shape: bf16[3,512,512], index: 4, kind: input, shape index: {}]
  %s5 = inlined_call_operand.vmem [shape: f32[1,512], index: 5, kind: input, shape index: {}]
  %s6 = inlined_call_operand.vmem [shape: f32[1,512], index: 6, kind: input, shape index: {}]
  %s7 = inlined_call_operand.vmem [shape: f32[2,16,512], index: 7, kind: output, shape index: {}]
  %s8 = sld [smem:[#allocation0]]
  $region38: #{residual_block.1} parent=0
    _
  %s10 = ssub.s32 1, %s8
  %s11 = scalar_select 0, %s10, %s8
  // Predicated region
  $region2: #{residual_block.1} parent=0 // pred_check
    _
  $region3: #{residual_block.1} parent=0 // pred_check_branch
    %13 = sbr.rel (0) target = $region5
  $region4: #{residual_block.1} parent=0 // pred_region
    _
  $region5: #{residual_block.1} parent=0 // pred_fallthru
    _
  // Predicated region
  $region6: #{residual_block.1} parent=0 // pred_check
    _
  $region7: #{residual_block.1} parent=0 // pred_check_branch
    %15 = sbr.rel (0) target = $region9
  $region8: #{residual_block.1} parent=0 // pred_region
    _
  $region9: #{residual_block.1} parent=0 // pred_fallthru
    _
  // Predicated region
  $region10: #{residual_block.1} parent=0 // pred_check
    _
  $region11: #{residual_block.1} parent=0 // pred_check_branch
    %17 = sbr.rel (0) target = $region13
  $region12: #{residual_block.1} parent=0 // pred_region
    _
  $region13: #{residual_block.1} parent=0 // pred_fallthru
    _
  // Predicated region
  $region14: #{residual_block.1} parent=0 // pred_check
    _
  $region15: #{residual_block.1} parent=0 // pred_check_branch
    %19 = sbr.rel (0) target = $region17
  $region16: #{residual_block.1} parent=0 // pred_region
    _
  $region17: #{residual_block.1} parent=0 // pred_fallthru
    _
  // Predicated region
  $region18: #{residual_block.1} parent=0 // pred_check
    _
  $region19: #{residual_block.1} parent=0 // pred_check_branch
    %21 = sbr.rel (0) target = $region21
  $region20: #{residual_block.1} parent=0 // pred_region
    _
  $region21: #{residual_block.1} parent=0 // pred_fallthru
    _
  // Predicated region
  $region22: #{residual_block.1} parent=0 // pred_check
    _
  $region23: #{residual_block.1} parent=0 // pred_check_branch
    %23 = sbr.rel (0) target = $region25
  $region24: #{residual_block.1} parent=0 // pred_region
    _
  $region25: #{residual_block.1} parent=0 // pred_fallthru
    _
  // Predicated region
  $region26: #{residual_block.1} parent=0 // pred_check
    _
  $region27: #{residual_block.1} parent=0 // pred_check_branch
    %25 = sbr.rel (0) target = $region29
  $region28: #{residual_block.1} parent=0 // pred_region
    _
  $region29: #{residual_block.1} parent=0 // pred_fallthru
    _
  %v26 = vlaneseq
  %vm27 = vcmp.ge.s32.totalorder %v26, 0
  %vm28 = vcmp.lt.s32.totalorder %v26, 512
  %vm29 = vmand %vm27, %vm28
  %30 = vst.msk [vmem:[#allocation2] ss:$8 sm:$0xf] %vm29, 0.0
  %31 = vst.msk [vmem:[#allocation2] ss:$8 sm:$0x0] %vm29, 0.0
  %s32 = scalar_lea.vmem [#allocation2], 96
  %33 = vst.msk [vmem:[%s32] ss:$8 sm:$0xf] %vm29, 0.0
  %34 = vst.msk [vmem:[%s32] ss:$8 sm:$0x0] %vm29, 0.0
  %s35 = scalar_lea.vmem [#allocation2], 65
  %36 = vst.msk [vmem:[%s35] ss:$8 sm:$0xf] %vm29, 0.0
  %37 = vst.msk [vmem:[%s35] ss:$8 sm:$0x0] %vm29, 0.0
  %s38 = scalar_lea.vmem [#allocation2], 161
  %39 = vst.msk [vmem:[%s38] ss:$8 sm:$0xf] %vm29, 0.0
  %40 = vst.msk [vmem:[%s38] ss:$8 sm:$0x0] %vm29, 0.0
  %v41 = vld [vmem:[%s0] sm:$0xff]
  %v42 = vld [vmem:[%s0 + $0x8] sm:$0xff]
  %v43 = vld [vmem:[%s0 + $0x10] sm:$0xff]
  %v44 = vld [vmem:[%s0 + $0x18] sm:$0xff]
  %v45 = vld [vmem:[%s0 + $0x20] sm:$0xff]
  %v46 = vld [vmem:[%s0 + $0x28] sm:$0xff]
  %v47 = vld [vmem:[%s0 + $0x30] sm:$0xff]
  %v48 = vld [vmem:[%s0 + $0x38] sm:$0xff]
  %v49 = vld [vmem:[%s0 + $0x40] sm:$0xff]
  %v50 = vld [vmem:[%s0 + $0x48] sm:$0xff]
  %v51 = vld [vmem:[%s0 + $0x50] sm:$0xff]
  %v52 = vld [vmem:[%s0 + $0x58] sm:$0xff]
  %v53 = vld [vmem:[%s0 + $0x60] sm:$0xff]
  %v54 = vld [vmem:[%s0 + $0x68] sm:$0xff]
  %v55 = vld [vmem:[%s0 + $0x70] sm:$0xff]
  %v56 = vld [vmem:[%s0 + $0x78] sm:$0xff]
  %vm73 = vcmask 1040384
  %v74 = vrot.slane %v41, 7
  %v75 = vrot.slane %v42, 7
  %v76 = vrot.slane %v43, 7
  %v77 = vrot.slane %v44, 7
  %v78 = vrot.slane %v45, 7
  %v79 = vsel %vm73, %v74, %v78
  %v80 = vrot.slane %v46, 7
  %v81 = vsel %vm73, %v75, %v80
  %v82 = vrot.slane %v47, 7
  %v83 = vsel %vm73, %v76, %v82
  %v84 = vrot.slane %v48, 7
  %v85 = vsel %vm73, %v77, %v84
  %v86 = vrot.slane %v49, 7
  %v87 = vrot.slane %v50, 7
  %v88 = vrot.slane %v51, 7
  %v89 = vrot.slane %v52, 7
  %v90 = vrot.slane %v53, 7
  %v91 = vsel %vm73, %v86, %v90
  %v92 = vrot.slane %v54, 7
  %v93 = vsel %vm73, %v87, %v92
  %v94 = vrot.slane %v55, 7
  %v95 = vsel %vm73, %v88, %v94
  %v96 = vrot.slane %v56, 7
  %v97 = vsel %vm73, %v89, %v96
  %122 = vst [vmem:[#allocation2] sm:$0xfe] %v74
  %123 = vst [vmem:[#allocation2 + $0x8] sm:$0xfe] %v75
  %124 = vst [vmem:[#allocation2 + $0x10] sm:$0xfe] %v76
  %125 = vst [vmem:[#allocation2 + $0x18] sm:$0xfe] %v77
  %126 = vst [vmem:[#allocation2 + $0x20] sm:$0xff] %v79
  %127 = vst [vmem:[#allocation2 + $0x28] sm:$0xff] %v81
  %128 = vst [vmem:[#allocation2 + $0x30] sm:$0xff] %v83
  %129 = vst [vmem:[#allocation2 + $0x38] sm:$0xff] %v85
  %130 = vst [vmem:[#allocation2 + $0x40] sm:$0x1] %v78
  %131 = vst [vmem:[#allocation2 + $0x48] sm:$0x1] %v80
  %132 = vst [vmem:[#allocation2 + $0x50] sm:$0x1] %v82
  %133 = vst [vmem:[#allocation2 + $0x58] sm:$0x1] %v84
  %134 = vst [vmem:[#allocation2 + $0x60] sm:$0xfe] %v86
  %135 = vst [vmem:[#allocation2 + $0x68] sm:$0xfe] %v87
  %136 = vst [vmem:[#allocation2 + $0x70] sm:$0xfe] %v88
  %137 = vst [vmem:[#allocation2 + $0x78] sm:$0xfe] %v89
  %138 = vst [vmem:[#allocation2 + $0x80] sm:$0xff] %v91
  %139 = vst [vmem:[#allocation2 + $0x88] sm:$0xff] %v93
  %140 = vst [vmem:[#allocation2 + $0x90] sm:$0xff] %v95
  %141 = vst [vmem:[#allocation2 + $0x98] sm:$0xff] %v97
  %142 = vst [vmem:[#allocation2 + $0xa0] sm:$0x1] %v90
  %143 = vst [vmem:[#allocation2 + $0xa8] sm:$0x1] %v92
  %144 = vst [vmem:[#allocation2 + $0xb0] sm:$0x1] %v94
  %145 = vst [vmem:[#allocation2 + $0xb8] sm:$0x1] %v96
  %v146 = vld [vmem:[#allocation2] sm:$0xfe]
  %v147 = vld [vmem:[#allocation2 + $0x8] sm:$0xfe]
  %v148 = vld [vmem:[#allocation2 + $0x10] sm:$0xfe]
  %v149 = vld [vmem:[#allocation2 + $0x18] sm:$0xfe]
  %v150 = vld [vmem:[#allocation2 + $0x20] sm:$0xff]
  %v151 = vld [vmem:[#allocation2 + $0x28] sm:$0xff]
  %v152 = vld [vmem:[#allocation2 + $0x30] sm:$0xff]
  %v153 = vld [vmem:[#allocation2 + $0x38] sm:$0xff]
  %v154 = vld [vmem:[#allocation2 + $0x40] sm:$0x1]
  %v155 = vld [vmem:[#allocation2 + $0x48] sm:$0x1]
  %v156 = vld [vmem:[#allocation2 + $0x50] sm:$0x1]
  %v157 = vld [vmem:[#allocation2 + $0x58] sm:$0x1]
  %v158 = vld [vmem:[#allocation2 + $0x60] sm:$0xfe]
  %v159 = vld [vmem:[#allocation2 + $0x68] sm:$0xfe]
  %v160 = vld [vmem:[#allocation2 + $0x70] sm:$0xfe]
  %v161 = vld [vmem:[#allocation2 + $0x78] sm:$0xfe]
  %v162 = vld [vmem:[#allocation2 + $0x80] sm:$0xff]
  %v163 = vld [vmem:[#allocation2 + $0x88] sm:$0xff]
  %v164 = vld [vmem:[#allocation2 + $0x90] sm:$0xff]
  %v165 = vld [vmem:[#allocation2 + $0x98] sm:$0xff]
  %v166 = vld [vmem:[#allocation2 + $0xa0] sm:$0x1]
  %v167 = vld [vmem:[#allocation2 + $0xa8] sm:$0x1]
  %v168 = vld [vmem:[#allocation2 + $0xb0] sm:$0x1]
  %v169 = vld [vmem:[#allocation2 + $0xb8] sm:$0x1]
  %vm194 = vcmask 1046528
  %v195 = vrot.slane %v146, 1
  %v196 = vrot.slane %v150, 1
  %v197 = vsel %vm194, %v195, %v196
  %v198 = vrot.slane %v147, 1
  %v199 = vrot.slane %v151, 1
  %v200 = vsel %vm194, %v198, %v199
  %v201 = vrot.slane %v148, 1
  %v202 = vrot.slane %v152, 1
  %v203 = vsel %vm194, %v201, %v202
  %v204 = vrot.slane %v149, 1
  %v205 = vrot.slane %v153, 1
  %v206 = vsel %vm194, %v204, %v205
  %v207 = vrot.slane %v154, 1
  %v208 = vsel %vm194, %v196, %v207
  %v209 = vrot.slane %v155, 1
  %v210 = vsel %vm194, %v199, %v209
  %v211 = vrot.slane %v156, 1
  %v212 = vsel %vm194, %v202, %v211
  %v213 = vrot.slane %v157, 1
  %v214 = vsel %vm194, %v205, %v213
  %v215 = vrot.slane %v158, 1
  %v216 = vrot.slane %v162, 1
  %v217 = vsel %vm194, %v215, %v216
  %v218 = vrot.slane %v159, 1
  %v219 = vrot.slane %v163, 1
  %v220 = vsel %vm194, %v218, %v219
  %v221 = vrot.slane %v160, 1
  %v222 = vrot.slane %v164, 1
  %v223 = vsel %vm194, %v221, %v222
  %v224 = vrot.slane %v161, 1
  %v225 = vrot.slane %v165, 1
  %v226 = vsel %vm194, %v224, %v225
  %v227 = vrot.slane %v166, 1
  %v228 = vsel %vm194, %v216, %v227
  %v229 = vrot.slane %v167, 1
  %v230 = vsel %vm194, %v219, %v229
  %v231 = vrot.slane %v168, 1
  %v232 = vsel %vm194, %v222, %v231
  %v233 = vrot.slane %v169, 1
  %v234 = vsel %vm194, %v225, %v233
  %s251 = scalar_lea.vmem %s1, 1024
  %v252 = vld [vmem:[%s251] sm:$0xff]
  %v253 = vld [vmem:[%s251 + $0x8] sm:$0xff]
  %v254 = vld [vmem:[%s251 + $0x10] sm:$0xff]
  %v255 = vld [vmem:[%s251 + $0x18] sm:$0xff]
  %v256 = vld [vmem:[%s251 + $0x20] sm:$0xff]
  %v257 = vld [vmem:[%s251 + $0x28] sm:$0xff]
  %v258 = vld [vmem:[%s251 + $0x30] sm:$0xff]
  %v259 = vld [vmem:[%s251 + $0x38] sm:$0xff]
  %v260 = vld [vmem:[%s251 + $0x40] sm:$0xff]
  %v261 = vld [vmem:[%s251 + $0x48] sm:$0xff]
  %v262 = vld [vmem:[%s251 + $0x50] sm:$0xff]
  %v263 = vld [vmem:[%s251 + $0x58] sm:$0xff]
  %v264 = vld [vmem:[%s251 + $0x60] sm:$0xff]
  %v265 = vld [vmem:[%s251 + $0x68] sm:$0xff]
  %v266 = vld [vmem:[%s251 + $0x70] sm:$0xff]
  %v267 = vld [vmem:[%s251 + $0x78] sm:$0xff]
  %v268 = vld [vmem:[%s251 + $0x80] sm:$0xff]
  %v269 = vld [vmem:[%s251 + $0x88] sm:$0xff]
  %v270 = vld [vmem:[%s251 + $0x90] sm:$0xff]
  %v271 = vld [vmem:[%s251 + $0x98] sm:$0xff]
  %v272 = vld [vmem:[%s251 + $0xa0] sm:$0xff]
  %v273 = vld [vmem:[%s251 + $0xa8] sm:$0xff]
  %v274 = vld [vmem:[%s251 + $0xb0] sm:$0xff]
  %v275 = vld [vmem:[%s251 + $0xb8] sm:$0xff]
  %v276 = vld [vmem:[%s251 + $0xc0] sm:$0xff]
  %v277 = vld [vmem:[%s251 + $0xc8] sm:$0xff]
  %v278 = vld [vmem:[%s251 + $0xd0] sm:$0xff]
  %v279 = vld [vmem:[%s251 + $0xd8] sm:$0xff]
  %v280 = vld [vmem:[%s251 + $0xe0] sm:$0xff]
  %v281 = vld [vmem:[%s251 + $0xe8] sm:$0xff]
  %v282 = vld [vmem:[%s251 + $0xf0] sm:$0xff]
  %v283 = vld [vmem:[%s251 + $0xf8] sm:$0xff]
  %v284 = vld [vmem:[%s251 + $0x100] sm:$0xff]
  %v285 = vld [vmem:[%s251 + $0x108] sm:$0xff]
  %v286 = vld [vmem:[%s251 + $0x110] sm:$0xff]
  %v287 = vld [vmem:[%s251 + $0x118] sm:$0xff]
  %v288 = vld [vmem:[%s251 + $0x120] sm:$0xff]
  %v289 = vld [vmem:[%s251 + $0x128] sm:$0xff]
  %v290 = vld [vmem:[%s251 + $0x130] sm:$0xff]
  %v291 = vld [vmem:[%s251 + $0x138] sm:$0xff]
  %v292 = vld [vmem:[%s251 + $0x140] sm:$0xff]
  %v293 = vld [vmem:[%s251 + $0x148] sm:$0xff]
  %v294 = vld [vmem:[%s251 + $0x150] sm:$0xff]
  %v295 = vld [vmem:[%s251 + $0x158] sm:$0xff]
  %v296 = vld [vmem:[%s251 + $0x160] sm:$0xff]
  %v297 = vld [vmem:[%s251 + $0x168] sm:$0xff]
  %v298 = vld [vmem:[%s251 + $0x170] sm:$0xff]
  %v299 = vld [vmem:[%s251 + $0x178] sm:$0xff]
  %v300 = vld [vmem:[%s251 + $0x180] sm:$0xff]
  %v301 = vld [vmem:[%s251 + $0x188] sm:$0xff]
  %v302 = vld [vmem:[%s251 + $0x190] sm:$0xff]
  %v303 = vld [vmem:[%s251 + $0x198] sm:$0xff]
  %v304 = vld [vmem:[%s251 + $0x1a0] sm:$0xff]
  %v305 = vld [vmem:[%s251 + $0x1a8] sm:$0xff]
  %v306 = vld [vmem:[%s251 + $0x1b0] sm:$0xff]
  %v307 = vld [vmem:[%s251 + $0x1b8] sm:$0xff]
  %v308 = vld [vmem:[%s251 + $0x1c0] sm:$0xff]
  %v309 = vld [vmem:[%s251 + $0x1c8] sm:$0xff]
  %v310 = vld [vmem:[%s251 + $0x1d0] sm:$0xff]
  %v311 = vld [vmem:[%s251 + $0x1d8] sm:$0xff]
  %v312 = vld [vmem:[%s251 + $0x1e0] sm:$0xff]
  %v313 = vld [vmem:[%s251 + $0x1e8] sm:$0xff]
  %v314 = vld [vmem:[%s251 + $0x1f0] sm:$0xff]
  %v315 = vld [vmem:[%s251 + $0x1f8] sm:$0xff]
  %v316 = vld [vmem:[%s251 + $0x200] sm:$0xff]
  %v317 = vld [vmem:[%s251 + $0x208] sm:$0xff]
  %v318 = vld [vmem:[%s251 + $0x210] sm:$0xff]
  %v319 = vld [vmem:[%s251 + $0x218] sm:$0xff]
  %v320 = vld [vmem:[%s251 + $0x220] sm:$0xff]
  %v321 = vld [vmem:[%s251 + $0x228] sm:$0xff]
  %v322 = vld [vmem:[%s251 + $0x230] sm:$0xff]
  %v323 = vld [vmem:[%s251 + $0x238] sm:$0xff]
  %v324 = vld [vmem:[%s251 + $0x240] sm:$0xff]
  %v325 = vld [vmem:[%s251 + $0x248] sm:$0xff]
  %v326 = vld [vmem:[%s251 + $0x250] sm:$0xff]
  %v327 = vld [vmem:[%s251 + $0x258] sm:$0xff]
  %v328 = vld [vmem:[%s251 + $0x260] sm:$0xff]
  %v329 = vld [vmem:[%s251 + $0x268] sm:$0xff]
  %v330 = vld [vmem:[%s251 + $0x270] sm:$0xff]
  %v331 = vld [vmem:[%s251 + $0x278] sm:$0xff]
  %v332 = vld [vmem:[%s251 + $0x280] sm:$0xff]
  %v333 = vld [vmem:[%s251 + $0x288] sm:$0xff]
  %v334 = vld [vmem:[%s251 + $0x290] sm:$0xff]
  %v335 = vld [vmem:[%s251 + $0x298] sm:$0xff]
  %v336 = vld [vmem:[%s251 + $0x2a0] sm:$0xff]
  %v337 = vld [vmem:[%s251 + $0x2a8] sm:$0xff]
  %v338 = vld [vmem:[%s251 + $0x2b0] sm:$0xff]
  %v339 = vld [vmem:[%s251 + $0x2b8] sm:$0xff]
  %v340 = vld [vmem:[%s251 + $0x2c0] sm:$0xff]
  %v341 = vld [vmem:[%s251 + $0x2c8] sm:$0xff]
  %v342 = vld [vmem:[%s251 + $0x2d0] sm:$0xff]
  %v343 = vld [vmem:[%s251 + $0x2d8] sm:$0xff]
  %v344 = vld [vmem:[%s251 + $0x2e0] sm:$0xff]
  %v345 = vld [vmem:[%s251 + $0x2e8] sm:$0xff]
  %v346 = vld [vmem:[%s251 + $0x2f0] sm:$0xff]
  %v347 = vld [vmem:[%s251 + $0x2f8] sm:$0xff]
  %v348 = vld [vmem:[%s251 + $0x300] sm:$0xff]
  %v349 = vld [vmem:[%s251 + $0x308] sm:$0xff]
  %v350 = vld [vmem:[%s251 + $0x310] sm:$0xff]
  %v351 = vld [vmem:[%s251 + $0x318] sm:$0xff]
  %v352 = vld [vmem:[%s251 + $0x320] sm:$0xff]
  %v353 = vld [vmem:[%s251 + $0x328] sm:$0xff]
  %v354 = vld [vmem:[%s251 + $0x330] sm:$0xff]
  %v355 = vld [vmem:[%s251 + $0x338] sm:$0xff]
  %v356 = vld [vmem:[%s251 + $0x340] sm:$0xff]
  %v357 = vld [vmem:[%s251 + $0x348] sm:$0xff]
  %v358 = vld [vmem:[%s251 + $0x350] sm:$0xff]
  %v359 = vld [vmem:[%s251 + $0x358] sm:$0xff]
  %v360 = vld [vmem:[%s251 + $0x360] sm:$0xff]
  %v361 = vld [vmem:[%s251 + $0x368] sm:$0xff]
  %v362 = vld [vmem:[%s251 + $0x370] sm:$0xff]
  %v363 = vld [vmem:[%s251 + $0x378] sm:$0xff]
  %v364 = vld [vmem:[%s251 + $0x380] sm:$0xff]
  %v365 = vld [vmem:[%s251 + $0x388] sm:$0xff]
  %v366 = vld [vmem:[%s251 + $0x390] sm:$0xff]
  %v367 = vld [vmem:[%s251 + $0x398] sm:$0xff]
  %v368 = vld [vmem:[%s251 + $0x3a0] sm:$0xff]
  %v369 = vld [vmem:[%s251 + $0x3a8] sm:$0xff]
  %v370 = vld [vmem:[%s251 + $0x3b0] sm:$0xff]
  %v371 = vld [vmem:[%s251 + $0x3b8] sm:$0xff]
  %v372 = vld [vmem:[%s251 + $0x3c0] sm:$0xff]
  %v373 = vld [vmem:[%s251 + $0x3c8] sm:$0xff]
  %v374 = vld [vmem:[%s251 + $0x3d0] sm:$0xff]
  %v375 = vld [vmem:[%s251 + $0x3d8] sm:$0xff]
  %v376 = vld [vmem:[%s251 + $0x3e0] sm:$0xff]
  %v377 = vld [vmem:[%s251 + $0x3e8] sm:$0xff]
  %v378 = vld [vmem:[%s251 + $0x3f0] sm:$0xff]
  %v379 = vld [vmem:[%s251 + $0x3f8] sm:$0xff]
  %v380 = vpack.c.bf16 %v208, %v197
  %v381 = vpack.c.bf16 %v210, %v200
  %v382 = vpack.c.bf16 %v212, %v203
  %v383 = vpack.c.bf16 %v214, %v206
  %v384 = vpack.c.bf16 %v228, %v217
  %v385 = vpack.c.bf16 %v230, %v220
  %v386 = vpack.c.bf16 %v232, %v223
  %v387 = vpack.c.bf16 %v234, %v226
  %v388 = vld [vmem:[#allocation2] sm:$0xff]
  %v389 = vld [vmem:[#allocation2 + $0x8] sm:$0xff]
  %v390 = vld [vmem:[#allocation2 + $0x10] sm:$0xff]
  %v391 = vld [vmem:[#allocation2 + $0x18] sm:$0xff]
  %v392 = vld [vmem:[#allocation2 + $0x20] sm:$0xff]
  %v393 = vld [vmem:[#allocation2 + $0x28] sm:$0xff]
  %v394 = vld [vmem:[#allocation2 + $0x30] sm:$0xff]
  %v395 = vld [vmem:[#allocation2 + $0x38] sm:$0xff]
  %v396 = vld [vmem:[#allocation2 + $0x60] sm:$0xff]
  %v397 = vld [vmem:[#allocation2 + $0x68] sm:$0xff]
  %v398 = vld [vmem:[#allocation2 + $0x70] sm:$0xff]
  %v399 = vld [vmem:[#allocation2 + $0x78] sm:$0xff]
  %v400 = vld [vmem:[#allocation2 + $0x80] sm:$0xff]
  %v401 = vld [vmem:[#allocation2 + $0x88] sm:$0xff]
  %v402 = vld [vmem:[#allocation2 + $0x90] sm:$0xff]
  %v403 = vld [vmem:[#allocation2 + $0x98] sm:$0xff]
  %v404 = vld [vmem:[%s1] sm:$0xff]
  %v405 = vld [vmem:[%s1 + $0x8] sm:$0xff]
  %v406 = vld [vmem:[%s1 + $0x10] sm:$0xff]
  %v407 = vld [vmem:[%s1 + $0x18] sm:$0xff]
  %v408 = vld [vmem:[%s1 + $0x20] sm:$0xff]
  %v409 = vld [vmem:[%s1 + $0x28] sm:$0xff]
  %v410 = vld [vmem:[%s1 + $0x30] sm:$0xff]
  %v411 = vld [vmem:[%s1 + $0x38] sm:$0xff]
  %v412 = vld [vmem:[%s1 + $0x40] sm:$0xff]
  %v413 = vld [vmem:[%s1 + $0x48] sm:$0xff]
  %v414 = vld [vmem:[%s1 + $0x50] sm:$0xff]
  %v415 = vld [vmem:[%s1 + $0x58] sm:$0xff]
  %v416 = vld [vmem:[%s1 + $0x60] sm:$0xff]
  %v417 = vld [vmem:[%s1 + $0x68] sm:$0xff]
  %v418 = vld [vmem:[%s1 + $0x70] sm:$0xff]
  %v419 = vld [vmem:[%s1 + $0x78] sm:$0xff]
  %v420 = vld [vmem:[%s1 + $0x80] sm:$0xff]
  %v421 = vld [vmem:[%s1 + $0x88] sm:$0xff]
  %v422 = vld [vmem:[%s1 + $0x90] sm:$0xff]
  %v423 = vld [vmem:[%s1 + $0x98] sm:$0xff]
  %v424 = vld [vmem:[%s1 + $0xa0] sm:$0xff]
  %v425 = vld [vmem:[%s1 + $0xa8] sm:$0xff]
  %v426 = vld [vmem:[%s1 + $0xb0] sm:$0xff]
  %v427 = vld [vmem:[%s1 + $0xb8] sm:$0xff]
  %v428 = vld [vmem:[%s1 + $0xc0] sm:$0xff]
  %v429 = vld [vmem:[%s1 + $0xc8] sm:$0xff]
  %v430 = vld [vmem:[%s1 + $0xd0] sm:$0xff]
  %v431 = vld [vmem:[%s1 + $0xd8] sm:$0xff]
  %v432 = vld [vmem:[%s1 + $0xe0] sm:$0xff]
  %v433 = vld [vmem:[%s1 + $0xe8] sm:$0xff]
  %v434 = vld [vmem:[%s1 + $0xf0] sm:$0xff]
  %v435 = vld [vmem:[%s1 + $0xf8] sm:$0xff]
  %v436 = vld [vmem:[%s1 + $0x100] sm:$0xff]
  %v437 = vld [vmem:[%s1 + $0x108] sm:$0xff]
  %v438 = vld [vmem:[%s1 + $0x110] sm:$0xff]
  %v439 = vld [vmem:[%s1 + $0x118] sm:$0xff]
  %v440 = vld [vmem:[%s1 + $0x120] sm:$0xff]
  %v441 = vld [vmem:[%s1 + $0x128] sm:$0xff]
  %v442 = vld [vmem:[%s1 + $0x130] sm:$0xff]
  %v443 = vld [vmem:[%s1 + $0x138] sm:$0xff]
  %v444 = vld [vmem:[%s1 + $0x140] sm:$0xff]
  %v445 = vld [vmem:[%s1 + $0x148] sm:$0xff]
  %v446 = vld [vmem:[%s1 + $0x150] sm:$0xff]
  %v447 = vld [vmem:[%s1 + $0x158] sm:$0xff]
  %v448 = vld [vmem:[%s1 + $0x160] sm:$0xff]
  %v449 = vld [vmem:[%s1 + $0x168] sm:$0xff]
  %v450 = vld [vmem:[%s1 + $0x170] sm:$0xff]
  %v451 = vld [vmem:[%s1 + $0x178] sm:$0xff]
  %v452 = vld [vmem:[%s1 + $0x180] sm:$0xff]
  %v453 = vld [vmem:[%s1 + $0x188] sm:$0xff]
  %v454 = vld [vmem:[%s1 + $0x190] sm:$0xff]
  %v455 = vld [vmem:[%s1 + $0x198] sm:$0xff]
  %v456 = vld [vmem:[%s1 + $0x1a0] sm:$0xff]
  %v457 = vld [vmem:[%s1 + $0x1a8] sm:$0xff]
  %v458 = vld [vmem:[%s1 + $0x1b0] sm:$0xff]
  %v459 = vld [vmem:[%s1 + $0x1b8] sm:$0xff]
  %v460 = vld [vmem:[%s1 + $0x1c0] sm:$0xff]
  %v461 = vld [vmem:[%s1 + $0x1c8] sm:$0xff]
  %v462 = vld [vmem:[%s1 + $0x1d0] sm:$0xff]
  %v463 = vld [vmem:[%s1 + $0x1d8] sm:$0xff]
  %v464 = vld [vmem:[%s1 + $0x1e0] sm:$0xff]
  %v465 = vld [vmem:[%s1 + $0x1e8] sm:$0xff]
  %v466 = vld [vmem:[%s1 + $0x1f0] sm:$0xff]
  %v467 = vld [vmem:[%s1 + $0x1f8] sm:$0xff]
  %v468 = vld [vmem:[%s1 + $0x200] sm:$0xff]
  %v469 = vld [vmem:[%s1 + $0x208] sm:$0xff]
  %v470 = vld [vmem:[%s1 + $0x210] sm:$0xff]
  %v471 = vld [vmem:[%s1 + $0x218] sm:$0xff]
  %v472 = vld [vmem:[%s1 + $0x220] sm:$0xff]
  %v473 = vld [vmem:[%s1 + $0x228] sm:$0xff]
  %v474 = vld [vmem:[%s1 + $0x230] sm:$0xff]
  %v475 = vld [vmem:[%s1 + $0x238] sm:$0xff]
  %v476 = vld [vmem:[%s1 + $0x240] sm:$0xff]
  %v477 = vld [vmem:[%s1 + $0x248] sm:$0xff]
  %v478 = vld [vmem:[%s1 + $0x250] sm:$0xff]
  %v479 = vld [vmem:[%s1 + $0x258] sm:$0xff]
  %v480 = vld [vmem:[%s1 + $0x260] sm:$0xff]
  %v481 = vld [vmem:[%s1 + $0x268] sm:$0xff]
  %v482 = vld [vmem:[%s1 + $0x270] sm:$0xff]
  %v483 = vld [vmem:[%s1 + $0x278] sm:$0xff]
  %v484 = vld [vmem:[%s1 + $0x280] sm:$0xff]
  %v485 = vld [vmem:[%s1 + $0x288] sm:$0xff]
  %v486 = vld [vmem:[%s1 + $0x290] sm:$0xff]
  %v487 = vld [vmem:[%s1 + $0x298] sm:$0xff]
  %v488 = vld [vmem:[%s1 + $0x2a0] sm:$0xff]
  %v489 = vld [vmem:[%s1 + $0x2a8] sm:$0xff]
  %v490 = vld [vmem:[%s1 + $0x2b0] sm:$0xff]
  %v491 = vld [vmem:[%s1 + $0x2b8] sm:$0xff]
  %v492 = vld [vmem:[%s1 + $0x2c0] sm:$0xff]
  %v493 = vld [vmem:[%s1 + $0x2c8] sm:$0xff]
  %v494 = vld [vmem:[%s1 + $0x2d0] sm:$0xff]
  %v495 = vld [vmem:[%s1 + $0x2d8] sm:$0xff]
  %v496 = vld [vmem:[%s1 + $0x2e0] sm:$0xff]
  %v497 = vld [vmem:[%s1 + $0x2e8] sm:$0xff]
  %v498 = vld [vmem:[%s1 + $0x2f0] sm:$0xff]
  %v499 = vld [vmem:[%s1 + $0x2f8] sm:$0xff]
  %v500 = vld [vmem:[%s1 + $0x300] sm:$0xff]
  %v501 = vld [vmem:[%s1 + $0x308] sm:$0xff]
  %v502 = vld [vmem:[%s1 + $0x310] sm:$0xff]
  %v503 = vld [vmem:[%s1 + $0x318] sm:$0xff]
  %v504 = vld [vmem:[%s1 + $0x320] sm:$0xff]
  %v505 = vld [vmem:[%s1 + $0x328] sm:$0xff]
  %v506 = vld [vmem:[%s1 + $0x330] sm:$0xff]
  %v507 = vld [vmem:[%s1 + $0x338] sm:$0xff]
  %v508 = vld [vmem:[%s1 + $0x340] sm:$0xff]
  %v509 = vld [vmem:[%s1 + $0x348] sm:$0xff]
  %v510 = vld [vmem:[%s1 + $0x350] sm:$0xff]
  %v511 = vld [vmem:[%s1 + $0x358] sm:$0xff]
  %v512 = vld [vmem:[%s1 + $0x360] sm:$0xff]
  %v513 = vld [vmem:[%s1 + $0x368] sm:$0xff]
  %v514 = vld [vmem:[%s1 + $0x370] sm:$0xff]
  %v515 = vld [vmem:[%s1 + $0x378] sm:$0xff]
  %v516 = vld [vmem:[%s1 + $0x380] sm:$0xff]
  %v517 = vld [vmem:[%s1 + $0x388] sm:$0xff]
  %v518 = vld [vmem:[%s1 + $0x390] sm:$0xff]
  %v519 = vld [vmem:[%s1 + $0x398] sm:$0xff]
  %v520 = vld [vmem:[%s1 + $0x3a0] sm:$0xff]
  %v521 = vld [vmem:[%s1 + $0x3a8] sm:$0xff]
  %v522 = vld [vmem:[%s1 + $0x3b0] sm:$0xff]
  %v523 = vld [vmem:[%s1 + $0x3b8] sm:$0xff]
  %v524 = vld [vmem:[%s1 + $0x3c0] sm:$0xff]
  %v525 = vld [vmem:[%s1 + $0x3c8] sm:$0xff]
  %v526 = vld [vmem:[%s1 + $0x3d0] sm:$0xff]
  %v527 = vld [vmem:[%s1 + $0x3d8] sm:$0xff]
  %v528 = vld [vmem:[%s1 + $0x3e0] sm:$0xff]
  %v529 = vld [vmem:[%s1 + $0x3e8] sm:$0xff]
  %v530 = vld [vmem:[%s1 + $0x3f0] sm:$0xff]
  %v531 = vld [vmem:[%s1 + $0x3f8] sm:$0xff]
  %v532 = vpack.c.bf16 %v392, %v388
  %v533 = vpack.c.bf16 %v393, %v389
  %v534 = vpack.c.bf16 %v394, %v390
  %v535 = vpack.c.bf16 %v395, %v391
  %v536 = vpack.c.bf16 %v400, %v396
  %v537 = vpack.c.bf16 %v401, %v397
  %v538 = vpack.c.bf16 %v402, %v398
  %v539 = vpack.c.bf16 %v403, %v399
  %v668 = vunpack.c.l.b16 %v404
  %v669 = vunpack.c.h.b16 %v404
  %v670 = vunpack.c.l.b16 %v405
  %v671 = vunpack.c.h.b16 %v405
  %v672 = vunpack.c.l.b16 %v406
  %v673 = vunpack.c.h.b16 %v406
  %v674 = vunpack.c.l.b16 %v407
  %v675 = vunpack.c.h.b16 %v407
  %v676 = vunpack.c.l.b16 %v408
  %v677 = vunpack.c.h.b16 %v408
  %v678 = vunpack.c.l.b16 %v409
  %v679 = vunpack.c.h.b16 %v409
  %v680 = vunpack.c.l.b16 %v410
  %v681 = vunpack.c.h.b16 %v410
  %v682 = vunpack.c.l.b16 %v411
  %v683 = vunpack.c.h.b16 %v411
  %v684 = vunpack.c.l.b16 %v412
  %v685 = vunpack.c.h.b16 %v412
  %v686 = vunpack.c.l.b16 %v413
  %v687 = vunpack.c.h.b16 %v413
  %v688 = vunpack.c.l.b16 %v414
  %v689 = vunpack.c.h.b16 %v414
  %v690 = vunpack.c.l.b16 %v415
  %v691 = vunpack.c.h.b16 %v415
  %v692 = vunpack.c.l.b16 %v416
  %v693 = vunpack.c.h.b16 %v416
  %v694 = vunpack.c.l.b16 %v417
  %v695 = vunpack.c.h.b16 %v417
  %v696 = vunpack.c.l.b16 %v418
  %v697 = vunpack.c.h.b16 %v418
  %v698 = vunpack.c.l.b16 %v419
  %v699 = vunpack.c.h.b16 %v419
  %v700 = vunpack.c.l.b16 %v420
  %v701 = vunpack.c.h.b16 %v420
  %v702 = vunpack.c.l.b16 %v421
  %v703 = vunpack.c.h.b16 %v421
  %v704 = vunpack.c.l.b16 %v422
  %v705 = vunpack.c.h.b16 %v422
  %v706 = vunpack.c.l.b16 %v423
  %v707 = vunpack.c.h.b16 %v423
  %v708 = vunpack.c.l.b16 %v424
  %v709 = vunpack.c.h.b16 %v424
  %v710 = vunpack.c.l.b16 %v425
  %v711 = vunpack.c.h.b16 %v425
  %v712 = vunpack.c.l.b16 %v426
  %v713 = vunpack.c.h.b16 %v426
  %v714 = vunpack.c.l.b16 %v427
  %v715 = vunpack.c.h.b16 %v427
  %v716 = vunpack.c.l.b16 %v428
  %v717 = vunpack.c.h.b16 %v428
  %v718 = vunpack.c.l.b16 %v429
  %v719 = vunpack.c.h.b16 %v429
  %v720 = vunpack.c.l.b16 %v430
  %v721 = vunpack.c.h.b16 %v430
  %v722 = vunpack.c.l.b16 %v431
  %v723 = vunpack.c.h.b16 %v431
  %v724 = vunpack.c.l.b16 %v432
  %v725 = vunpack.c.h.b16 %v432
  %v726 = vunpack.c.l.b16 %v433
  %v727 = vunpack.c.h.b16 %v433
  %v728 = vunpack.c.l.b16 %v434
  %v729 = vunpack.c.h.b16 %v434
  %v730 = vunpack.c.l.b16 %v435
  %v731 = vunpack.c.h.b16 %v435
  %v732 = vunpack.c.l.b16 %v436
  %v733 = vunpack.c.h.b16 %v436
  %v734 = vunpack.c.l.b16 %v437
  %v735 = vunpack.c.h.b16 %v437
  %v736 = vunpack.c.l.b16 %v438
  %v737 = vunpack.c.h.b16 %v438
  %v738 = vunpack.c.l.b16 %v439
  %v739 = vunpack.c.h.b16 %v439
  %v740 = vunpack.c.l.b16 %v440
  %v741 = vunpack.c.h.b16 %v440
  %v742 = vunpack.c.l.b16 %v441
  %v743 = vunpack.c.h.b16 %v441
  %v744 = vunpack.c.l.b16 %v442
  %v745 = vunpack.c.h.b16 %v442
  %v746 = vunpack.c.l.b16 %v443
  %v747 = vunpack.c.h.b16 %v443
  %v748 = vunpack.c.l.b16 %v444
  %v749 = vunpack.c.h.b16 %v444
  %v750 = vunpack.c.l.b16 %v445
  %v751 = vunpack.c.h.b16 %v445
  %v752 = vunpack.c.l.b16 %v446
  %v753 = vunpack.c.h.b16 %v446
  %v754 = vunpack.c.l.b16 %v447
  %v755 = vunpack.c.h.b16 %v447
  %v756 = vunpack.c.l.b16 %v448
  %v757 = vunpack.c.h.b16 %v448
  %v758 = vunpack.c.l.b16 %v449
  %v759 = vunpack.c.h.b16 %v449
  %v760 = vunpack.c.l.b16 %v450
  %v761 = vunpack.c.h.b16 %v450
  %v762 = vunpack.c.l.b16 %v451
  %v763 = vunpack.c.h.b16 %v451
  %v764 = vunpack.c.l.b16 %v452
  %v765 = vunpack.c.h.b16 %v452
  %v766 = vunpack.c.l.b16 %v453
  %v767 = vunpack.c.h.b16 %v453
  %v768 = vunpack.c.l.b16 %v454
  %v769 = vunpack.c.h.b16 %v454
  %v770 = vunpack.c.l.b16 %v455
  %v771 = vunpack.c.h.b16 %v455
  %v772 = vunpack.c.l.b16 %v456
  %v773 = vunpack.c.h.b16 %v456
  %v774 = vunpack.c.l.b16 %v457
  %v775 = vunpack.c.h.b16 %v457
  %v776 = vunpack.c.l.b16 %v458
  %v777 = vunpack.c.h.b16 %v458
  %v778 = vunpack.c.l.b16 %v459
  %v779 = vunpack.c.h.b16 %v459
  %v780 = vunpack.c.l.b16 %v460
  %v781 = vunpack.c.h.b16 %v460
  %v782 = vunpack.c.l.b16 %v461
  %v783 = vunpack.c.h.b16 %v461
  %v784 = vunpack.c.l.b16 %v462
  %v785 = vunpack.c.h.b16 %v462
  %v786 = vunpack.c.l.b16 %v463
  %v787 = vunpack.c.h.b16 %v463
  %v788 = vunpack.c.l.b16 %v464
  %v789 = vunpack.c.h.b16 %v464
  %v790 = vunpack.c.l.b16 %v465
  %v791 = vunpack.c.h.b16 %v465
  %v792 = vunpack.c.l.b16 %v466
  %v793 = vunpack.c.h.b16 %v466
  %v794 = vunpack.c.l.b16 %v467
  %v795 = vunpack.c.h.b16 %v467
  %v796 = vunpack.c.l.b16 %v468
  %v797 = vunpack.c.h.b16 %v468
  %v798 = vunpack.c.l.b16 %v469
  %v799 = vunpack.c.h.b16 %v469
  %v800 = vunpack.c.l.b16 %v470
  %v801 = vunpack.c.h.b16 %v470
  %v802 = vunpack.c.l.b16 %v471
  %v803 = vunpack.c.h.b16 %v471
  %v804 = vunpack.c.l.b16 %v472
  %v805 = vunpack.c.h.b16 %v472
  %v806 = vunpack.c.l.b16 %v473
  %v807 = vunpack.c.h.b16 %v473
  %v808 = vunpack.c.l.b16 %v474
  %v809 = vunpack.c.h.b16 %v474
  %v810 = vunpack.c.l.b16 %v475
  %v811 = vunpack.c.h.b16 %v475
  %v812 = vunpack.c.l.b16 %v476
  %v813 = vunpack.c.h.b16 %v476
  %v814 = vunpack.c.l.b16 %v477
  %v815 = vunpack.c.h.b16 %v477
  %v816 = vunpack.c.l.b16 %v478
  %v817 = vunpack.c.h.b16 %v478
  %v818 = vunpack.c.l.b16 %v479
  %v819 = vunpack.c.h.b16 %v479
  %v820 = vunpack.c.l.b16 %v480
  %v821 = vunpack.c.h.b16 %v480
  %v822 = vunpack.c.l.b16 %v481
  %v823 = vunpack.c.h.b16 %v481
  %v824 = vunpack.c.l.b16 %v482
  %v825 = vunpack.c.h.b16 %v482
  %v826 = vunpack.c.l.b16 %v483
  %v827 = vunpack.c.h.b16 %v483
  %v828 = vunpack.c.l.b16 %v484
  %v829 = vunpack.c.h.b16 %v484
  %v830 = vunpack.c.l.b16 %v485
  %v831 = vunpack.c.h.b16 %v485
  %v832 = vunpack.c.l.b16 %v486
  %v833 = vunpack.c.h.b16 %v486
  %v834 = vunpack.c.l.b16 %v487
  %v835 = vunpack.c.h.b16 %v487
  %v836 = vunpack.c.l.b16 %v488
  %v837 = vunpack.c.h.b16 %v488
  %v838 = vunpack.c.l.b16 %v489
  %v839 = vunpack.c.h.b16 %v489
  %v840 = vunpack.c.l.b16 %v490
  %v841 = vunpack.c.h.b16 %v490
  %v842 = vunpack.c.l.b16 %v491
  %v843 = vunpack.c.h.b16 %v491
  %v844 = vunpack.c.l.b16 %v492
  %v845 = vunpack.c.h.b16 %v492
  %v846 = vunpack.c.l.b16 %v493
  %v847 = vunpack.c.h.b16 %v493
  %v848 = vunpack.c.l.b16 %v494
  %v849 = vunpack.c.h.b16 %v494
  %v850 = vunpack.c.l.b16 %v495
  %v851 = vunpack.c.h.b16 %v495
  %v852 = vunpack.c.l.b16 %v496
  %v853 = vunpack.c.h.b16 %v496
  %v854 = vunpack.c.l.b16 %v497
  %v855 = vunpack.c.h.b16 %v497
  %v856 = vunpack.c.l.b16 %v498
  %v857 = vunpack.c.h.b16 %v498
  %v858 = vunpack.c.l.b16 %v499
  %v859 = vunpack.c.h.b16 %v499
  %v860 = vunpack.c.l.b16 %v500
  %v861 = vunpack.c.h.b16 %v500
  %v862 = vunpack.c.l.b16 %v501
  %v863 = vunpack.c.h.b16 %v501
  %v864 = vunpack.c.l.b16 %v502
  %v865 = vunpack.c.h.b16 %v502
  %v866 = vunpack.c.l.b16 %v503
  %v867 = vunpack.c.h.b16 %v503
  %v868 = vunpack.c.l.b16 %v504
  %v869 = vunpack.c.h.b16 %v504
  %v870 = vunpack.c.l.b16 %v505
  %v871 = vunpack.c.h.b16 %v505
  %v872 = vunpack.c.l.b16 %v506
  %v873 = vunpack.c.h.b16 %v506
  %v874 = vunpack.c.l.b16 %v507
  %v875 = vunpack.c.h.b16 %v507
  %v876 = vunpack.c.l.b16 %v508
  %v877 = vunpack.c.h.b16 %v508
  %v878 = vunpack.c.l.b16 %v509
  %v879 = vunpack.c.h.b16 %v509
  %v880 = vunpack.c.l.b16 %v510
  %v881 = vunpack.c.h.b16 %v510
  %v882 = vunpack.c.l.b16 %v511
  %v883 = vunpack.c.h.b16 %v511
  %v884 = vunpack.c.l.b16 %v512
  %v885 = vunpack.c.h.b16 %v512
  %v886 = vunpack.c.l.b16 %v513
  %v887 = vunpack.c.h.b16 %v513
  %v888 = vunpack.c.l.b16 %v514
  %v889 = vunpack.c.h.b16 %v514
  %v890 = vunpack.c.l.b16 %v515
  %v891 = vunpack.c.h.b16 %v515
  %v892 = vunpack.c.l.b16 %v516
  %v893 = vunpack.c.h.b16 %v516
  %v894 = vunpack.c.l.b16 %v517
  %v895 = vunpack.c.h.b16 %v517
  %v896 = vunpack.c.l.b16 %v518
  %v897 = vunpack.c.h.b16 %v518
  %v898 = vunpack.c.l.b16 %v519
  %v899 = vunpack.c.h.b16 %v519
  %v900 = vunpack.c.l.b16 %v520
  %v901 = vunpack.c.h.b16 %v520
  %v902 = vunpack.c.l.b16 %v521
  %v903 = vunpack.c.h.b16 %v521
  %v904 = vunpack.c.l.b16 %v522
  %v905 = vunpack.c.h.b16 %v522
  %v906 = vunpack.c.l.b16 %v523
  %v907 = vunpack.c.h.b16 %v523
  %v908 = vunpack.c.l.b16 %v524
  %v909 = vunpack.c.h.b16 %v524
  %v910 = vunpack.c.l.b16 %v525
  %v911 = vunpack.c.h.b16 %v525
  %v912 = vunpack.c.l.b16 %v526
  %v913 = vunpack.c.h.b16 %v526
  %v914 = vunpack.c.l.b16 %v527
  %v915 = vunpack.c.h.b16 %v527
  %v916 = vunpack.c.l.b16 %v528
  %v917 = vunpack.c.h.b16 %v528
  %v918 = vunpack.c.l.b16 %v529
  %v919 = vunpack.c.h.b16 %v529
  %v920 = vunpack.c.l.b16 %v530
  %v921 = vunpack.c.h.b16 %v530
  %v922 = vunpack.c.l.b16 %v531
  %v923 = vunpack.c.h.b16 %v531
  %v924 = vpack.c.b16 %v672, %v668
  %v925 = vpack.c.b16 %v673, %v669
  %v926 = vpack.c.b16 %v674, %v670
  %v927 = vpack.c.b16 %v675, %v671
  %v928 = vpack.c.b16 %v680, %v676
  %v929 = vpack.c.b16 %v681, %v677
  %v930 = vpack.c.b16 %v682, %v678
  %v931 = vpack.c.b16 %v683, %v679
  %v932 = vpack.c.b16 %v688, %v684
  %v933 = vpack.c.b16 %v689, %v685
  %v934 = vpack.c.b16 %v690, %v686
  %v935 = vpack.c.b16 %v691, %v687
  %v936 = vpack.c.b16 %v696, %v692
  %v937 = vpack.c.b16 %v697, %v693
  %v938 = vpack.c.b16 %v698, %v694
  %v939 = vpack.c.b16 %v699, %v695
  %v940 = vpack.c.b16 %v704, %v700
  %v941 = vpack.c.b16 %v705, %v701
  %v942 = vpack.c.b16 %v706, %v702
  %v943 = vpack.c.b16 %v707, %v703
  %v944 = vpack.c.b16 %v712, %v708
  %v945 = vpack.c.b16 %v713, %v709
  %v946 = vpack.c.b16 %v714, %v710
  %v947 = vpack.c.b16 %v715, %v711
  %v948 = vpack.c.b16 %v720, %v716
  %v949 = vpack.c.b16 %v721, %v717
  %v950 = vpack.c.b16 %v722, %v718
  %v951 = vpack.c.b16 %v723, %v719
  %v952 = vpack.c.b16 %v728, %v724
  %v953 = vpack.c.b16 %v729, %v725
  %v954 = vpack.c.b16 %v730, %v726
  %v955 = vpack.c.b16 %v731, %v727
  %v956 = vpack.c.b16 %v736, %v732
  %v957 = vpack.c.b16 %v737, %v733
  %v958 = vpack.c.b16 %v738, %v734
  %v959 = vpack.c.b16 %v739, %v735
  %v960 = vpack.c.b16 %v744, %v740
  %v961 = vpack.c.b16 %v745, %v741
  %v962 = vpack.c.b16 %v746, %v742
  %v963 = vpack.c.b16 %v747, %v743
  %v964 = vpack.c.b16 %v752, %v748
  %v965 = vpack.c.b16 %v753, %v749
  %v966 = vpack.c.b16 %v754, %v750
  %v967 = vpack.c.b16 %v755, %v751
  %v968 = vpack.c.b16 %v760, %v756
  %v969 = vpack.c.b16 %v761, %v757
  %v970 = vpack.c.b16 %v762, %v758
  %v971 = vpack.c.b16 %v763, %v759
  %v972 = vpack.c.b16 %v768, %v764
  %v973 = vpack.c.b16 %v769, %v765
  %v974 = vpack.c.b16 %v770, %v766
  %v975 = vpack.c.b16 %v771, %v767
  %v976 = vpack.c.b16 %v776, %v772
  %v977 = vpack.c.b16 %v777, %v773
  %v978 = vpack.c.b16 %v778, %v774
  %v979 = vpack.c.b16 %v779, %v775
  %v980 = vpack.c.b16 %v784, %v780
  %v981 = vpack.c.b16 %v785, %v781
  %v982 = vpack.c.b16 %v786, %v782
  %v983 = vpack.c.b16 %v787, %v783
  %v984 = vpack.c.b16 %v792, %v788
  %v985 = vpack.c.b16 %v793, %v789
  %v986 = vpack.c.b16 %v794, %v790
  %v987 = vpack.c.b16 %v795, %v791
  %v988 = vpack.c.b16 %v800, %v796
  %v989 = vpack.c.b16 %v801, %v797
  %v990 = vpack.c.b16 %v802, %v798
  %v991 = vpack.c.b16 %v803, %v799
  %v992 = vpack.c.b16 %v808, %v804
  %v993 = vpack.c.b16 %v809, %v805
  %v994 = vpack.c.b16 %v810, %v806
  %v995 = vpack.c.b16 %v811, %v807
  %v996 = vpack.c.b16 %v816, %v812
  %v997 = vpack.c.b16 %v817, %v813
  %v998 = vpack.c.b16 %v818, %v814
  %v999 = vpack.c.b16 %v819, %v815
  %v1000 = vpack.c.b16 %v824, %v820
  %v1001 = vpack.c.b16 %v825, %v821
  %v1002 = vpack.c.b16 %v826, %v822
  %v1003 = vpack.c.b16 %v827, %v823
  %v1004 = vpack.c.b16 %v832, %v828
  %v1005 = vpack.c.b16 %v833, %v829
  %v1006 = vpack.c.b16 %v834, %v830
  %v1007 = vpack.c.b16 %v835, %v831
  %v1008 = vpack.c.b16 %v840, %v836
  %v1009 = vpack.c.b16 %v841, %v837
  %v1010 = vpack.c.b16 %v842, %v838
  %v1011 = vpack.c.b16 %v843, %v839
  %v1012 = vpack.c.b16 %v848, %v844
  %v1013 = vpack.c.b16 %v849, %v845
  %v1014 = vpack.c.b16 %v850, %v846
  %v1015 = vpack.c.b16 %v851, %v847
  %v1016 = vpack.c.b16 %v856, %v852
  %v1017 = vpack.c.b16 %v857, %v853
  %v1018 = vpack.c.b16 %v858, %v854
  %v1019 = vpack.c.b16 %v859, %v855
  %v1020 = vpack.c.b16 %v864, %v860
  %v1021 = vpack.c.b16 %v865, %v861
  %v1022 = vpack.c.b16 %v866, %v862
  %v1023 = vpack.c.b16 %v867, %v863
  %v1024 = vpack.c.b16 %v872, %v868
  %v1025 = vpack.c.b16 %v873, %v869
  %v1026 = vpack.c.b16 %v874, %v870
  %v1027 = vpack.c.b16 %v875, %v871
  %v1028 = vpack.c.b16 %v880, %v876
  %v1029 = vpack.c.b16 %v881, %v877
  %v1030 = vpack.c.b16 %v882, %v878
  %v1031 = vpack.c.b16 %v883, %v879
  %v1032 = vpack.c.b16 %v888, %v884
  %v1033 = vpack.c.b16 %v889, %v885
  %v1034 = vpack.c.b16 %v890, %v886
  %v1035 = vpack.c.b16 %v891, %v887
  %v1036 = vpack.c.b16 %v896, %v892
  %v1037 = vpack.c.b16 %v897, %v893
  %v1038 = vpack.c.b16 %v898, %v894
  %v1039 = vpack.c.b16 %v899, %v895
  %v1040 = vpack.c.b16 %v904, %v900
  %v1041 = vpack.c.b16 %v905, %v901
  %v1042 = vpack.c.b16 %v906, %v902
  %v1043 = vpack.c.b16 %v907, %v903
  %v1044 = vpack.c.b16 %v912, %v908
  %v1045 = vpack.c.b16 %v913, %v909
  %v1046 = vpack.c.b16 %v914, %v910
  %v1047 = vpack.c.b16 %v915, %v911
  %v1048 = vpack.c.b16 %v920, %v916
  %v1049 = vpack.c.b16 %v921, %v917
  %v1050 = vpack.c.b16 %v922, %v918
  %v1051 = vpack.c.b16 %v923, %v919
  %1180 = vmatprep.subr.bf16.mxu0 %v925
  %1181 = vmatpush1.bf16.msra.mxu0 %v924
  %1182 = vmatprep.subr.bf16.mxu0 %v929
  %1183 = vmatpush1.bf16.msra.mxu0 %v928
  %1184 = vmatprep.subr.bf16.mxu0 %v933
  %1185 = vmatpush1.bf16.msra.mxu0 %v932
  %1186 = vmatprep.subr.bf16.mxu0 %v937
  %1187 = vmatpush1.bf16.msra.mxu0 %v936
  %1188 = vmatprep.subr.bf16.mxu0 %v941
  %1189 = vmatpush1.bf16.msra.mxu0 %v940
  %1190 = vmatprep.subr.bf16.mxu0 %v945
  %1191 = vmatpush1.bf16.msra.mxu0 %v944
  %1192 = vmatprep.subr.bf16.mxu0 %v949
  %1193 = vmatpush1.bf16.msra.mxu0 %v948
  %1194 = vmatprep.subr.bf16.mxu0 %v953
  %1195 = vmatpush1.bf16.msra.mxu0 %v952
  %1196 = vmatprep.subr.bf16.mxu0 %v957
  %1197 = vmatpush1.bf16.msra.mxu0 %v956
  %1198 = vmatprep.subr.bf16.mxu0 %v961
  %1199 = vmatpush1.bf16.msra.mxu0 %v960
  %1200 = vmatprep.subr.bf16.mxu0 %v965
  %1201 = vmatpush1.bf16.msra.mxu0 %v964
  %1202 = vmatprep.subr.bf16.mxu0 %v969
  %1203 = vmatpush1.bf16.msra.mxu0 %v968
  %1204 = vmatprep.subr.bf16.mxu0 %v973
  %1205 = vmatpush1.bf16.msra.mxu0 %v972
  %1206 = vmatprep.subr.bf16.mxu0 %v977
  %1207 = vmatpush1.bf16.msra.mxu0 %v976
  %1208 = vmatprep.subr.bf16.mxu0 %v981
  %1209 = vmatpush1.bf16.msra.mxu0 %v980
  %1210 = vmatprep.subr.bf16.mxu0 %v985
  %1211 = vmatpush1.bf16.msra.mxu0 %v984
  %1212 = vmatprep.mubr.bf16.mxu0 %v533
  %1213 = vmatmul.mubr.bf16.gmra.mrb[0].mxu0 %v532
  %v1214 = vpop.f32.mrb[0].mxu0
  %v1215 = vadd.f32 0.0, %v1214
  %v1216 = vpop.f32.mrb[0].mxu0
  %v1217 = vadd.f32 0.0, %v1216
  %v1218 = vpop.f32.mrb[0].mxu0
  %v1219 = vadd.f32 0.0, %v1218
  %v1220 = vpop.f32.mrb[0].mxu0
  %v1221 = vadd.f32 0.0, %v1220
  %1222 = vmatprep.mubr.bf16.mxu0 %v537
  %1223 = vmatmul.mubr.bf16.gmra.mrb[0].mxu0 %v536
  %v1224 = vpop.f32.mrb[0].mxu0
  %v1225 = vadd.f32 0.0, %v1224
  %v1226 = vpop.f32.mrb[0].mxu0
  %v1227 = vadd.f32 0.0, %v1226
  %v1228 = vpop.f32.mrb[0].mxu0
  %v1229 = vadd.f32 0.0, %v1228
  %v1230 = vpop.f32.mrb[0].mxu0
  %v1231 = vadd.f32 0.0, %v1230
  %1232 = vdwg.mxu0
  %1233 = vmatprep.subr.bf16.mxu0 %v989
  %1234 = vmatpush1.bf16.msra.mxu0 %v988
  %1235 = vmatprep.subr.bf16.mxu0 %v993
  %1236 = vmatpush1.bf16.msra.mxu0 %v992
  %1237 = vmatprep.subr.bf16.mxu0 %v997
  %1238 = vmatpush1.bf16.msra.mxu0 %v996
  %1239 = vmatprep.subr.bf16.mxu0 %v1001
  %1240 = vmatpush1.bf16.msra.mxu0 %v1000
  %1241 = vmatprep.subr.bf16.mxu0 %v1005
  %1242 = vmatpush1.bf16.msra.mxu0 %v1004
  %1243 = vmatprep.subr.bf16.mxu0 %v1009
  %1244 = vmatpush1.bf16.msra.mxu0 %v1008
  %1245 = vmatprep.subr.bf16.mxu0 %v1013
  %1246 = vmatpush1.bf16.msra.mxu0 %v1012
  %1247 = vmatprep.subr.bf16.mxu0 %v1017
  %1248 = vmatpush1.bf16.msra.mxu0 %v1016
  %1249 = vmatprep.subr.bf16.mxu0 %v1021
  %1250 = vmatpush1.bf16.msra.mxu0 %v1020
  %1251 = vmatprep.subr.bf16.mxu0 %v1025
  %1252 = vmatpush1.bf16.msra.mxu0 %v1024
  %1253 = vmatprep.subr.bf16.mxu0 %v1029
  %1254 = vmatpush1.bf16.msra.mxu0 %v1028
  %1255 = vmatprep.subr.bf16.mxu0 %v1033
  %1256 = vmatpush1.bf16.msra.mxu0 %v1032
  %1257 = vmatprep.subr.bf16.mxu0 %v1037
  %1258 = vmatpush1.bf16.msra.mxu0 %v1036
  %1259 = vmatprep.subr.bf16.mxu0 %v1041
  %1260 = vmatpush1.bf16.msra.mxu0 %v1040
  %1261 = vmatprep.subr.bf16.mxu0 %v1045
  %1262 = vmatpush1.bf16.msra.mxu0 %v1044
  %1263 = vmatprep.subr.bf16.mxu0 %v1049
  %1264 = vmatpush1.bf16.msra.mxu0 %v1048
  %1265 = vmatprep.mubr.bf16.mxu0 %v535
  %1266 = vmatmul.mubr.bf16.gmra.mrb[0].mxu0 %v534
  %v1267 = vpop.f32.mrb[0].mxu0
  %v1268 = vadd.f32 %v1215, %v1267
  %v1269 = vpop.f32.mrb[0].mxu0
  %v1270 = vadd.f32 %v1217, %v1269
  %v1271 = vpop.f32.mrb[0].mxu0
  %v1272 = vadd.f32 %v1219, %v1271
  %v1273 = vpop.f32.mrb[0].mxu0
  %v1274 = vadd.f32 %v1221, %v1273
  %1275 = vmatprep.mubr.bf16.mxu0 %v539
  %1276 = vmatmul.mubr.bf16.gmra.mrb[0].mxu0 %v538
  %v1277 = vpop.f32.mrb[0].mxu0
  %v1278 = vadd.f32 %v1225, %v1277
  %v1279 = vpop.f32.mrb[0].mxu0
  %v1280 = vadd.f32 %v1227, %v1279
  %v1281 = vpop.f32.mrb[0].mxu0
  %v1282 = vadd.f32 %v1229, %v1281
  %v1283 = vpop.f32.mrb[0].mxu0
  %v1284 = vadd.f32 %v1231, %v1283
  %1285 = vdwg.mxu0
  %1286 = vmatprep.subr.bf16.mxu0 %v927
  %1287 = vmatpush1.bf16.msra.mxu0 %v926
  %1288 = vmatprep.subr.bf16.mxu0 %v931
  %1289 = vmatpush1.bf16.msra.mxu0 %v930
  %1290 = vmatprep.subr.bf16.mxu0 %v935
  %1291 = vmatpush1.bf16.msra.mxu0 %v934
  %1292 = vmatprep.subr.bf16.mxu0 %v939
  %1293 = vmatpush1.bf16.msra.mxu0 %v938
  %1294 = vmatprep.subr.bf16.mxu0 %v943
  %1295 = vmatpush1.bf16.msra.mxu0 %v942
  %1296 = vmatprep.subr.bf16.mxu0 %v947
  %1297 = vmatpush1.bf16.msra.mxu0 %v946
  %1298 = vmatprep.subr.bf16.mxu0 %v951
  %1299 = vmatpush1.bf16.msra.mxu0 %v950
  %1300 = vmatprep.subr.bf16.mxu0 %v955
  %1301 = vmatpush1.bf16.msra.mxu0 %v954
  %1302 = vmatprep.subr.bf16.mxu0 %v959
  %1303 = vmatpush1.bf16.msra.mxu0 %v958
  %1304 = vmatprep.subr.bf16.mxu0 %v963
  %1305 = vmatpush1.bf16.msra.mxu0 %v962
  %1306 = vmatprep.subr.bf16.mxu0 %v967
  %1307 = vmatpush1.bf16.msra.mxu0 %v966
  %1308 = vmatprep.subr.bf16.mxu0 %v971
  %1309 = vmatpush1.bf16.msra.mxu0 %v970
  %1310 = vmatprep.subr.bf16.mxu0 %v975
  %1311 = vmatpush1.bf16.msra.mxu0 %v974
  %1312 = vmatprep.subr.bf16.mxu0 %v979
  %1313 = vmatpush1.bf16.msra.mxu0 %v978
  %1314 = vmatprep.subr.bf16.mxu0 %v983
  %1315 = vmatpush1.bf16.msra.mxu0 %v982
  %1316 = vmatprep.subr.bf16.mxu0 %v987
  %1317 = vmatpush1.bf16.msra.mxu0 %v986
  %1318 = vmatprep.mubr.bf16.mxu0 %v533
  %1319 = vmatmul.mubr.bf16.gmra.mrb[0].mxu0 %v532
  %v1320 = vpop.f32.mrb[0].mxu0
  %v1321 = vadd.f32 0.0, %v1320
  %v1322 = vpop.f32.mrb[0].mxu0
  %v1323 = vadd.f32 0.0, %v1322
  %v1324 = vpop.f32.mrb[0].mxu0
  %v1325 = vadd.f32 0.0, %v1324
  %v1326 = vpop.f32.mrb[0].mxu0
  %v1327 = vadd.f32 0.0, %v1326
  %1328 = vmatprep.mubr.bf16.mxu0 %v537
  %1329 = vmatmul.mubr.bf16.gmra.mrb[0].mxu0 %v536
  %v1330 = vpop.f32.mrb[0].mxu0
  %v1331 = vadd.f32 0.0, %v1330
  %v1332 = vpop.f32.mrb[0].mxu0
  %v1333 = vadd.f32 0.0, %v1332
  %v1334 = vpop.f32.mrb[0].mxu0
  %v1335 = vadd.f32 0.0, %v1334
  %v1336 = vpop.f32.mrb[0].mxu0
  %v1337 = vadd.f32 0.0, %v1336
  %1338 = vdwg.mxu0
  %1339 = vmatprep.subr.bf16.mxu0 %v991
  %1340 = vmatpush1.bf16.msra.mxu0 %v990
  %1341 = vmatprep.subr.bf16.mxu0 %v995
  %1342 = vmatpush1.bf16.msra.mxu0 %v994
  %1343 = vmatprep.subr.bf16.mxu0 %v999
  %1344 = vmatpush1.bf16.msra.mxu0 %v998
  %1345 = vmatprep.subr.bf16.mxu0 %v1003
  %1346 = vmatpush1.bf16.msra.mxu0 %v1002
  %1347 = vmatprep.subr.bf16.mxu0 %v1007
  %1348 = vmatpush1.bf16.msra.mxu0 %v1006
  %1349 = vmatprep.subr.bf16.mxu0 %v1011
  %1350 = vmatpush1.bf16.msra.mxu0 %v1010
  %1351 = vmatprep.subr.bf16.mxu0 %v1015
  %1352 = vmatpush1.bf16.msra.mxu0 %v1014
  %1353 = vmatprep.subr.bf16.mxu0 %v1019
  %1354 = vmatpush1.bf16.msra.mxu0 %v1018
  %1355 = vmatprep.subr.bf16.mxu0 %v1023
  %1356 = vmatpush1.bf16.msra.mxu0 %v1022
  %1357 = vmatprep.subr.bf16.mxu0 %v1027
  %1358 = vmatpush1.bf16.msra.mxu0 %v1026
  %1359 = vmatprep.subr.bf16.mxu0 %v1031
  %1360 = vmatpush1.bf16.msra.mxu0 %v1030
  %1361 = vmatprep.subr.bf16.mxu0 %v1035
  %1362 = vmatpush1.bf16.msra.mxu0 %v1034
  %1363 = vmatprep.subr.bf16.mxu0 %v1039
  %1364 = vmatpush1.bf16.msra.mxu0 %v1038
  %1365 = vmatprep.subr.bf16.mxu0 %v1043
  %1366 = vmatpush1.bf16.msra.mxu0 %v1042
  %1367 = vmatprep.subr.bf16.mxu0 %v1047
  %1368 = vmatpush1.bf16.msra.mxu0 %v1046
  %1369 = vmatprep.subr.bf16.mxu0 %v1051
  %1370 = vmatpush1.bf16.msra.mxu0 %v1050
  %1371 = vmatprep.mubr.bf16.mxu0 %v535
  %1372 = vmatmul.mubr.bf16.gmra.mrb[0].mxu0 %v534
  %v1373 = vpop.f32.mrb[0].mxu0
  %v1374 = vadd.f32 %v1321, %v1373
  %v1375 = vpop.f32.mrb[0].mxu0
  %v1376 = vadd.f32 %v1323, %v1375
  %v1377 = vpop.f32.mrb[0].mxu0
  %v1378 = vadd.f32 %v1325, %v1377
  %v1379 = vpop.f32.mrb[0].mxu0
  %v1380 = vadd.f32 %v1327, %v1379
  %1381 = vmatprep.mubr.bf16.mxu0 %v539
  %1382 = vmatmul.mubr.bf16.gmra.mrb[0].mxu0 %v538
  %v1383 = vpop.f32.mrb[0].mxu0
  %v1384 = vadd.f32 %v1331, %v1383
  %v1385 = vpop.f32.mrb[0].mxu0
  %v1386 = vadd.f32 %v1333, %v1385
  %v1387 = vpop.f32.mrb[0].mxu0
  %v1388 = vadd.f32 %v1335, %v1387
  %v1389 = vpop.f32.mrb[0].mxu0
  %v1390 = vadd.f32 %v1337, %v1389
  %1391 = vdwg.mxu0
  %v1520 = vunpack.c.l.b16 %v252
  %v1521 = vunpack.c.h.b16 %v252
  %v1522 = vunpack.c.l.b16 %v253
  %v1523 = vunpack.c.h.b16 %v253
  %v1524 = vunpack.c.l.b16 %v254
  %v1525 = vunpack.c.h.b16 %v254
  %v1526 = vunpack.c.l.b16 %v255
  %v1527 = vunpack.c.h.b16 %v255
  %v1528 = vunpack.c.l.b16 %v256
  %v1529 = vunpack.c.h.b16 %v256
  %v1530 = vunpack.c.l.b16 %v257
  %v1531 = vunpack.c.h.b16 %v257
  %v1532 = vunpack.c.l.b16 %v258
  %v1533 = vunpack.c.h.b16 %v258
  %v1534 = vunpack.c.l.b16 %v259
  %v1535 = vunpack.c.h.b16 %v259
  %v1536 = vunpack.c.l.b16 %v260
  %v1537 = vunpack.c.h.b16 %v260
  %v1538 = vunpack.c.l.b16 %v261
  %v1539 = vunpack.c.h.b16 %v261
  %v1540 = vunpack.c.l.b16 %v262
  %v1541 = vunpack.c.h.b16 %v262
  %v1542 = vunpack.c.l.b16 %v263
  %v1543 = vunpack.c.h.b16 %v263
  %v1544 = vunpack.c.l.b16 %v264
  %v1545 = vunpack.c.h.b16 %v264
  %v1546 = vunpack.c.l.b16 %v265
  %v1547 = vunpack.c.h.b16 %v265
  %v1548 = vunpack.c.l.b16 %v266
  %v1549 = vunpack.c.h.b16 %v266
  %v1550 = vunpack.c.l.b16 %v267
  %v1551 = vunpack.c.h.b16 %v267
  %v1552 = vunpack.c.l.b16 %v268
  %v1553 = vunpack.c.h.b16 %v268
  %v1554 = vunpack.c.l.b16 %v269
  %v1555 = vunpack.c.h.b16 %v269
  %v1556 = vunpack.c.l.b16 %v270
  %v1557 = vunpack.c.h.b16 %v270
  %v1558 = vunpack.c.l.b16 %v271
  %v1559 = vunpack.c.h.b16 %v271
  %v1560 = vunpack.c.l.b16 %v272
  %v1561 = vunpack.c.h.b16 %v272
  %v1562 = vunpack.c.l.b16 %v273
  %v1563 = vunpack.c.h.b16 %v273
  %v1564 = vunpack.c.l.b16 %v274
  %v1565 = vunpack.c.h.b16 %v274
  %v1566 = vunpack.c.l.b16 %v275
  %v1567 = vunpack.c.h.b16 %v275
  %v1568 = vunpack.c.l.b16 %v276
  %v1569 = vunpack.c.h.b16 %v276
  %v1570 = vunpack.c.l.b16 %v277
  %v1571 = vunpack.c.h.b16 %v277
  %v1572 = vunpack.c.l.b16 %v278
  %v1573 = vunpack.c.h.b16 %v278
  %v1574 = vunpack.c.l.b16 %v279
  %v1575 = vunpack.c.h.b16 %v279
  %v1576 = vunpack.c.l.b16 %v280
  %v1577 = vunpack.c.h.b16 %v280
  %v1578 = vunpack.c.l.b16 %v281
  %v1579 = vunpack.c.h.b16 %v281
  %v1580 = vunpack.c.l.b16 %v282
  %v1581 = vunpack.c.h.b16 %v282
  %v1582 = vunpack.c.l.b16 %v283
  %v1583 = vunpack.c.h.b16 %v283
  %v1584 = vunpack.c.l.b16 %v284
  %v1585 = vunpack.c.h.b16 %v284
  %v1586 = vunpack.c.l.b16 %v285
  %v1587 = vunpack.c.h.b16 %v285
  %v1588 = vunpack.c.l.b16 %v286
  %v1589 = vunpack.c.h.b16 %v286
  %v1590 = vunpack.c.l.b16 %v287
  %v1591 = vunpack.c.h.b16 %v287
  %v1592 = vunpack.c.l.b16 %v288
  %v1593 = vunpack.c.h.b16 %v288
  %v1594 = vunpack.c.l.b16 %v289
  %v1595 = vunpack.c.h.b16 %v289
  %v1596 = vunpack.c.l.b16 %v290
  %v1597 = vunpack.c.h.b16 %v290
  %v1598 = vunpack.c.l.b16 %v291
  %v1599 = vunpack.c.h.b16 %v291
  %v1600 = vunpack.c.l.b16 %v292
  %v1601 = vunpack.c.h.b16 %v292
  %v1602 = vunpack.c.l.b16 %v293
  %v1603 = vunpack.c.h.b16 %v293
  %v1604 = vunpack.c.l.b16 %v294
  %v1605 = vunpack.c.h.b16 %v294
  %v1606 = vunpack.c.l.b16 %v295
  %v1607 = vunpack.c.h.b16 %v295
  %v1608 = vunpack.c.l.b16 %v296
  %v1609 = vunpack.c.h.b16 %v296
  %v1610 = vunpack.c.l.b16 %v297
  %v1611 = vunpack.c.h.b16 %v297
  %v1612 = vunpack.c.l.b16 %v298
  %v1613 = vunpack.c.h.b16 %v298
  %v1614 = vunpack.c.l.b16 %v299
  %v1615 = vunpack.c.h.b16 %v299
  %v1616 = vunpack.c.l.b16 %v300
  %v1617 = vunpack.c.h.b16 %v300
  %v1618 = vunpack.c.l.b16 %v301
  %v1619 = vunpack.c.h.b16 %v301
  %v1620 = vunpack.c.l.b16 %v302
  %v1621 = vunpack.c.h.b16 %v302
  %v1622 = vunpack.c.l.b16 %v303
  %v1623 = vunpack.c.h.b16 %v303
  %v1624 = vunpack.c.l.b16 %v304
  %v1625 = vunpack.c.h.b16 %v304
  %v1626 = vunpack.c.l.b16 %v305
  %v1627 = vunpack.c.h.b16 %v305
  %v1628 = vunpack.c.l.b16 %v306
  %v1629 = vunpack.c.h.b16 %v306
  %v1630 = vunpack.c.l.b16 %v307
  %v1631 = vunpack.c.h.b16 %v307
  %v1632 = vunpack.c.l.b16 %v308
  %v1633 = vunpack.c.h.b16 %v308
  %v1634 = vunpack.c.l.b16 %v309
  %v1635 = vunpack.c.h.b16 %v309
  %v1636 = vunpack.c.l.b16 %v310
  %v1637 = vunpack.c.h.b16 %v310
  %v1638 = vunpack.c.l.b16 %v311
  %v1639 = vunpack.c.h.b16 %v311
  %v1640 = vunpack.c.l.b16 %v312
  %v1641 = vunpack.c.h.b16 %v312
  %v1642 = vunpack.c.l.b16 %v313
  %v1643 = vunpack.c.h.b16 %v313
  %v1644 = vunpack.c.l.b16 %v314
  %v1645 = vunpack.c.h.b16 %v314
  %v1646 = vunpack.c.l.b16 %v315
  %v1647 = vunpack.c.h.b16 %v315
  %v1648 = vunpack.c.l.b16 %v316
  %v1649 = vunpack.c.h.b16 %v316
  %v1650 = vunpack.c.l.b16 %v317
  %v1651 = vunpack.c.h.b16 %v317
  %v1652 = vunpack.c.l.b16 %v318
  %v1653 = vunpack.c.h.b16 %v318
  %v1654 = vunpack.c.l.b16 %v319
  %v1655 = vunpack.c.h.b16 %v319
  %v1656 = vunpack.c.l.b16 %v320
  %v1657 = vunpack.c.h.b16 %v320
  %v1658 = vunpack.c.l.b16 %v321
  %v1659 = vunpack.c.h.b16 %v321
  %v1660 = vunpack.c.l.b16 %v322
  %v1661 = vunpack.c.h.b16 %v322
  %v1662 = vunpack.c.l.b16 %v323
  %v1663 = vunpack.c.h.b16 %v323
  %v1664 = vunpack.c.l.b16 %v324
  %v1665 = vunpack.c.h.b16 %v324
  %v1666 = vunpack.c.l.b16 %v325
  %v1667 = vunpack.c.h.b16 %v325
  %v1668 = vunpack.c.l.b16 %v326
  %v1669 = vunpack.c.h.b16 %v326
  %v1670 = vunpack.c.l.b16 %v327
  %v1671 = vunpack.c.h.b16 %v327
  %v1672 = vunpack.c.l.b16 %v328
  %v1673 = vunpack.c.h.b16 %v328
  %v1674 = vunpack.c.l.b16 %v329
  %v1675 = vunpack.c.h.b16 %v329
  %v1676 = vunpack.c.l.b16 %v330
  %v1677 = vunpack.c.h.b16 %v330
  %v1678 = vunpack.c.l.b16 %v331
  %v1679 = vunpack.c.h.b16 %v331
  %v1680 = vunpack.c.l.b16 %v332
  %v1681 = vunpack.c.h.b16 %v332
  %v1682 = vunpack.c.l.b16 %v333
  %v1683 = vunpack.c.h.b16 %v333
  %v1684 = vunpack.c.l.b16 %v334
  %v1685 = vunpack.c.h.b16 %v334
  %v1686 = vunpack.c.l.b16 %v335
  %v1687 = vunpack.c.h.b16 %v335
  %v1688 = vunpack.c.l.b16 %v336
  %v1689 = vunpack.c.h.b16 %v336
  %v1690 = vunpack.c.l.b16 %v337
  %v1691 = vunpack.c.h.b16 %v337
  %v1692 = vunpack.c.l.b16 %v338
  %v1693 = vunpack.c.h.b16 %v338
  %v1694 = vunpack.c.l.b16 %v339
  %v1695 = vunpack.c.h.b16 %v339
  %v1696 = vunpack.c.l.b16 %v340
  %v1697 = vunpack.c.h.b16 %v340
  %v1698 = vunpack.c.l.b16 %v341
  %v1699 = vunpack.c.h.b16 %v341
  %v1700 = vunpack.c.l.b16 %v342
  %v1701 = vunpack.c.h.b16 %v342
  %v1702 = vunpack.c.l.b16 %v343
  %v1703 = vunpack.c.h.b16 %v343
  %v1704 = vunpack.c.l.b16 %v344
  %v1705 = vunpack.c.h.b16 %v344
  %v1706 = vunpack.c.l.b16 %v345
  %v1707 = vunpack.c.h.b16 %v345
  %v1708 = vunpack.c.l.b16 %v346
  %v1709 = vunpack.c.h.b16 %v346
  %v1710 = vunpack.c.l.b16 %v347
  %v1711 = vunpack.c.h.b16 %v347
  %v1712 = vunpack.c.l.b16 %v348
  %v1713 = vunpack.c.h.b16 %v348
  %v1714 = vunpack.c.l.b16 %v349
  %v1715 = vunpack.c.h.b16 %v349
  %v1716 = vunpack.c.l.b16 %v350
  %v1717 = vunpack.c.h.b16 %v350
  %v1718 = vunpack.c.l.b16 %v351
  %v1719 = vunpack.c.h.b16 %v351
  %v1720 = vunpack.c.l.b16 %v352
  %v1721 = vunpack.c.h.b16 %v352
  %v1722 = vunpack.c.l.b16 %v353
  %v1723 = vunpack.c.h.b16 %v353
  %v1724 = vunpack.c.l.b16 %v354
  %v1725 = vunpack.c.h.b16 %v354
  %v1726 = vunpack.c.l.b16 %v355
  %v1727 = vunpack.c.h.b16 %v355
  %v1728 = vunpack.c.l.b16 %v356
  %v1729 = vunpack.c.h.b16 %v356
  %v1730 = vunpack.c.l.b16 %v357
  %v1731 = vunpack.c.h.b16 %v357
  %v1732 = vunpack.c.l.b16 %v358
  %v1733 = vunpack.c.h.b16 %v358
  %v1734 = vunpack.c.l.b16 %v359
  %v1735 = vunpack.c.h.b16 %v359
  %v1736 = vunpack.c.l.b16 %v360
  %v1737 = vunpack.c.h.b16 %v360
  %v1738 = vunpack.c.l.b16 %v361
  %v1739 = vunpack.c.h.b16 %v361
  %v1740 = vunpack.c.l.b16 %v362
  %v1741 = vunpack.c.h.b16 %v362
  %v1742 = vunpack.c.l.b16 %v363
  %v1743 = vunpack.c.h.b16 %v363
  %v1744 = vunpack.c.l.b16 %v364
  %v1745 = vunpack.c.h.b16 %v364
  %v1746 = vunpack.c.l.b16 %v365
  %v1747 = vunpack.c.h.b16 %v365
  %v1748 = vunpack.c.l.b16 %v366
  %v1749 = vunpack.c.h.b16 %v366
  %v1750 = vunpack.c.l.b16 %v367
  %v1751 = vunpack.c.h.b16 %v367
  %v1752 = vunpack.c.l.b16 %v368
  %v1753 = vunpack.c.h.b16 %v368
  %v1754 = vunpack.c.l.b16 %v369
  %v1755 = vunpack.c.h.b16 %v369
  %v1756 = vunpack.c.l.b16 %v370
  %v1757 = vunpack.c.h.b16 %v370
  %v1758 = vunpack.c.l.b16 %v371
  %v1759 = vunpack.c.h.b16 %v371
  %v1760 = vunpack.c.l.b16 %v372
  %v1761 = vunpack.c.h.b16 %v372
  %v1762 = vunpack.c.l.b16 %v373
  %v1763 = vunpack.c.h.b16 %v373
  %v1764 = vunpack.c.l.b16 %v374
  %v1765 = vunpack.c.h.b16 %v374
  %v1766 = vunpack.c.l.b16 %v375
  %v1767 = vunpack.c.h.b16 %v375
  %v1768 = vunpack.c.l.b16 %v376
  %v1769 = vunpack.c.h.b16 %v376
  %v1770 = vunpack.c.l.b16 %v377
  %v1771 = vunpack.c.h.b16 %v377
  %v1772 = vunpack.c.l.b16 %v378
  %v1773 = vunpack.c.h.b16 %v378
  %v1774 = vunpack.c.l.b16 %v379
  %v1775 = vunpack.c.h.b16 %v379
  %v1776 = vpack.c.b16 %v1524, %v1520
  %v1777 = vpack.c.b16 %v1525, %v1521
  %v1778 = vpack.c.b16 %v1526, %v1522
  %v1779 = vpack.c.b16 %v1527, %v1523
  %v1780 = vpack.c.b16 %v1532, %v1528
  %v1781 = vpack.c.b16 %v1533, %v1529
  %v1782 = vpack.c.b16 %v1534, %v1530
  %v1783 = vpack.c.b16 %v1535, %v1531
  %v1784 = vpack.c.b16 %v1540, %v1536
  %v1785 = vpack.c.b16 %v1541, %v1537
  %v1786 = vpack.c.b16 %v1542, %v1538
  %v1787 = vpack.c.b16 %v1543, %v1539
  %v1788 = vpack.c.b16 %v1548, %v1544
  %v1789 = vpack.c.b16 %v1549, %v1545
  %v1790 = vpack.c.b16 %v1550, %v1546
  %v1791 = vpack.c.b16 %v1551, %v1547
  %v1792 = vpack.c.b16 %v1556, %v1552
  %v1793 = vpack.c.b16 %v1557, %v1553
  %v1794 = vpack.c.b16 %v1558, %v1554
  %v1795 = vpack.c.b16 %v1559, %v1555
  %v1796 = vpack.c.b16 %v1564, %v1560
  %v1797 = vpack.c.b16 %v1565, %v1561
  %v1798 = vpack.c.b16 %v1566, %v1562
  %v1799 = vpack.c.b16 %v1567, %v1563
  %v1800 = vpack.c.b16 %v1572, %v1568
  %v1801 = vpack.c.b16 %v1573, %v1569
  %v1802 = vpack.c.b16 %v1574, %v1570
  %v1803 = vpack.c.b16 %v1575, %v1571
  %v1804 = vpack.c.b16 %v1580, %v1576
  %v1805 = vpack.c.b16 %v1581, %v1577
  %v1806 = vpack.c.b16 %v1582, %v1578
  %v1807 = vpack.c.b16 %v1583, %v1579
  %v1808 = vpack.c.b16 %v1588, %v1584
  %v1809 = vpack.c.b16 %v1589, %v1585
  %v1810 = vpack.c.b16 %v1590, %v1586
  %v1811 = vpack.c.b16 %v1591, %v1587
  %v1812 = vpack.c.b16 %v1596, %v1592
  %v1813 = vpack.c.b16 %v1597, %v1593
  %v1814 = vpack.c.b16 %v1598, %v1594
  %v1815 = vpack.c.b16 %v1599, %v1595
  %v1816 = vpack.c.b16 %v1604, %v1600
  %v1817 = vpack.c.b16 %v1605, %v1601
  %v1818 = vpack.c.b16 %v1606, %v1602
  %v1819 = vpack.c.b16 %v1607, %v1603
  %v1820 = vpack.c.b16 %v1612, %v1608
  %v1821 = vpack.c.b16 %v1613, %v1609
  %v1822 = vpack.c.b16 %v1614, %v1610
  %v1823 = vpack.c.b16 %v1615, %v1611
  %v1824 = vpack.c.b16 %v1620, %v1616
  %v1825 = vpack.c.b16 %v1621, %v1617
  %v1826 = vpack.c.b16 %v1622, %v1618
  %v1827 = vpack.c.b16 %v1623, %v1619
  %v1828 = vpack.c.b16 %v1628, %v1624
  %v1829 = vpack.c.b16 %v1629, %v1625
  %v1830 = vpack.c.b16 %v1630, %v1626
  %v1831 = vpack.c.b16 %v1631, %v1627
  %v1832 = vpack.c.b16 %v1636, %v1632
  %v1833 = vpack.c.b16 %v1637, %v1633
  %v1834 = vpack.c.b16 %v1638, %v1634
  %v1835 = vpack.c.b16 %v1639, %v1635
  %v1836 = vpack.c.b16 %v1644, %v1640
  %v1837 = vpack.c.b16 %v1645, %v1641
  %v1838 = vpack.c.b16 %v1646, %v1642
  %v1839 = vpack.c.b16 %v1647, %v1643
  %v1840 = vpack.c.b16 %v1652, %v1648
  %v1841 = vpack.c.b16 %v1653, %v1649
  %v1842 = vpack.c.b16 %v1654, %v1650
  %v1843 = vpack.c.b16 %v1655, %v1651
  %v1844 = vpack.c.b16 %v1660, %v1656
  %v1845 = vpack.c.b16 %v1661, %v1657
  %v1846 = vpack.c.b16 %v1662, %v1658
  %v1847 = vpack.c.b16 %v1663, %v1659
  %v1848 = vpack.c.b16 %v1668, %v1664
  %v1849 = vpack.c.b16 %v1669, %v1665
  %v1850 = vpack.c.b16 %v1670, %v1666
  %v1851 = vpack.c.b16 %v1671, %v1667
  %v1852 = vpack.c.b16 %v1676, %v1672
  %v1853 = vpack.c.b16 %v1677, %v1673
  %v1854 = vpack.c.b16 %v1678, %v1674
  %v1855 = vpack.c.b16 %v1679, %v1675
  %v1856 = vpack.c.b16 %v1684, %v1680
  %v1857 = vpack.c.b16 %v1685, %v1681
  %v1858 = vpack.c.b16 %v1686, %v1682
  %v1859 = vpack.c.b16 %v1687, %v1683
  %v1860 = vpack.c.b16 %v1692, %v1688
  %v1861 = vpack.c.b16 %v1693, %v1689
  %v1862 = vpack.c.b16 %v1694, %v1690
  %v1863 = vpack.c.b16 %v1695, %v1691
  %v1864 = vpack.c.b16 %v1700, %v1696
  %v1865 = vpack.c.b16 %v1701, %v1697
  %v1866 = vpack.c.b16 %v1702, %v1698
  %v1867 = vpack.c.b16 %v1703, %v1699
  %v1868 = vpack.c.b16 %v1708, %v1704
  %v1869 = vpack.c.b16 %v1709, %v1705
  %v1870 = vpack.c.b16 %v1710, %v1706
  %v1871 = vpack.c.b16 %v1711, %v1707
  %v1872 = vpack.c.b16 %v1716, %v1712
  %v1873 = vpack.c.b16 %v1717, %v1713
  %v1874 = vpack.c.b16 %v1718, %v1714
  %v1875 = vpack.c.b16 %v1719, %v1715
  %v1876 = vpack.c.b16 %v1724, %v1720
  %v1877 = vpack.c.b16 %v1725, %v1721
  %v1878 = vpack.c.b16 %v1726, %v1722
  %v1879 = vpack.c.b16 %v1727, %v1723
  %v1880 = vpack.c.b16 %v1732, %v1728
  %v1881 = vpack.c.b16 %v1733, %v1729
  %v1882 = vpack.c.b16 %v1734, %v1730
  %v1883 = vpack.c.b16 %v1735, %v1731
  %v1884 = vpack.c.b16 %v1740, %v1736
  %v1885 = vpack.c.b16 %v1741, %v1737
  %v1886 = vpack.c.b16 %v1742, %v1738
  %v1887 = vpack.c.b16 %v1743, %v1739
  %v1888 = vpack.c.b16 %v1748, %v1744
  %v1889 = vpack.c.b16 %v1749, %v1745
  %v1890 = vpack.c.b16 %v1750, %v1746
  %v1891 = vpack.c.b16 %v1751, %v1747
  %v1892 = vpack.c.b16 %v1756, %v1752
  %v1893 = vpack.c.b16 %v1757, %v1753
  %v1894 = vpack.c.b16 %v1758, %v1754
  %v1895 = vpack.c.b16 %v1759, %v1755
  %v1896 = vpack.c.b16 %v1764, %v1760
  %v1897 = vpack.c.b16 %v1765, %v1761
  %v1898 = vpack.c.b16 %v1766, %v1762
  %v1899 = vpack.c.b16 %v1767, %v1763
  %v1900 = vpack.c.b16 %v1772, %v1768
  %v1901 = vpack.c.b16 %v1773, %v1769
  %v1902 = vpack.c.b16 %v1774, %v1770
  %v1903 = vpack.c.b16 %v1775, %v1771
  %2032 = vmatprep.subr.bf16.mxu0 %v1777
  %2033 = vmatpush1.bf16.msra.mxu0 %v1776
  %2034 = vmatprep.subr.bf16.mxu0 %v1781
  %2035 = vmatpush1.bf16.msra.mxu0 %v1780
  %2036 = vmatprep.subr.bf16.mxu0 %v1785
  %2037 = vmatpush1.bf16.msra.mxu0 %v1784
  %2038 = vmatprep.subr.bf16.mxu0 %v1789
  %2039 = vmatpush1.bf16.msra.mxu0 %v1788
  %2040 = vmatprep.subr.bf16.mxu0 %v1793
  %2041 = vmatpush1.bf16.msra.mxu0 %v1792
  %2042 = vmatprep.subr.bf16.mxu0 %v1797
  %2043 = vmatpush1.bf16.msra.mxu0 %v1796
  %2044 = vmatprep.subr.bf16.mxu0 %v1801
  %2045 = vmatpush1.bf16.msra.mxu0 %v1800
  %2046 = vmatprep.subr.bf16.mxu0 %v1805
  %2047 = vmatpush1.bf16.msra.mxu0 %v1804
  %2048 = vmatprep.subr.bf16.mxu0 %v1809
  %2049 = vmatpush1.bf16.msra.mxu0 %v1808
  %2050 = vmatprep.subr.bf16.mxu0 %v1813
  %2051 = vmatpush1.bf16.msra.mxu0 %v1812
  %2052 = vmatprep.subr.bf16.mxu0 %v1817
  %2053 = vmatpush1.bf16.msra.mxu0 %v1816
  %2054 = vmatprep.subr.bf16.mxu0 %v1821
  %2055 = vmatpush1.bf16.msra.mxu0 %v1820
  %2056 = vmatprep.subr.bf16.mxu0 %v1825
  %2057 = vmatpush1.bf16.msra.mxu0 %v1824
  %2058 = vmatprep.subr.bf16.mxu0 %v1829
  %2059 = vmatpush1.bf16.msra.mxu0 %v1828
  %2060 = vmatprep.subr.bf16.mxu0 %v1833
  %2061 = vmatpush1.bf16.msra.mxu0 %v1832
  %2062 = vmatprep.subr.bf16.mxu0 %v1837
  %2063 = vmatpush1.bf16.msra.mxu0 %v1836
  %2064 = vmatprep.mubr.bf16.mxu0 %v381
  %2065 = vmatmul.mubr.bf16.gmra.mrb[0].mxu0 %v380
  %v2066 = vpop.f32.mrb[0].mxu0
  %v2067 = vadd.f32 %v1268, %v2066
  %v2068 = vpop.f32.mrb[0].mxu0
  %v2069 = vadd.f32 %v1270, %v2068
  %v2070 = vpop.f32.mrb[0].mxu0
  %v2071 = vadd.f32 %v1272, %v2070
  %v2072 = vpop.f32.mrb[0].mxu0
  %v2073 = vadd.f32 %v1274, %v2072
  %2074 = vmatprep.mubr.bf16.mxu0 %v385
  %2075 = vmatmul.mubr.bf16.gmra.mrb[0].mxu0 %v384
  %v2076 = vpop.f32.mrb[0].mxu0
  %v2077 = vadd.f32 %v1278, %v2076
  %v2078 = vpop.f32.mrb[0].mxu0
  %v2079 = vadd.f32 %v1280, %v2078
  %v2080 = vpop.f32.mrb[0].mxu0
  %v2081 = vadd.f32 %v1282, %v2080
  %v2082 = vpop.f32.mrb[0].mxu0
  %v2083 = vadd.f32 %v1284, %v2082
  %2084 = vdwg.mxu0
  %2085 = vmatprep.subr.bf16.mxu0 %v1841
  %2086 = vmatpush1.bf16.msra.mxu0 %v1840
  %2087 = vmatprep.subr.bf16.mxu0 %v1845
  %2088 = vmatpush1.bf16.msra.mxu0 %v1844
  %2089 = vmatprep.subr.bf16.mxu0 %v1849
  %2090 = vmatpush1.bf16.msra.mxu0 %v1848
  %2091 = vmatprep.subr.bf16.mxu0 %v1853
  %2092 = vmatpush1.bf16.msra.mxu0 %v1852
  %2093 = vmatprep.subr.bf16.mxu0 %v1857
  %2094 = vmatpush1.bf16.msra.mxu0 %v1856
  %2095 = vmatprep.subr.bf16.mxu0 %v1861
  %2096 = vmatpush1.bf16.msra.mxu0 %v1860
  %2097 = vmatprep.subr.bf16.mxu0 %v1865
  %2098 = vmatpush1.bf16.msra.mxu0 %v1864
  %2099 = vmatprep.subr.bf16.mxu0 %v1869
  %2100 = vmatpush1.bf16.msra.mxu0 %v1868
  %2101 = vmatprep.subr.bf16.mxu0 %v1873
  %2102 = vmatpush1.bf16.msra.mxu0 %v1872
  %2103 = vmatprep.subr.bf16.mxu0 %v1877
  %2104 = vmatpush1.bf16.msra.mxu0 %v1876
  %2105 = vmatprep.subr.bf16.mxu0 %v1881
  %2106 = vmatpush1.bf16.msra.mxu0 %v1880
  %2107 = vmatprep.subr.bf16.mxu0 %v1885
  %2108 = vmatpush1.bf16.msra.mxu0 %v1884
  %2109 = vmatprep.subr.bf16.mxu0 %v1889
  %2110 = vmatpush1.bf16.msra.mxu0 %v1888
  %2111 = vmatprep.subr.bf16.mxu0 %v1893
  %2112 = vmatpush1.bf16.msra.mxu0 %v1892
  %2113 = vmatprep.subr.bf16.mxu0 %v1897
  %2114 = vmatpush1.bf16.msra.mxu0 %v1896
  %2115 = vmatprep.subr.bf16.mxu0 %v1901
  %2116 = vmatpush1.bf16.msra.mxu0 %v1900
  %2117 = vmatprep.mubr.bf16.mxu0 %v383
  %2118 = vmatmul.mubr.bf16.gmra.mrb[0].mxu0 %v382
  %v2119 = vpop.f32.mrb[0].mxu0
  %v2120 = vadd.f32 %v2067, %v2119
  %v2121 = vpop.f32.mrb[0].mxu0
  %v2122 = vadd.f32 %v2069, %v2121
  %v2123 = vpop.f32.mrb[0].mxu0
  %v2124 = vadd.f32 %v2071, %v2123
  %v2125 = vpop.f32.mrb[0].mxu0
  %v2126 = vadd.f32 %v2073, %v2125
  %2127 = vmatprep.mubr.bf16.mxu0 %v387
  %2128 = vmatmul.mubr.bf16.gmra.mrb[0].mxu0 %v386
  %v2129 = vpop.f32.mrb[0].mxu0
  %v2130 = vadd.f32 %v2077, %v2129
  %v2131 = vpop.f32.mrb[0].mxu0
  %v2132 = vadd.f32 %v2079, %v2131
  %v2133 = vpop.f32.mrb[0].mxu0
  %v2134 = vadd.f32 %v2081, %v2133
  %v2135 = vpop.f32.mrb[0].mxu0
  %v2136 = vadd.f32 %v2083, %v2135
  %2137 = vdwg.mxu0
  %2138 = vmatprep.subr.bf16.mxu0 %v1779
  %2139 = vmatpush1.bf16.msra.mxu0 %v1778
  %2140 = vmatprep.subr.bf16.mxu0 %v1783
  %2141 = vmatpush1.bf16.msra.mxu0 %v1782
  %2142 = vmatprep.subr.bf16.mxu0 %v1787
  %2143 = vmatpush1.bf16.msra.mxu0 %v1786
  %2144 = vmatprep.subr.bf16.mxu0 %v1791
  %2145 = vmatpush1.bf16.msra.mxu0 %v1790
  %2146 = vmatprep.subr.bf16.mxu0 %v1795
  %2147 = vmatpush1.bf16.msra.mxu0 %v1794
  %2148 = vmatprep.subr.bf16.mxu0 %v1799
  %2149 = vmatpush1.bf16.msra.mxu0 %v1798
  %2150 = vmatprep.subr.bf16.mxu0 %v1803
  %2151 = vmatpush1.bf16.msra.mxu0 %v1802
  %2152 = vmatprep.subr.bf16.mxu0 %v1807
  %2153 = vmatpush1.bf16.msra.mxu0 %v1806
  %2154 = vmatprep.subr.bf16.mxu0 %v1811
  %2155 = vmatpush1.bf16.msra.mxu0 %v1810
  %2156 = vmatprep.subr.bf16.mxu0 %v1815
  %2157 = vmatpush1.bf16.msra.mxu0 %v1814
  %2158 = vmatprep.subr.bf16.mxu0 %v1819
  %2159 = vmatpush1.bf16.msra.mxu0 %v1818
  %2160 = vmatprep.subr.bf16.mxu0 %v1823
  %2161 = vmatpush1.bf16.msra.mxu0 %v1822
  %2162 = vmatprep.subr.bf16.mxu0 %v1827
  %2163 = vmatpush1.bf16.msra.mxu0 %v1826
  %2164 = vmatprep.subr.bf16.mxu0 %v1831
  %2165 = vmatpush1.bf16.msra.mxu0 %v1830
  %2166 = vmatprep.subr.bf16.mxu0 %v1835
  %2167 = vmatpush1.bf16.msra.mxu0 %v1834
  %2168 = vmatprep.subr.bf16.mxu0 %v1839
  %2169 = vmatpush1.bf16.msra.mxu0 %v1838
  %2170 = vmatprep.mubr.bf16.mxu0 %v381
  %2171 = vmatmul.mubr.bf16.gmra.mrb[0].mxu0 %v380
  %v2172 = vpop.f32.mrb[0].mxu0
  %v2173 = vadd.f32 %v1374, %v2172
  %v2174 = vpop.f32.mrb[0].mxu0
  %v2175 = vadd.f32 %v1376, %v2174
  %v2176 = vpop.f32.mrb[0].mxu0
  %v2177 = vadd.f32 %v1378, %v2176
  %v2178 = vpop.f32.mrb[0].mxu0
  %v2179 = vadd.f32 %v1380, %v2178
  %2180 = vmatprep.mubr.bf16.mxu0 %v385
  %2181 = vmatmul.mubr.bf16.gmra.mrb[0].mxu0 %v384
  %v2182 = vpop.f32.mrb[0].mxu0
  %v2183 = vadd.f32 %v1384, %v2182
  %v2184 = vpop.f32.mrb[0].mxu0
  %v2185 = vadd.f32 %v1386, %v2184
  %v2186 = vpop.f32.mrb[0].mxu0
  %v2187 = vadd.f32 %v1388, %v2186
  %v2188 = vpop.f32.mrb[0].mxu0
  %v2189 = vadd.f32 %v1390, %v2188
  %2190 = vdwg.mxu0
  %2191 = vmatprep.subr.bf16.mxu0 %v1843
  %2192 = vmatpush1.bf16.msra.mxu0 %v1842
  %2193 = vmatprep.subr.bf16.mxu0 %v1847
  %2194 = vmatpush1.bf16.msra.mxu0 %v1846
  %2195 = vmatprep.subr.bf16.mxu0 %v1851
  %2196 = vmatpush1.bf16.msra.mxu0 %v1850
  %2197 = vmatprep.subr.bf16.mxu0 %v1855
  %2198 = vmatpush1.bf16.msra.mxu0 %v1854
  %2199 = vmatprep.subr.bf16.mxu0 %v1859
  %2200 = vmatpush1.bf16.msra.mxu0 %v1858
  %2201 = vmatprep.subr.bf16.mxu0 %v1863
  %2202 = vmatpush1.bf16.msra.mxu0 %v1862
  %2203 = vmatprep.subr.bf16.mxu0 %v1867
  %2204 = vmatpush1.bf16.msra.mxu0 %v1866
  %2205 = vmatprep.subr.bf16.mxu0 %v1871
  %2206 = vmatpush1.bf16.msra.mxu0 %v1870
  %2207 = vmatprep.subr.bf16.mxu0 %v1875
  %2208 = vmatpush1.bf16.msra.mxu0 %v1874
  %2209 = vmatprep.subr.bf16.mxu0 %v1879
  %2210 = vmatpush1.bf16.msra.mxu0 %v1878
  %2211 = vmatprep.subr.bf16.mxu0 %v1883
  %2212 = vmatpush1.bf16.msra.mxu0 %v1882
  %2213 = vmatprep.subr.bf16.mxu0 %v1887
  %2214 = vmatpush1.bf16.msra.mxu0 %v1886
  %2215 = vmatprep.subr.bf16.mxu0 %v1891
  %2216 = vmatpush1.bf16.msra.mxu0 %v1890
  %2217 = vmatprep.subr.bf16.mxu0 %v1895
  %2218 = vmatpush1.bf16.msra.mxu0 %v1894
  %2219 = vmatprep.subr.bf16.mxu0 %v1899
  %2220 = vmatpush1.bf16.msra.mxu0 %v1898
  %2221 = vmatprep.subr.bf16.mxu0 %v1903
  %2222 = vmatpush1.bf16.msra.mxu0 %v1902
  %2223 = vmatprep.mubr.bf16.mxu0 %v383
  %2224 = vmatmul.mubr.bf16.gmra.mrb[0].mxu0 %v382
  %v2225 = vpop.f32.mrb[0].mxu0
  %v2226 = vadd.f32 %v2173, %v2225
  %v2227 = vpop.f32.mrb[0].mxu0
  %v2228 = vadd.f32 %v2175, %v2227
  %v2229 = vpop.f32.mrb[0].mxu0
  %v2230 = vadd.f32 %v2177, %v2229
  %v2231 = vpop.f32.mrb[0].mxu0
  %v2232 = vadd.f32 %v2179, %v2231
  %2233 = vmatprep.mubr.bf16.mxu0 %v387
  %2234 = vmatmul.mubr.bf16.gmra.mrb[0].mxu0 %v386
  %v2235 = vpop.f32.mrb[0].mxu0
  %v2236 = vadd.f32 %v2183, %v2235
  %v2237 = vpop.f32.mrb[0].mxu0
  %v2238 = vadd.f32 %v2185, %v2237
  %v2239 = vpop.f32.mrb[0].mxu0
  %v2240 = vadd.f32 %v2187, %v2239
  %v2241 = vpop.f32.mrb[0].mxu0
  %v2242 = vadd.f32 %v2189, %v2241
  %2243 = vdwg.mxu0
  %v2244 = vld [vmem:[#allocation2] sm:$0xfc]
  %v2245 = vld [vmem:[#allocation2 + $0x8] sm:$0xfc]
  %v2246 = vld [vmem:[#allocation2 + $0x10] sm:$0xfc]
  %v2247 = vld [vmem:[#allocation2 + $0x18] sm:$0xfc]
  %v2248 = vld [vmem:[#allocation2 + $0x40] sm:$0x3]
  %v2249 = vld [vmem:[#allocation2 + $0x48] sm:$0x3]
  %v2250 = vld [vmem:[#allocation2 + $0x50] sm:$0x3]
  %v2251 = vld [vmem:[#allocation2 + $0x58] sm:$0x3]
  %v2252 = vld [vmem:[#allocation2 + $0x60] sm:$0xfc]
  %v2253 = vld [vmem:[#allocation2 + $0x68] sm:$0xfc]
  %v2254 = vld [vmem:[#allocation2 + $0x70] sm:$0xfc]
  %v2255 = vld [vmem:[#allocation2 + $0x78] sm:$0xfc]
  %v2256 = vld [vmem:[#allocation2 + $0xa0] sm:$0x3]
  %v2257 = vld [vmem:[#allocation2 + $0xa8] sm:$0x3]
  %v2258 = vld [vmem:[#allocation2 + $0xb0] sm:$0x3]
  %v2259 = vld [vmem:[#allocation2 + $0xb8] sm:$0x3]
  %vm2276 = vcmask 1045504
  %v2277 = vrot.slane %v2244, 2
  %v2278 = vrot.slane %v150, 2
  %v2279 = vsel %vm2276, %v2277, %v2278
  %v2280 = vrot.slane %v2245, 2
  %v2281 = vrot.slane %v151, 2
  %v2282 = vsel %vm2276, %v2280, %v2281
  %v2283 = vrot.slane %v2246, 2
  %v2284 = vrot.slane %v152, 2
  %v2285 = vsel %vm2276, %v2283, %v2284
  %v2286 = vrot.slane %v2247, 2
  %v2287 = vrot.slane %v153, 2
  %v2288 = vsel %vm2276, %v2286, %v2287
  %v2289 = vrot.slane %v2248, 2
  %v2290 = vsel %vm2276, %v2278, %v2289
  %v2291 = vrot.slane %v2249, 2
  %v2292 = vsel %vm2276, %v2281, %v2291
  %v2293 = vrot.slane %v2250, 2
  %v2294 = vsel %vm2276, %v2284, %v2293
  %v2295 = vrot.slane %v2251, 2
  %v2296 = vsel %vm2276, %v2287, %v2295
  %v2297 = vrot.slane %v2252, 2
  %v2298 = vrot.slane %v162, 2
  %v2299 = vsel %vm2276, %v2297, %v2298
  %v2300 = vrot.slane %v2253, 2
  %v2301 = vrot.slane %v163, 2
  %v2302 = vsel %vm2276, %v2300, %v2301
  %v2303 = vrot.slane %v2254, 2
  %v2304 = vrot.slane %v164, 2
  %v2305 = vsel %vm2276, %v2303, %v2304
  %v2306 = vrot.slane %v2255, 2
  %v2307 = vrot.slane %v165, 2
  %v2308 = vsel %vm2276, %v2306, %v2307
  %v2309 = vrot.slane %v2256, 2
  %v2310 = vsel %vm2276, %v2298, %v2309
  %v2311 = vrot.slane %v2257, 2
  %v2312 = vsel %vm2276, %v2301, %v2311
  %v2313 = vrot.slane %v2258, 2
  %v2314 = vsel %vm2276, %v2304, %v2313
  %v2315 = vrot.slane %v2259, 2
  %v2316 = vsel %vm2276, %v2307, %v2315
  %s2333 = scalar_lea.vmem %s1, 2048
  %v2334 = vld [vmem:[%s2333] sm:$0xff]
  %v2335 = vld [vmem:[%s2333 + $0x8] sm:$0xff]
  %v2336 = vld [vmem:[%s2333 + $0x10] sm:$0xff]
  %v2337 = vld [vmem:[%s2333 + $0x18] sm:$0xff]
  %v2338 = vld [vmem:[%s2333 + $0x20] sm:$0xff]
  %v2339 = vld [vmem:[%s2333 + $0x28] sm:$0xff]
  %v2340 = vld [vmem:[%s2333 + $0x30] sm:$0xff]
  %v2341 = vld [vmem:[%s2333 + $0x38] sm:$0xff]
  %v2342 = vld [vmem:[%s2333 + $0x40] sm:$0xff]
  %v2343 = vld [vmem:[%s2333 + $0x48] sm:$0xff]
  %v2344 = vld [vmem:[%s2333 + $0x50] sm:$0xff]
  %v2345 = vld [vmem:[%s2333 + $0x58] sm:$0xff]
  %v2346 = vld [vmem:[%s2333 + $0x60] sm:$0xff]
  %v2347 = vld [vmem:[%s2333 + $0x68] sm:$0xff]
  %v2348 = vld [vmem:[%s2333 + $0x70] sm:$0xff]
  %v2349 = vld [vmem:[%s2333 + $0x78] sm:$0xff]
  %v2350 = vld [vmem:[%s2333 + $0x80] sm:$0xff]
  %v2351 = vld [vmem:[%s2333 + $0x88] sm:$0xff]
  %v2352 = vld [vmem:[%s2333 + $0x90] sm:$0xff]
  %v2353 = vld [vmem:[%s2333 + $0x98] sm:$0xff]
  %v2354 = vld [vmem:[%s2333 + $0xa0] sm:$0xff]
  %v2355 = vld [vmem:[%s2333 + $0xa8] sm:$0xff]
  %v2356 = vld [vmem:[%s2333 + $0xb0] sm:$0xff]
  %v2357 = vld [vmem:[%s2333 + $0xb8] sm:$0xff]
  %v2358 = vld [vmem:[%s2333 + $0xc0] sm:$0xff]
  %v2359 = vld [vmem:[%s2333 + $0xc8] sm:$0xff]
  %v2360 = vld [vmem:[%s2333 + $0xd0] sm:$0xff]
  %v2361 = vld [vmem:[%s2333 + $0xd8] sm:$0xff]
  %v2362 = vld [vmem:[%s2333 + $0xe0] sm:$0xff]
  %v2363 = vld [vmem:[%s2333 + $0xe8] sm:$0xff]
  %v2364 = vld [vmem:[%s2333 + $0xf0] sm:$0xff]
  %v2365 = vld [vmem:[%s2333 + $0xf8] sm:$0xff]
  %v2366 = vld [vmem:[%s2333 + $0x100] sm:$0xff]
  %v2367 = vld [vmem:[%s2333 + $0x108] sm:$0xff]
  %v2368 = vld [vmem:[%s2333 + $0x110] sm:$0xff]
  %v2369 = vld [vmem:[%s2333 + $0x118] sm:$0xff]
  %v2370 = vld [vmem:[%s2333 + $0x120] sm:$0xff]
  %v2371 = vld [vmem:[%s2333 + $0x128] sm:$0xff]
  %v2372 = vld [vmem:[%s2333 + $0x130] sm:$0xff]
  %v2373 = vld [vmem:[%s2333 + $0x138] sm:$0xff]
  %v2374 = vld [vmem:[%s2333 + $0x140] sm:$0xff]
  %v2375 = vld [vmem:[%s2333 + $0x148] sm:$0xff]
  %v2376 = vld [vmem:[%s2333 + $0x150] sm:$0xff]
  %v2377 = vld [vmem:[%s2333 + $0x158] sm:$0xff]
  %v2378 = vld [vmem:[%s2333 + $0x160] sm:$0xff]
  %v2379 = vld [vmem:[%s2333 + $0x168] sm:$0xff]
  %v2380 = vld [vmem:[%s2333 + $0x170] sm:$0xff]
  %v2381 = vld [vmem:[%s2333 + $0x178] sm:$0xff]
  %v2382 = vld [vmem:[%s2333 + $0x180] sm:$0xff]
  %v2383 = vld [vmem:[%s2333 + $0x188] sm:$0xff]
  %v2384 = vld [vmem:[%s2333 + $0x190] sm:$0xff]
  %v2385 = vld [vmem:[%s2333 + $0x198] sm:$0xff]
  %v2386 = vld [vmem:[%s2333 + $0x1a0] sm:$0xff]
  %v2387 = vld [vmem:[%s2333 + $0x1a8] sm:$0xff]
  %v2388 = vld [vmem:[%s2333 + $0x1b0] sm:$0xff]
  %v2389 = vld [vmem:[%s2333 + $0x1b8] sm:$0xff]
  %v2390 = vld [vmem:[%s2333 + $0x1c0] sm:$0xff]
  %v2391 = vld [vmem:[%s2333 + $0x1c8] sm:$0xff]
  %v2392 = vld [vmem:[%s2333 + $0x1d0] sm:$0xff]
  %v2393 = vld [vmem:[%s2333 + $0x1d8] sm:$0xff]
  %v2394 = vld [vmem:[%s2333 + $0x1e0] sm:$0xff]
  %v2395 = vld [vmem:[%s2333 + $0x1e8] sm:$0xff]
  %v2396 = vld [vmem:[%s2333 + $0x1f0] sm:$0xff]
  %v2397 = vld [vmem:[%s2333 + $0x1f8] sm:$0xff]
  %v2398 = vld [vmem:[%s2333 + $0x200] sm:$0xff]
  %v2399 = vld [vmem:[%s2333 + $0x208] sm:$0xff]
  %v2400 = vld [vmem:[%s2333 + $0x210] sm:$0xff]
  %v2401 = vld [vmem:[%s2333 + $0x218] sm:$0xff]
  %v2402 = vld [vmem:[%s2333 + $0x220] sm:$0xff]
  %v2403 = vld [vmem:[%s2333 + $0x228] sm:$0xff]
  %v2404 = vld [vmem:[%s2333 + $0x230] sm:$0xff]
  %v2405 = vld [vmem:[%s2333 + $0x238] sm:$0xff]
  %v2406 = vld [vmem:[%s2333 + $0x240] sm:$0xff]
  %v2407 = vld [vmem:[%s2333 + $0x248] sm:$0xff]
  %v2408 = vld [vmem:[%s2333 + $0x250] sm:$0xff]
  %v2409 = vld [vmem:[%s2333 + $0x258] sm:$0xff]
  %v2410 = vld [vmem:[%s2333 + $0x260] sm:$0xff]
  %v2411 = vld [vmem:[%s2333 + $0x268] sm:$0xff]
  %v2412 = vld [vmem:[%s2333 + $0x270] sm:$0xff]
  %v2413 = vld [vmem:[%s2333 + $0x278] sm:$0xff]
  %v2414 = vld [vmem:[%s2333 + $0x280] sm:$0xff]
  %v2415 = vld [vmem:[%s2333 + $0x288] sm:$0xff]
  %v2416 = vld [vmem:[%s2333 + $0x290] sm:$0xff]
  %v2417 = vld [vmem:[%s2333 + $0x298] sm:$0xff]
  %v2418 = vld [vmem:[%s2333 + $0x2a0] sm:$0xff]
  %v2419 = vld [vmem:[%s2333 + $0x2a8] sm:$0xff]
  %v2420 = vld [vmem:[%s2333 + $0x2b0] sm:$0xff]
  %v2421 = vld [vmem:[%s2333 + $0x2b8] sm:$0xff]
  %v2422 = vld [vmem:[%s2333 + $0x2c0] sm:$0xff]
  %v2423 = vld [vmem:[%s2333 + $0x2c8] sm:$0xff]
  %v2424 = vld [vmem:[%s2333 + $0x2d0] sm:$0xff]
  %v2425 = vld [vmem:[%s2333 + $0x2d8] sm:$0xff]
  %v2426 = vld [vmem:[%s2333 + $0x2e0] sm:$0xff]
  %v2427 = vld [vmem:[%s2333 + $0x2e8] sm:$0xff]
  %v2428 = vld [vmem:[%s2333 + $0x2f0] sm:$0xff]
  %v2429 = vld [vmem:[%s2333 + $0x2f8] sm:$0xff]
  %v2430 = vld [vmem:[%s2333 + $0x300] sm:$0xff]
  %v2431 = vld [vmem:[%s2333 + $0x308] sm:$0xff]
  %v2432 = vld [vmem:[%s2333 + $0x310] sm:$0xff]
  %v2433 = vld [vmem:[%s2333 + $0x318] sm:$0xff]
  %v2434 = vld [vmem:[%s2333 + $0x320] sm:$0xff]
  %v2435 = vld [vmem:[%s2333 + $0x328] sm:$0xff]
  %v2436 = vld [vmem:[%s2333 + $0x330] sm:$0xff]
  %v2437 = vld [vmem:[%s2333 + $0x338] sm:$0xff]
  %v2438 = vld [vmem:[%s2333 + $0x340] sm:$0xff]
  %v2439 = vld [vmem:[%s2333 + $0x348] sm:$0xff]
  %v2440 = vld [vmem:[%s2333 + $0x350] sm:$0xff]
  %v2441 = vld [vmem:[%s2333 + $0x358] sm:$0xff]
  %v2442 = vld [vmem:[%s2333 + $0x360] sm:$0xff]
  %v2443 = vld [vmem:[%s2333 + $0x368] sm:$0xff]
  %v2444 = vld [vmem:[%s2333 + $0x370] sm:$0xff]
  %v2445 = vld [vmem:[%s2333 + $0x378] sm:$0xff]
  %v2446 = vld [vmem:[%s2333 + $0x380] sm:$0xff]
  %v2447 = vld [vmem:[%s2333 + $0x388] sm:$0xff]
  %v2448 = vld [vmem:[%s2333 + $0x390] sm:$0xff]
  %v2449 = vld [vmem:[%s2333 + $0x398] sm:$0xff]
  %v2450 = vld [vmem:[%s2333 + $0x3a0] sm:$0xff]
  %v2451 = vld [vmem:[%s2333 + $0x3a8] sm:$0xff]
  %v2452 = vld [vmem:[%s2333 + $0x3b0] sm:$0xff]
  %v2453 = vld [vmem:[%s2333 + $0x3b8] sm:$0xff]
  %v2454 = vld [vmem:[%s2333 + $0x3c0] sm:$0xff]
  %v2455 = vld [vmem:[%s2333 + $0x3c8] sm:$0xff]
  %v2456 = vld [vmem:[%s2333 + $0x3d0] sm:$0xff]
  %v2457 = vld [vmem:[%s2333 + $0x3d8] sm:$0xff]
  %v2458 = vld [vmem:[%s2333 + $0x3e0] sm:$0xff]
  %v2459 = vld [vmem:[%s2333 + $0x3e8] sm:$0xff]
  %v2460 = vld [vmem:[%s2333 + $0x3f0] sm:$0xff]
  %v2461 = vld [vmem:[%s2333 + $0x3f8] sm:$0xff]
  %v2462 = vpack.c.bf16 %v2290, %v2279
  %v2463 = vpack.c.bf16 %v2292, %v2282
  %v2464 = vpack.c.bf16 %v2294, %v2285
  %v2465 = vpack.c.bf16 %v2296, %v2288
  %v2466 = vpack.c.bf16 %v2310, %v2299
  %v2467 = vpack.c.bf16 %v2312, %v2302
  %v2468 = vpack.c.bf16 %v2314, %v2305
  %v2469 = vpack.c.bf16 %v2316, %v2308
  %v2598 = vunpack.c.l.b16 %v2334
  %v2599 = vunpack.c.h.b16 %v2334
  %v2600 = vunpack.c.l.b16 %v2335
  %v2601 = vunpack.c.h.b16 %v2335
  %v2602 = vunpack.c.l.b16 %v2336
  %v2603 = vunpack.c.h.b16 %v2336
  %v2604 = vunpack.c.l.b16 %v2337
  %v2605 = vunpack.c.h.b16 %v2337
  %v2606 = vunpack.c.l.b16 %v2338
  %v2607 = vunpack.c.h.b16 %v2338
  %v2608 = vunpack.c.l.b16 %v2339
  %v2609 = vunpack.c.h.b16 %v2339
  %v2610 = vunpack.c.l.b16 %v2340
  %v2611 = vunpack.c.h.b16 %v2340
  %v2612 = vunpack.c.l.b16 %v2341
  %v2613 = vunpack.c.h.b16 %v2341
  %v2614 = vunpack.c.l.b16 %v2342
  %v2615 = vunpack.c.h.b16 %v2342
  %v2616 = vunpack.c.l.b16 %v2343
  %v2617 = vunpack.c.h.b16 %v2343
  %v2618 = vunpack.c.l.b16 %v2344
  %v2619 = vunpack.c.h.b16 %v2344
  %v2620 = vunpack.c.l.b16 %v2345
  %v2621 = vunpack.c.h.b16 %v2345
  %v2622 = vunpack.c.l.b16 %v2346
  %v2623 = vunpack.c.h.b16 %v2346
  %v2624 = vunpack.c.l.b16 %v2347
  %v2625 = vunpack.c.h.b16 %v2347
  %v2626 = vunpack.c.l.b16 %v2348
  %v2627 = vunpack.c.h.b16 %v2348
  %v2628 = vunpack.c.l.b16 %v2349
  %v2629 = vunpack.c.h.b16 %v2349
  %v2630 = vunpack.c.l.b16 %v2350
  %v2631 = vunpack.c.h.b16 %v2350
  %v2632 = vunpack.c.l.b16 %v2351
  %v2633 = vunpack.c.h.b16 %v2351
  %v2634 = vunpack.c.l.b16 %v2352
  %v2635 = vunpack.c.h.b16 %v2352
  %v2636 = vunpack.c.l.b16 %v2353
  %v2637 = vunpack.c.h.b16 %v2353
  %v2638 = vunpack.c.l.b16 %v2354
  %v2639 = vunpack.c.h.b16 %v2354
  %v2640 = vunpack.c.l.b16 %v2355
  %v2641 = vunpack.c.h.b16 %v2355
  %v2642 = vunpack.c.l.b16 %v2356
  %v2643 = vunpack.c.h.b16 %v2356
  %v2644 = vunpack.c.l.b16 %v2357
  %v2645 = vunpack.c.h.b16 %v2357
  %v2646 = vunpack.c.l.b16 %v2358
  %v2647 = vunpack.c.h.b16 %v2358
  %v2648 = vunpack.c.l.b16 %v2359
  %v2649 = vunpack.c.h.b16 %v2359
  %v2650 = vunpack.c.l.b16 %v2360
  %v2651 = vunpack.c.h.b16 %v2360
  %v2652 = vunpack.c.l.b16 %v2361
  %v2653 = vunpack.c.h.b16 %v2361
  %v2654 = vunpack.c.l.b16 %v2362
  %v2655 = vunpack.c.h.b16 %v2362
  %v2656 = vunpack.c.l.b16 %v2363
  %v2657 = vunpack.c.h.b16 %v2363
  %v2658 = vunpack.c.l.b16 %v2364
  %v2659 = vunpack.c.h.b16 %v2364
  %v2660 = vunpack.c.l.b16 %v2365
  %v2661 = vunpack.c.h.b16 %v2365
  %v2662 = vunpack.c.l.b16 %v2366
  %v2663 = vunpack.c.h.b16 %v2366
  %v2664 = vunpack.c.l.b16 %v2367
  %v2665 = vunpack.c.h.b16 %v2367
  %v2666 = vunpack.c.l.b16 %v2368
  %v2667 = vunpack.c.h.b16 %v2368
  %v2668 = vunpack.c.l.b16 %v2369
  %v2669 = vunpack.c.h.b16 %v2369
  %v2670 = vunpack.c.l.b16 %v2370
  %v2671 = vunpack.c.h.b16 %v2370
  %v2672 = vunpack.c.l.b16 %v2371
  %v2673 = vunpack.c.h.b16 %v2371
  %v2674 = vunpack.c.l.b16 %v2372
  %v2675 = vunpack.c.h.b16 %v2372
  %v2676 = vunpack.c.l.b16 %v2373
  %v2677 = vunpack.c.h.b16 %v2373
  %v2678 = vunpack.c.l.b16 %v2374
  %v2679 = vunpack.c.h.b16 %v2374
  %v2680 = vunpack.c.l.b16 %v2375
  %v2681 = vunpack.c.h.b16 %v2375
  %v2682 = vunpack.c.l.b16 %v2376
  %v2683 = vunpack.c.h.b16 %v2376
  %v2684 = vunpack.c.l.b16 %v2377
  %v2685 = vunpack.c.h.b16 %v2377
  %v2686 = vunpack.c.l.b16 %v2378
  %v2687 = vunpack.c.h.b16 %v2378
  %v2688 = vunpack.c.l.b16 %v2379
  %v2689 = vunpack.c.h.b16 %v2379
  %v2690 = vunpack.c.l.b16 %v2380
  %v2691 = vunpack.c.h.b16 %v2380
  %v2692 = vunpack.c.l.b16 %v2381
  %v2693 = vunpack.c.h.b16 %v2381
  %v2694 = vunpack.c.l.b16 %v2382
  %v2695 = vunpack.c.h.b16 %v2382
  %v2696 = vunpack.c.l.b16 %v2383
  %v2697 = vunpack.c.h.b16 %v2383
  %v2698 = vunpack.c.l.b16 %v2384
  %v2699 = vunpack.c.h.b16 %v2384
  %v2700 = vunpack.c.l.b16 %v2385
  %v2701 = vunpack.c.h.b16 %v2385
  %v2702 = vunpack.c.l.b16 %v2386
  %v2703 = vunpack.c.h.b16 %v2386
  %v2704 = vunpack.c.l.b16 %v2387
  %v2705 = vunpack.c.h.b16 %v2387
  %v2706 = vunpack.c.l.b16 %v2388
  %v2707 = vunpack.c.h.b16 %v2388
  %v2708 = vunpack.c.l.b16 %v2389
  %v2709 = vunpack.c.h.b16 %v2389
  %v2710 = vunpack.c.l.b16 %v2390
  %v2711 = vunpack.c.h.b16 %v2390
  %v2712 = vunpack.c.l.b16 %v2391
  %v2713 = vunpack.c.h.b16 %v2391
  %v2714 = vunpack.c.l.b16 %v2392
  %v2715 = vunpack.c.h.b16 %v2392
  %v2716 = vunpack.c.l.b16 %v2393
  %v2717 = vunpack.c.h.b16 %v2393
  %v2718 = vunpack.c.l.b16 %v2394
  %v2719 = vunpack.c.h.b16 %v2394
  %v2720 = vunpack.c.l.b16 %v2395
  %v2721 = vunpack.c.h.b16 %v2395
  %v2722 = vunpack.c.l.b16 %v2396
  %v2723 = vunpack.c.h.b16 %v2396
  %v2724 = vunpack.c.l.b16 %v2397
  %v2725 = vunpack.c.h.b16 %v2397
  %v2726 = vunpack.c.l.b16 %v2398
  %v2727 = vunpack.c.h.b16 %v2398
  %v2728 = vunpack.c.l.b16 %v2399
  %v2729 = vunpack.c.h.b16 %v2399
  %v2730 = vunpack.c.l.b16 %v2400
  %v2731 = vunpack.c.h.b16 %v2400
  %v2732 = vunpack.c.l.b16 %v2401
  %v2733 = vunpack.c.h.b16 %v2401
  %v2734 = vunpack.c.l.b16 %v2402
  %v2735 = vunpack.c.h.b16 %v2402
  %v2736 = vunpack.c.l.b16 %v2403
  %v2737 = vunpack.c.h.b16 %v2403
  %v2738 = vunpack.c.l.b16 %v2404
  %v2739 = vunpack.c.h.b16 %v2404
  %v2740 = vunpack.c.l.b16 %v2405
  %v2741 = vunpack.c.h.b16 %v2405
  %v2742 = vunpack.c.l.b16 %v2406
  %v2743 = vunpack.c.h.b16 %v2406
  %v2744 = vunpack.c.l.b16 %v2407
  %v2745 = vunpack.c.h.b16 %v2407
  %v2746 = vunpack.c.l.b16 %v2408
  %v2747 = vunpack.c.h.b16 %v2408
  %v2748 = vunpack.c.l.b16 %v2409
  %v2749 = vunpack.c.h.b16 %v2409
  %v2750 = vunpack.c.l.b16 %v2410
  %v2751 = vunpack.c.h.b16 %v2410
  %v2752 = vunpack.c.l.b16 %v2411
  %v2753 = vunpack.c.h.b16 %v2411
  %v2754 = vunpack.c.l.b16 %v2412
  %v2755 = vunpack.c.h.b16 %v2412
  %v2756 = vunpack.c.l.b16 %v2413
  %v2757 = vunpack.c.h.b16 %v2413
  %v2758 = vunpack.c.l.b16 %v2414
  %v2759 = vunpack.c.h.b16 %v2414
  %v2760 = vunpack.c.l.b16 %v2415
  %v2761 = vunpack.c.h.b16 %v2415
  %v2762 = vunpack.c.l.b16 %v2416
  %v2763 = vunpack.c.h.b16 %v2416
  %v2764 = vunpack.c.l.b16 %v2417
  %v2765 = vunpack.c.h.b16 %v2417
  %v2766 = vunpack.c.l.b16 %v2418
  %v2767 = vunpack.c.h.b16 %v2418
  %v2768 = vunpack.c.l.b16 %v2419
  %v2769 = vunpack.c.h.b16 %v2419
  %v2770 = vunpack.c.l.b16 %v2420
  %v2771 = vunpack.c.h.b16 %v2420
  %v2772 = vunpack.c.l.b16 %v2421
  %v2773 = vunpack.c.h.b16 %v2421
  %v2774 = vunpack.c.l.b16 %v2422
  %v2775 = vunpack.c.h.b16 %v2422
  %v2776 = vunpack.c.l.b16 %v2423
  %v2777 = vunpack.c.h.b16 %v2423
  %v2778 = vunpack.c.l.b16 %v2424
  %v2779 = vunpack.c.h.b16 %v2424
  %v2780 = vunpack.c.l.b16 %v2425
  %v2781 = vunpack.c.h.b16 %v2425
  %v2782 = vunpack.c.l.b16 %v2426
  %v2783 = vunpack.c.h.b16 %v2426
  %v2784 = vunpack.c.l.b16 %v2427
  %v2785 = vunpack.c.h.b16 %v2427
  %v2786 = vunpack.c.l.b16 %v2428
  %v2787 = vunpack.c.h.b16 %v2428
  %v2788 = vunpack.c.l.b16 %v2429
  %v2789 = vunpack.c.h.b16 %v2429
  %v2790 = vunpack.c.l.b16 %v2430
  %v2791 = vunpack.c.h.b16 %v2430
  %v2792 = vunpack.c.l.b16 %v2431
  %v2793 = vunpack.c.h.b16 %v2431
  %v2794 = vunpack.c.l.b16 %v2432
  %v2795 = vunpack.c.h.b16 %v2432
  %v2796 = vunpack.c.l.b16 %v2433
  %v2797 = vunpack.c.h.b16 %v2433
  %v2798 = vunpack.c.l.b16 %v2434
  %v2799 = vunpack.c.h.b16 %v2434
  %v2800 = vunpack.c.l.b16 %v2435
  %v2801 = vunpack.c.h.b16 %v2435
  %v2802 = vunpack.c.l.b16 %v2436
  %v2803 = vunpack.c.h.b16 %v2436
  %v2804 = vunpack.c.l.b16 %v2437
  %v2805 = vunpack.c.h.b16 %v2437
  %v2806 = vunpack.c.l.b16 %v2438
  %v2807 = vunpack.c.h.b16 %v2438
  %v2808 = vunpack.c.l.b16 %v2439
  %v2809 = vunpack.c.h.b16 %v2439
  %v2810 = vunpack.c.l.b16 %v2440
  %v2811 = vunpack.c.h.b16 %v2440
  %v2812 = vunpack.c.l.b16 %v2441
  %v2813 = vunpack.c.h.b16 %v2441
  %v2814 = vunpack.c.l.b16 %v2442
  %v2815 = vunpack.c.h.b16 %v2442
  %v2816 = vunpack.c.l.b16 %v2443
  %v2817 = vunpack.c.h.b16 %v2443
  %v2818 = vunpack.c.l.b16 %v2444
  %v2819 = vunpack.c.h.b16 %v2444
  %v2820 = vunpack.c.l.b16 %v2445
  %v2821 = vunpack.c.h.b16 %v2445
  %v2822 = vunpack.c.l.b16 %v2446
  %v2823 = vunpack.c.h.b16 %v2446
  %v2824 = vunpack.c.l.b16 %v2447
  %v2825 = vunpack.c.h.b16 %v2447
  %v2826 = vunpack.c.l.b16 %v2448
  %v2827 = vunpack.c.h.b16 %v2448
  %v2828 = vunpack.c.l.b16 %v2449
  %v2829 = vunpack.c.h.b16 %v2449
  %v2830 = vunpack.c.l.b16 %v2450
  %v2831 = vunpack.c.h.b16 %v2450
  %v2832 = vunpack.c.l.b16 %v2451
  %v2833 = vunpack.c.h.b16 %v2451
  %v2834 = vunpack.c.l.b16 %v2452
  %v2835 = vunpack.c.h.b16 %v2452
  %v2836 = vunpack.c.l.b16 %v2453
  %v2837 = vunpack.c.h.b16 %v2453
  %v2838 = vunpack.c.l.b16 %v2454
  %v2839 = vunpack.c.h.b16 %v2454
  %v2840 = vunpack.c.l.b16 %v2455
  %v2841 = vunpack.c.h.b16 %v2455
  %v2842 = vunpack.c.l.b16 %v2456
  %v2843 = vunpack.c.h.b16 %v2456
  %v2844 = vunpack.c.l.b16 %v2457
  %v2845 = vunpack.c.h.b16 %v2457
  %v2846 = vunpack.c.l.b16 %v2458
  %v2847 = vunpack.c.h.b16 %v2458
  %v2848 = vunpack.c.l.b16 %v2459
  %v2849 = vunpack.c.h.b16 %v2459
  %v2850 = vunpack.c.l.b16 %v2460
  %v2851 = vunpack.c.h.b16 %v2460
  %v2852 = vunpack.c.l.b16 %v2461
  %v2853 = vunpack.c.h.b16 %v2461
  %v2854 = vpack.c.b16 %v2602, %v2598
  %v2855 = vpack.c.b16 %v2603, %v2599
  %v2856 = vpack.c.b16 %v2604, %v2600
  %v2857 = vpack.c.b16 %v2605, %v2601
  %v2858 = vpack.c.b16 %v2610, %v2606
  %v2859 = vpack.c.b16 %v2611, %v2607
  %v2860 = vpack.c.b16 %v2612, %v2608
  %v2861 = vpack.c.b16 %v2613, %v2609
  %v2862 = vpack.c.b16 %v2618, %v2614
  %v2863 = vpack.c.b16 %v2619, %v2615
  %v2864 = vpack.c.b16 %v2620, %v2616
  %v2865 = vpack.c.b16 %v2621, %v2617
  %v2866 = vpack.c.b16 %v2626, %v2622
  %v2867 = vpack.c.b16 %v2627, %v2623
  %v2868 = vpack.c.b16 %v2628, %v2624
  %v2869 = vpack.c.b16 %v2629, %v2625
  %v2870 = vpack.c.b16 %v2634, %v2630
  %v2871 = vpack.c.b16 %v2635, %v2631
  %v2872 = vpack.c.b16 %v2636, %v2632
  %v2873 = vpack.c.b16 %v2637, %v2633
  %v2874 = vpack.c.b16 %v2642, %v2638
  %v2875 = vpack.c.b16 %v2643, %v2639
  %v2876 = vpack.c.b16 %v2644, %v2640
  %v2877 = vpack.c.b16 %v2645, %v2641
  %v2878 = vpack.c.b16 %v2650, %v2646
  %v2879 = vpack.c.b16 %v2651, %v2647
  %v2880 = vpack.c.b16 %v2652, %v2648
  %v2881 = vpack.c.b16 %v2653, %v2649
  %v2882 = vpack.c.b16 %v2658, %v2654
  %v2883 = vpack.c.b16 %v2659, %v2655
  %v2884 = vpack.c.b16 %v2660, %v2656
  %v2885 = vpack.c.b16 %v2661, %v2657
  %v2886 = vpack.c.b16 %v2666, %v2662
  %v2887 = vpack.c.b16 %v2667, %v2663
  %v2888 = vpack.c.b16 %v2668, %v2664
  %v2889 = vpack.c.b16 %v2669, %v2665
  %v2890 = vpack.c.b16 %v2674, %v2670
  %v2891 = vpack.c.b16 %v2675, %v2671
  %v2892 = vpack.c.b16 %v2676, %v2672
  %v2893 = vpack.c.b16 %v2677, %v2673
  %v2894 = vpack.c.b16 %v2682, %v2678
  %v2895 = vpack.c.b16 %v2683, %v2679
  %v2896 = vpack.c.b16 %v2684, %v2680
  %v2897 = vpack.c.b16 %v2685, %v2681
  %v2898 = vpack.c.b16 %v2690, %v2686
  %v2899 = vpack.c.b16 %v2691, %v2687
  %v2900 = vpack.c.b16 %v2692, %v2688
  %v2901 = vpack.c.b16 %v2693, %v2689
  %v2902 = vpack.c.b16 %v2698, %v2694
  %v2903 = vpack.c.b16 %v2699, %v2695
  %v2904 = vpack.c.b16 %v2700, %v2696
  %v2905 = vpack.c.b16 %v2701, %v2697
  %v2906 = vpack.c.b16 %v2706, %v2702
  %v2907 = vpack.c.b16 %v2707, %v2703
  %v2908 = vpack.c.b16 %v2708, %v2704
  %v2909 = vpack.c.b16 %v2709, %v2705
  %v2910 = vpack.c.b16 %v2714, %v2710
  %v2911 = vpack.c.b16 %v2715, %v2711
  %v2912 = vpack.c.b16 %v2716, %v2712
  %v2913 = vpack.c.b16 %v2717, %v2713
  %v2914 = vpack.c.b16 %v2722, %v2718
  %v2915 = vpack.c.b16 %v2723, %v2719
  %v2916 = vpack.c.b16 %v2724, %v2720
  %v2917 = vpack.c.b16 %v2725, %v2721
  %v2918 = vpack.c.b16 %v2730, %v2726
  %v2919 = vpack.c.b16 %v2731, %v2727
  %v2920 = vpack.c.b16 %v2732, %v2728
  %v2921 = vpack.c.b16 %v2733, %v2729
  %v2922 = vpack.c.b16 %v2738, %v2734
  %v2923 = vpack.c.b16 %v2739, %v2735
  %v2924 = vpack.c.b16 %v2740, %v2736
  %v2925 = vpack.c.b16 %v2741, %v2737
  %v2926 = vpack.c.b16 %v2746, %v2742
  %v2927 = vpack.c.b16 %v2747, %v2743
  %v2928 = vpack.c.b16 %v2748, %v2744
  %v2929 = vpack.c.b16 %v2749, %v2745
  %v2930 = vpack.c.b16 %v2754, %v2750
  %v2931 = vpack.c.b16 %v2755, %v2751
  %v2932 = vpack.c.b16 %v2756, %v2752
  %v2933 = vpack.c.b16 %v2757, %v2753
  %v2934 = vpack.c.b16 %v2762, %v2758
  %v2935 = vpack.c.b16 %v2763, %v2759
  %v2936 = vpack.c.b16 %v2764, %v2760
  %v2937 = vpack.c.b16 %v2765, %v2761
  %v2938 = vpack.c.b16 %v2770, %v2766
  %v2939 = vpack.c.b16 %v2771, %v2767
  %v2940 = vpack.c.b16 %v2772, %v2768
  %v2941 = vpack.c.b16 %v2773, %v2769
  %v2942 = vpack.c.b16 %v2778, %v2774
  %v2943 = vpack.c.b16 %v2779, %v2775
  %v2944 = vpack.c.b16 %v2780, %v2776
  %v2945 = vpack.c.b16 %v2781, %v2777
  %v2946 = vpack.c.b16 %v2786, %v2782
  %v2947 = vpack.c.b16 %v2787, %v2783
  %v2948 = vpack.c.b16 %v2788, %v2784
  %v2949 = vpack.c.b16 %v2789, %v2785
  %v2950 = vpack.c.b16 %v2794, %v2790
  %v2951 = vpack.c.b16 %v2795, %v2791
  %v2952 = vpack.c.b16 %v2796, %v2792
  %v2953 = vpack.c.b16 %v2797, %v2793
  %v2954 = vpack.c.b16 %v2802, %v2798
  %v2955 = vpack.c.b16 %v2803, %v2799
  %v2956 = vpack.c.b16 %v2804, %v2800
  %v2957 = vpack.c.b16 %v2805, %v2801
  %v2958 = vpack.c.b16 %v2810, %v2806
  %v2959 = vpack.c.b16 %v2811, %v2807
  %v2960 = vpack.c.b16 %v2812, %v2808
  %v2961 = vpack.c.b16 %v2813, %v2809
  %v2962 = vpack.c.b16 %v2818, %v2814
  %v2963 = vpack.c.b16 %v2819, %v2815
  %v2964 = vpack.c.b16 %v2820, %v2816
  %v2965 = vpack.c.b16 %v2821, %v2817
  %v2966 = vpack.c.b16 %v2826, %v2822
  %v2967 = vpack.c.b16 %v2827, %v2823
  %v2968 = vpack.c.b16 %v2828, %v2824
  %v2969 = vpack.c.b16 %v2829, %v2825
  %v2970 = vpack.c.b16 %v2834, %v2830
  %v2971 = vpack.c.b16 %v2835, %v2831
  %v2972 = vpack.c.b16 %v2836, %v2832
  %v2973 = vpack.c.b16 %v2837, %v2833
  %v2974 = vpack.c.b16 %v2842, %v2838
  %v2975 = vpack.c.b16 %v2843, %v2839
  %v2976 = vpack.c.b16 %v2844, %v2840
  %v2977 = vpack.c.b16 %v2845, %v2841
  %v2978 = vpack.c.b16 %v2850, %v2846
  %v2979 = vpack.c.b16 %v2851, %v2847
  %v2980 = vpack.c.b16 %v2852, %v2848
  %v2981 = vpack.c.b16 %v2853, %v2849
  %3110 = vmatprep.subr.bf16.mxu0 %v2855
  %3111 = vmatpush1.bf16.msra.mxu0 %v2854
  %3112 = vmatprep.subr.bf16.mxu0 %v2859
  %3113 = vmatpush1.bf16.msra.mxu0 %v2858
  %3114 = vmatprep.subr.bf16.mxu0 %v2863
  %3115 = vmatpush1.bf16.msra.mxu0 %v2862
  %3116 = vmatprep.subr.bf16.mxu0 %v2867
  %3117 = vmatpush1.bf16.msra.mxu0 %v2866
  %3118 = vmatprep.subr.bf16.mxu0 %v2871
  %3119 = vmatpush1.bf16.msra.mxu0 %v2870
  %3120 = vmatprep.subr.bf16.mxu0 %v2875
  %3121 = vmatpush1.bf16.msra.mxu0 %v2874
  %3122 = vmatprep.subr.bf16.mxu0 %v2879
  %3123 = vmatpush1.bf16.msra.mxu0 %v2878
  %3124 = vmatprep.subr.bf16.mxu0 %v2883
  %3125 = vmatpush1.bf16.msra.mxu0 %v2882
  %3126 = vmatprep.subr.bf16.mxu0 %v2887
  %3127 = vmatpush1.bf16.msra.mxu0 %v2886
  %3128 = vmatprep.subr.bf16.mxu0 %v2891
  %3129 = vmatpush1.bf16.msra.mxu0 %v2890
  %3130 = vmatprep.subr.bf16.mxu0 %v2895
  %3131 = vmatpush1.bf16.msra.mxu0 %v2894
  %3132 = vmatprep.subr.bf16.mxu0 %v2899
  %3133 = vmatpush1.bf16.msra.mxu0 %v2898
  %3134 = vmatprep.subr.bf16.mxu0 %v2903
  %3135 = vmatpush1.bf16.msra.mxu0 %v2902
  %3136 = vmatprep.subr.bf16.mxu0 %v2907
  %3137 = vmatpush1.bf16.msra.mxu0 %v2906
  %3138 = vmatprep.subr.bf16.mxu0 %v2911
  %3139 = vmatpush1.bf16.msra.mxu0 %v2910
  %3140 = vmatprep.subr.bf16.mxu0 %v2915
  %3141 = vmatpush1.bf16.msra.mxu0 %v2914
  %3142 = vmatprep.mubr.bf16.mxu0 %v2463
  %3143 = vmatmul.mubr.bf16.gmra.mrb[0].mxu0 %v2462
  %v3144 = vpop.f32.mrb[0].mxu0
  %v3145 = vadd.f32 0.0, %v3144
  %v3146 = vpop.f32.mrb[0].mxu0
  %v3147 = vadd.f32 0.0, %v3146
  %v3148 = vpop.f32.mrb[0].mxu0
  %v3149 = vadd.f32 0.0, %v3148
  %v3150 = vpop.f32.mrb[0].mxu0
  %v3151 = vadd.f32 0.0, %v3150
  %3152 = vmatprep.mubr.bf16.mxu0 %v2467
  %3153 = vmatmul.mubr.bf16.gmra.mrb[0].mxu0 %v2466
  %v3154 = vpop.f32.mrb[0].mxu0
  %v3155 = vadd.f32 0.0, %v3154
  %v3156 = vpop.f32.mrb[0].mxu0
  %v3157 = vadd.f32 0.0, %v3156
  %v3158 = vpop.f32.mrb[0].mxu0
  %v3159 = vadd.f32 0.0, %v3158
  %v3160 = vpop.f32.mrb[0].mxu0
  %v3161 = vadd.f32 0.0, %v3160
  %3162 = vdwg.mxu0
  %3163 = vmatprep.subr.bf16.mxu0 %v2919
  %3164 = vmatpush1.bf16.msra.mxu0 %v2918
  %3165 = vmatprep.subr.bf16.mxu0 %v2923
  %3166 = vmatpush1.bf16.msra.mxu0 %v2922
  %3167 = vmatprep.subr.bf16.mxu0 %v2927
  %3168 = vmatpush1.bf16.msra.mxu0 %v2926
  %3169 = vmatprep.subr.bf16.mxu0 %v2931
  %3170 = vmatpush1.bf16.msra.mxu0 %v2930
  %3171 = vmatprep.subr.bf16.mxu0 %v2935
  %3172 = vmatpush1.bf16.msra.mxu0 %v2934
  %3173 = vmatprep.subr.bf16.mxu0 %v2939
  %3174 = vmatpush1.bf16.msra.mxu0 %v2938
  %3175 = vmatprep.subr.bf16.mxu0 %v2943
  %3176 = vmatpush1.bf16.msra.mxu0 %v2942
  %3177 = vmatprep.subr.bf16.mxu0 %v2947
  %3178 = vmatpush1.bf16.msra.mxu0 %v2946
  %3179 = vmatprep.subr.bf16.mxu0 %v2951
  %3180 = vmatpush1.bf16.msra.mxu0 %v2950
  %3181 = vmatprep.subr.bf16.mxu0 %v2955
  %3182 = vmatpush1.bf16.msra.mxu0 %v2954
  %3183 = vmatprep.subr.bf16.mxu0 %v2959
  %3184 = vmatpush1.bf16.msra.mxu0 %v2958
  %3185 = vmatprep.subr.bf16.mxu0 %v2963
  %3186 = vmatpush1.bf16.msra.mxu0 %v2962
  %3187 = vmatprep.subr.bf16.mxu0 %v2967
  %3188 = vmatpush1.bf16.msra.mxu0 %v2966
  %3189 = vmatprep.subr.bf16.mxu0 %v2971
  %3190 = vmatpush1.bf16.msra.mxu0 %v2970
  %3191 = vmatprep.subr.bf16.mxu0 %v2975
  %3192 = vmatpush1.bf16.msra.mxu0 %v2974
  %3193 = vmatprep.subr.bf16.mxu0 %v2979
  %3194 = vmatpush1.bf16.msra.mxu0 %v2978
  %3195 = vmatprep.mubr.bf16.mxu0 %v2465
  %3196 = vmatmul.mubr.bf16.gmra.mrb[0].mxu0 %v2464
  %v3197 = vpop.f32.mrb[0].mxu0
  %v3198 = vadd.f32 %v3145, %v3197
  %v3199 = vpop.f32.mrb[0].mxu0
  %v3200 = vadd.f32 %v3147, %v3199
  %v3201 = vpop.f32.mrb[0].mxu0
  %v3202 = vadd.f32 %v3149, %v3201
  %v3203 = vpop.f32.mrb[0].mxu0
  %v3204 = vadd.f32 %v3151, %v3203
  %3205 = vmatprep.mubr.bf16.mxu0 %v2469
  %3206 = vmatmul.mubr.bf16.gmra.mrb[0].mxu0 %v2468
  %v3207 = vpop.f32.mrb[0].mxu0
  %v3208 = vadd.f32 %v3155, %v3207
  %v3209 = vpop.f32.mrb[0].mxu0
  %v3210 = vadd.f32 %v3157, %v3209
  %v3211 = vpop.f32.mrb[0].mxu0
  %v3212 = vadd.f32 %v3159, %v3211
  %v3213 = vpop.f32.mrb[0].mxu0
  %v3214 = vadd.f32 %v3161, %v3213
  %3215 = vdwg.mxu0
  %3216 = vmatprep.subr.bf16.mxu0 %v2857
  %3217 = vmatpush1.bf16.msra.mxu0 %v2856
  %3218 = vmatprep.subr.bf16.mxu0 %v2861
  %3219 = vmatpush1.bf16.msra.mxu0 %v2860
  %3220 = vmatprep.subr.bf16.mxu0 %v2865
  %3221 = vmatpush1.bf16.msra.mxu0 %v2864
  %3222 = vmatprep.subr.bf16.mxu0 %v2869
  %3223 = vmatpush1.bf16.msra.mxu0 %v2868
  %3224 = vmatprep.subr.bf16.mxu0 %v2873
  %3225 = vmatpush1.bf16.msra.mxu0 %v2872
  %3226 = vmatprep.subr.bf16.mxu0 %v2877
  %3227 = vmatpush1.bf16.msra.mxu0 %v2876
  %3228 = vmatprep.subr.bf16.mxu0 %v2881
  %3229 = vmatpush1.bf16.msra.mxu0 %v2880
  %3230 = vmatprep.subr.bf16.mxu0 %v2885
  %3231 = vmatpush1.bf16.msra.mxu0 %v2884
  %3232 = vmatprep.subr.bf16.mxu0 %v2889
  %3233 = vmatpush1.bf16.msra.mxu0 %v2888
  %3234 = vmatprep.subr.bf16.mxu0 %v2893
  %3235 = vmatpush1.bf16.msra.mxu0 %v2892
  %3236 = vmatprep.subr.bf16.mxu0 %v2897
  %3237 = vmatpush1.bf16.msra.mxu0 %v2896
  %3238 = vmatprep.subr.bf16.mxu0 %v2901
  %3239 = vmatpush1.bf16.msra.mxu0 %v2900
  %3240 = vmatprep.subr.bf16.mxu0 %v2905
  %3241 = vmatpush1.bf16.msra.mxu0 %v2904
  %3242 = vmatprep.subr.bf16.mxu0 %v2909
  %3243 = vmatpush1.bf16.msra.mxu0 %v2908
  %3244 = vmatprep.subr.bf16.mxu0 %v2913
  %3245 = vmatpush1.bf16.msra.mxu0 %v2912
  %3246 = vmatprep.subr.bf16.mxu0 %v2917
  %3247 = vmatpush1.bf16.msra.mxu0 %v2916
  %3248 = vmatprep.mubr.bf16.mxu0 %v2463
  %3249 = vmatmul.mubr.bf16.gmra.mrb[0].mxu0 %v2462
  %v3250 = vpop.f32.mrb[0].mxu0
  %v3251 = vadd.f32 0.0, %v3250
  %v3252 = vpop.f32.mrb[0].mxu0
  %v3253 = vadd.f32 0.0, %v3252
  %v3254 = vpop.f32.mrb[0].mxu0
  %v3255 = vadd.f32 0.0, %v3254
  %v3256 = vpop.f32.mrb[0].mxu0
  %v3257 = vadd.f32 0.0, %v3256
  %3258 = vmatprep.mubr.bf16.mxu0 %v2467
  %3259 = vmatmul.mubr.bf16.gmra.mrb[0].mxu0 %v2466
  %v3260 = vpop.f32.mrb[0].mxu0
  %v3261 = vadd.f32 0.0, %v3260
  %v3262 = vpop.f32.mrb[0].mxu0
  %v3263 = vadd.f32 0.0, %v3262
  %v3264 = vpop.f32.mrb[0].mxu0
  %v3265 = vadd.f32 0.0, %v3264
  %v3266 = vpop.f32.mrb[0].mxu0
  %v3267 = vadd.f32 0.0, %v3266
  %3268 = vdwg.mxu0
  %3269 = vmatprep.subr.bf16.mxu0 %v2921
  %3270 = vmatpush1.bf16.msra.mxu0 %v2920
  %3271 = vmatprep.subr.bf16.mxu0 %v2925
  %3272 = vmatpush1.bf16.msra.mxu0 %v2924
  %3273 = vmatprep.subr.bf16.mxu0 %v2929
  %3274 = vmatpush1.bf16.msra.mxu0 %v2928
  %3275 = vmatprep.subr.bf16.mxu0 %v2933
  %3276 = vmatpush1.bf16.msra.mxu0 %v2932
  %3277 = vmatprep.subr.bf16.mxu0 %v2937
  %3278 = vmatpush1.bf16.msra.mxu0 %v2936
  %3279 = vmatprep.subr.bf16.mxu0 %v2941
  %3280 = vmatpush1.bf16.msra.mxu0 %v2940
  %3281 = vmatprep.subr.bf16.mxu0 %v2945
  %3282 = vmatpush1.bf16.msra.mxu0 %v2944
  %3283 = vmatprep.subr.bf16.mxu0 %v2949
  %3284 = vmatpush1.bf16.msra.mxu0 %v2948
  %3285 = vmatprep.subr.bf16.mxu0 %v2953
  %3286 = vmatpush1.bf16.msra.mxu0 %v2952
  %3287 = vmatprep.subr.bf16.mxu0 %v2957
  %3288 = vmatpush1.bf16.msra.mxu0 %v2956
  %3289 = vmatprep.subr.bf16.mxu0 %v2961
  %3290 = vmatpush1.bf16.msra.mxu0 %v2960
  %3291 = vmatprep.subr.bf16.mxu0 %v2965
  %3292 = vmatpush1.bf16.msra.mxu0 %v2964
  %3293 = vmatprep.subr.bf16.mxu0 %v2969
  %3294 = vmatpush1.bf16.msra.mxu0 %v2968
  %3295 = vmatprep.subr.bf16.mxu0 %v2973
  %3296 = vmatpush1.bf16.msra.mxu0 %v2972
  %3297 = vmatprep.subr.bf16.mxu0 %v2977
  %3298 = vmatpush1.bf16.msra.mxu0 %v2976
  %3299 = vmatprep.subr.bf16.mxu0 %v2981
  %3300 = vmatpush1.bf16.msra.mxu0 %v2980
  %3301 = vmatprep.mubr.bf16.mxu0 %v2465
  %3302 = vmatmul.mubr.bf16.gmra.mrb[0].mxu0 %v2464
  %v3303 = vpop.f32.mrb[0].mxu0
  %v3304 = vadd.f32 %v3251, %v3303
  %v3305 = vpop.f32.mrb[0].mxu0
  %v3306 = vadd.f32 %v3253, %v3305
  %v3307 = vpop.f32.mrb[0].mxu0
  %v3308 = vadd.f32 %v3255, %v3307
  %v3309 = vpop.f32.mrb[0].mxu0
  %v3310 = vadd.f32 %v3257, %v3309
  %3311 = vmatprep.mubr.bf16.mxu0 %v2469
  %3312 = vmatmul.mubr.bf16.gmra.mrb[0].mxu0 %v2468
  %v3313 = vpop.f32.mrb[0].mxu0
  %v3314 = vadd.f32 %v3261, %v3313
  %v3315 = vpop.f32.mrb[0].mxu0
  %v3316 = vadd.f32 %v3263, %v3315
  %v3317 = vpop.f32.mrb[0].mxu0
  %v3318 = vadd.f32 %v3265, %v3317
  %v3319 = vpop.f32.mrb[0].mxu0
  %v3320 = vadd.f32 %v3267, %v3319
  %3321 = vdwg.mxu0
  %v3322 = vadd.f32 %v2120, %v3198
  %v3323 = vadd.f32 %v2122, %v3200
  %v3324 = vadd.f32 %v2226, %v3304
  %v3325 = vadd.f32 %v2228, %v3306
  %v3326 = vadd.f32 %v2124, %v3202
  %v3327 = vadd.f32 %v2126, %v3204
  %v3328 = vadd.f32 %v2230, %v3308
  %v3329 = vadd.f32 %v2232, %v3310
  %v3330 = vadd.f32 %v2130, %v3208
  %v3331 = vadd.f32 %v2132, %v3210
  %v3332 = vadd.f32 %v2236, %v3314
  %v3333 = vadd.f32 %v2238, %v3316
  %v3334 = vadd.f32 %v2134, %v3212
  %v3335 = vadd.f32 %v2136, %v3214
  %v3336 = vadd.f32 %v2240, %v3318
  %v3337 = vadd.f32 %v2242, %v3320
  %v3338 = vld [vmem:[%s2] sm:$0xf]
  %v3340 = vlaneseq
  %v3341 = vshrl.u32 %v3340, 7
  %v3342 = vsub.s32 0, %v3341
  %v3343 = vrot.slane %v3338, %v3342
  %v3344 = vlaneseq
  %v3345 = vshrl.u32 %v3344, 7
  %v3346 = vsub.s32 1, %v3345
  %v3347 = vrot.slane %v3338, %v3346
  %v3348 = vlaneseq
  %v3349 = vshrl.u32 %v3348, 7
  %v3350 = vsub.s32 2, %v3349
  %v3351 = vrot.slane %v3338, %v3350
  %v3352 = vlaneseq
  %v3353 = vshrl.u32 %v3352, 7
  %v3354 = vsub.s32 3, %v3353
  %v3355 = vrot.slane %v3338, %v3354
  %v3360 = vmul.f32 %v3322, %v3343
  %v3361 = vmul.f32 %v3323, %v3347
  %v3362 = vmul.f32 %v3324, %v3351
  %v3363 = vmul.f32 %v3325, %v3355
  %v3364 = vmul.f32 %v3326, %v3343
  %v3365 = vmul.f32 %v3327, %v3347
  %v3366 = vmul.f32 %v3328, %v3351
  %v3367 = vmul.f32 %v3329, %v3355
  %v3368 = vmul.f32 %v3330, %v3343
  %v3369 = vmul.f32 %v3331, %v3347
  %v3370 = vmul.f32 %v3332, %v3351
  %v3371 = vmul.f32 %v3333, %v3355
  %v3372 = vmul.f32 %v3334, %v3343
  %v3373 = vmul.f32 %v3335, %v3347
  %v3374 = vmul.f32 %v3336, %v3351
  %v3375 = vmul.f32 %v3337, %v3355
  %v3376 = vld [vmem:[%s3] sm:$0xf]
  %v3378 = vlaneseq
  %v3379 = vshrl.u32 %v3378, 7
  %v3380 = vsub.s32 0, %v3379
  %v3381 = vrot.slane %v3376, %v3380
  %v3382 = vlaneseq
  %v3383 = vshrl.u32 %v3382, 7
  %v3384 = vsub.s32 1, %v3383
  %v3385 = vrot.slane %v3376, %v3384
  %v3386 = vlaneseq
  %v3387 = vshrl.u32 %v3386, 7
  %v3388 = vsub.s32 2, %v3387
  %v3389 = vrot.slane %v3376, %v3388
  %v3390 = vlaneseq
  %v3391 = vshrl.u32 %v3390, 7
  %v3392 = vsub.s32 3, %v3391
  %v3393 = vrot.slane %v3376, %v3392
  %v3398 = vadd.f32 %v3360, %v3381
  %v3399 = vadd.f32 %v3361, %v3385
  %v3400 = vadd.f32 %v3362, %v3389
  %v3401 = vadd.f32 %v3363, %v3393
  %v3402 = vadd.f32 %v3364, %v3381
  %v3403 = vadd.f32 %v3365, %v3385
  %v3404 = vadd.f32 %v3366, %v3389
  %v3405 = vadd.f32 %v3367, %v3393
  %v3406 = vadd.f32 %v3368, %v3381
  %v3407 = vadd.f32 %v3369, %v3385
  %v3408 = vadd.f32 %v3370, %v3389
  %v3409 = vadd.f32 %v3371, %v3393
  %v3410 = vadd.f32 %v3372, %v3381
  %v3411 = vadd.f32 %v3373, %v3385
  %v3412 = vadd.f32 %v3374, %v3389
  %v3413 = vadd.f32 %v3375, %v3393
  %v3414 = vmax.f32 %v3398, 0.0
  %v3415 = vmax.f32 %v3399, 0.0
  %v3416 = vmax.f32 %v3400, 0.0
  %v3417 = vmax.f32 %v3401, 0.0
  %v3418 = vmax.f32 %v3402, 0.0
  %v3419 = vmax.f32 %v3403, 0.0
  %v3420 = vmax.f32 %v3404, 0.0
  %v3421 = vmax.f32 %v3405, 0.0
  %v3422 = vmax.f32 %v3406, 0.0
  %v3423 = vmax.f32 %v3407, 0.0
  %v3424 = vmax.f32 %v3408, 0.0
  %v3425 = vmax.f32 %v3409, 0.0
  %v3426 = vmax.f32 %v3410, 0.0
  %v3427 = vmax.f32 %v3411, 0.0
  %v3428 = vmax.f32 %v3412, 0.0
  %v3429 = vmax.f32 %v3413, 0.0
  %v3446 = vrot.slane %v3414, 7
  %v3447 = vrot.slane %v3415, 7
  %v3448 = vrot.slane %v3416, 7
  %v3449 = vrot.slane %v3417, 7
  %v3450 = vrot.slane %v3418, 7
  %v3451 = vsel %vm73, %v3446, %v3450
  %v3452 = vrot.slane %v3419, 7
  %v3453 = vsel %vm73, %v3447, %v3452
  %v3454 = vrot.slane %v3420, 7
  %v3455 = vsel %vm73, %v3448, %v3454
  %v3456 = vrot.slane %v3421, 7
  %v3457 = vsel %vm73, %v3449, %v3456
  %v3458 = vrot.slane %v3422, 7
  %v3459 = vrot.slane %v3423, 7
  %v3460 = vrot.slane %v3424, 7
  %v3461 = vrot.slane %v3425, 7
  %v3462 = vrot.slane %v3426, 7
  %v3463 = vsel %vm73, %v3458, %v3462
  %v3464 = vrot.slane %v3427, 7
  %v3465 = vsel %vm73, %v3459, %v3464
  %v3466 = vrot.slane %v3428, 7
  %v3467 = vsel %vm73, %v3460, %v3466
  %v3468 = vrot.slane %v3429, 7
  %v3469 = vsel %vm73, %v3461, %v3468
  %3494 = vst [vmem:[#allocation2] sm:$0xfe] %v3446
  %3495 = vst [vmem:[#allocation2 + $0x8] sm:$0xfe] %v3447
  %3496 = vst [vmem:[#allocation2 + $0x10] sm:$0xfe] %v3448
  %3497 = vst [vmem:[#allocation2 + $0x18] sm:$0xfe] %v3449
  %3498 = vst [vmem:[#allocation2 + $0x20] sm:$0xff] %v3451
  %3499 = vst [vmem:[#allocation2 + $0x28] sm:$0xff] %v3453
  %3500 = vst [vmem:[#allocation2 + $0x30] sm:$0xff] %v3455
  %3501 = vst [vmem:[#allocation2 + $0x38] sm:$0xff] %v3457
  %3502 = vst [vmem:[#allocation2 + $0x40] sm:$0x1] %v3450
  %3503 = vst [vmem:[#allocation2 + $0x48] sm:$0x1] %v3452
  %3504 = vst [vmem:[#allocation2 + $0x50] sm:$0x1] %v3454
  %3505 = vst [vmem:[#allocation2 + $0x58] sm:$0x1] %v3456
  %3506 = vst [vmem:[#allocation2 + $0x60] sm:$0xfe] %v3458
  %3507 = vst [vmem:[#allocation2 + $0x68] sm:$0xfe] %v3459
  %3508 = vst [vmem:[#allocation2 + $0x70] sm:$0xfe] %v3460
  %3509 = vst [vmem:[#allocation2 + $0x78] sm:$0xfe] %v3461
  %3510 = vst [vmem:[#allocation2 + $0x80] sm:$0xff] %v3463
  %3511 = vst [vmem:[#allocation2 + $0x88] sm:$0xff] %v3465
  %3512 = vst [vmem:[#allocation2 + $0x90] sm:$0xff] %v3467
  %3513 = vst [vmem:[#allocation2 + $0x98] sm:$0xff] %v3469
  %3514 = vst [vmem:[#allocation2 + $0xa0] sm:$0x1] %v3462
  %3515 = vst [vmem:[#allocation2 + $0xa8] sm:$0x1] %v3464
  %3516 = vst [vmem:[#allocation2 + $0xb0] sm:$0x1] %v3466
  %3517 = vst [vmem:[#allocation2 + $0xb8] sm:$0x1] %v3468
  %v3518 = vld [vmem:[#allocation2] sm:$0xfe]
  %v3519 = vld [vmem:[#allocation2 + $0x8] sm:$0xfe]
  %v3520 = vld [vmem:[#allocation2 + $0x10] sm:$0xfe]
  %v3521 = vld [vmem:[#allocation2 + $0x18] sm:$0xfe]
  %v3522 = vld [vmem:[#allocation2 + $0x20] sm:$0xff]
  %v3523 = vld [vmem:[#allocation2 + $0x28] sm:$0xff]
  %v3524 = vld [vmem:[#allocation2 + $0x30] sm:$0xff]
  %v3525 = vld [vmem:[#allocation2 + $0x38] sm:$0xff]
  %v3526 = vld [vmem:[#allocation2 + $0x40] sm:$0x1]
  %v3527 = vld [vmem:[#allocation2 + $0x48] sm:$0x1]
  %v3528 = vld [vmem:[#allocation2 + $0x50] sm:$0x1]
  %v3529 = vld [vmem:[#allocation2 + $0x58] sm:$0x1]
  %v3530 = vld [vmem:[#allocation2 + $0x60] sm:$0xfe]
  %v3531 = vld [vmem:[#allocation2 + $0x68] sm:$0xfe]
  %v3532 = vld [vmem:[#allocation2 + $0x70] sm:$0xfe]
  %v3533 = vld [vmem:[#allocation2 + $0x78] sm:$0xfe]
  %v3534 = vld [vmem:[#allocation2 + $0x80] sm:$0xff]
  %v3535 = vld [vmem:[#allocation2 + $0x88] sm:$0xff]
  %v3536 = vld [vmem:[#allocation2 + $0x90] sm:$0xff]
  %v3537 = vld [vmem:[#allocation2 + $0x98] sm:$0xff]
  %v3538 = vld [vmem:[#allocation2 + $0xa0] sm:$0x1]
  %v3539 = vld [vmem:[#allocation2 + $0xa8] sm:$0x1]
  %v3540 = vld [vmem:[#allocation2 + $0xb0] sm:$0x1]
  %v3541 = vld [vmem:[#allocation2 + $0xb8] sm:$0x1]
  %v3566 = vrot.slane %v3518, 1
  %v3567 = vrot.slane %v3522, 1
  %v3568 = vsel %vm194, %v3566, %v3567
  %v3569 = vrot.slane %v3519, 1
  %v3570 = vrot.slane %v3523, 1
  %v3571 = vsel %vm194, %v3569, %v3570
  %v3572 = vrot.slane %v3520, 1
  %v3573 = vrot.slane %v3524, 1
  %v3574 = vsel %vm194, %v3572, %v3573
  %v3575 = vrot.slane %v3521, 1
  %v3576 = vrot.slane %v3525, 1
  %v3577 = vsel %vm194, %v3575, %v3576
  %v3578 = vrot.slane %v3526, 1
  %v3579 = vsel %vm194, %v3567, %v3578
  %v3580 = vrot.slane %v3527, 1
  %v3581 = vsel %vm194, %v3570, %v3580
  %v3582 = vrot.slane %v3528, 1
  %v3583 = vsel %vm194, %v3573, %v3582
  %v3584 = vrot.slane %v3529, 1
  %v3585 = vsel %vm194, %v3576, %v3584
  %v3586 = vrot.slane %v3530, 1
  %v3587 = vrot.slane %v3534, 1
  %v3588 = vsel %vm194, %v3586, %v3587
  %v3589 = vrot.slane %v3531, 1
  %v3590 = vrot.slane %v3535, 1
  %v3591 = vsel %vm194, %v3589, %v3590
  %v3592 = vrot.slane %v3532, 1
  %v3593 = vrot.slane %v3536, 1
  %v3594 = vsel %vm194, %v3592, %v3593
  %v3595 = vrot.slane %v3533, 1
  %v3596 = vrot.slane %v3537, 1
  %v3597 = vsel %vm194, %v3595, %v3596
  %v3598 = vrot.slane %v3538, 1
  %v3599 = vsel %vm194, %v3587, %v3598
  %v3600 = vrot.slane %v3539, 1
  %v3601 = vsel %vm194, %v3590, %v3600
  %v3602 = vrot.slane %v3540, 1
  %v3603 = vsel %vm194, %v3593, %v3602
  %v3604 = vrot.slane %v3541, 1
  %v3605 = vsel %vm194, %v3596, %v3604
  %s3622 = scalar_lea.vmem %s4, 1024
  %v3623 = vld [vmem:[%s3622] sm:$0xff]
  %v3624 = vld [vmem:[%s3622 + $0x8] sm:$0xff]
  %v3625 = vld [vmem:[%s3622 + $0x10] sm:$0xff]
  %v3626 = vld [vmem:[%s3622 + $0x18] sm:$0xff]
  %v3627 = vld [vmem:[%s3622 + $0x20] sm:$0xff]
  %v3628 = vld [vmem:[%s3622 + $0x28] sm:$0xff]
  %v3629 = vld [vmem:[%s3622 + $0x30] sm:$0xff]
  %v3630 = vld [vmem:[%s3622 + $0x38] sm:$0xff]
  %v3631 = vld [vmem:[%s3622 + $0x40] sm:$0xff]
  %v3632 = vld [vmem:[%s3622 + $0x48] sm:$0xff]
  %v3633 = vld [vmem:[%s3622 + $0x50] sm:$0xff]
  %v3634 = vld [vmem:[%s3622 + $0x58] sm:$0xff]
  %v3635 = vld [vmem:[%s3622 + $0x60] sm:$0xff]
  %v3636 = vld [vmem:[%s3622 + $0x68] sm:$0xff]
  %v3637 = vld [vmem:[%s3622 + $0x70] sm:$0xff]
  %v3638 = vld [vmem:[%s3622 + $0x78] sm:$0xff]
  %v3639 = vld [vmem:[%s3622 + $0x80] sm:$0xff]
  %v3640 = vld [vmem:[%s3622 + $0x88] sm:$0xff]
  %v3641 = vld [vmem:[%s3622 + $0x90] sm:$0xff]
  %v3642 = vld [vmem:[%s3622 + $0x98] sm:$0xff]
  %v3643 = vld [vmem:[%s3622 + $0xa0] sm:$0xff]
  %v3644 = vld [vmem:[%s3622 + $0xa8] sm:$0xff]
  %v3645 = vld [vmem:[%s3622 + $0xb0] sm:$0xff]
  %v3646 = vld [vmem:[%s3622 + $0xb8] sm:$0xff]
  %v3647 = vld [vmem:[%s3622 + $0xc0] sm:$0xff]
  %v3648 = vld [vmem:[%s3622 + $0xc8] sm:$0xff]
  %v3649 = vld [vmem:[%s3622 + $0xd0] sm:$0xff]
  %v3650 = vld [vmem:[%s3622 + $0xd8] sm:$0xff]
  %v3651 = vld [vmem:[%s3622 + $0xe0] sm:$0xff]
  %v3652 = vld [vmem:[%s3622 + $0xe8] sm:$0xff]
  %v3653 = vld [vmem:[%s3622 + $0xf0] sm:$0xff]
  %v3654 = vld [vmem:[%s3622 + $0xf8] sm:$0xff]
  %v3655 = vld [vmem:[%s3622 + $0x100] sm:$0xff]
  %v3656 = vld [vmem:[%s3622 + $0x108] sm:$0xff]
  %v3657 = vld [vmem:[%s3622 + $0x110] sm:$0xff]
  %v3658 = vld [vmem:[%s3622 + $0x118] sm:$0xff]
  %v3659 = vld [vmem:[%s3622 + $0x120] sm:$0xff]
  %v3660 = vld [vmem:[%s3622 + $0x128] sm:$0xff]
  %v3661 = vld [vmem:[%s3622 + $0x130] sm:$0xff]
  %v3662 = vld [vmem:[%s3622 + $0x138] sm:$0xff]
  %v3663 = vld [vmem:[%s3622 + $0x140] sm:$0xff]
  %v3664 = vld [vmem:[%s3622 + $0x148] sm:$0xff]
  %v3665 = vld [vmem:[%s3622 + $0x150] sm:$0xff]
  %v3666 = vld [vmem:[%s3622 + $0x158] sm:$0xff]
  %v3667 = vld [vmem:[%s3622 + $0x160] sm:$0xff]
  %v3668 = vld [vmem:[%s3622 + $0x168] sm:$0xff]
  %v3669 = vld [vmem:[%s3622 + $0x170] sm:$0xff]
  %v3670 = vld [vmem:[%s3622 + $0x178] sm:$0xff]
  %v3671 = vld [vmem:[%s3622 + $0x180] sm:$0xff]
  %v3672 = vld [vmem:[%s3622 + $0x188] sm:$0xff]
  %v3673 = vld [vmem:[%s3622 + $0x190] sm:$0xff]
  %v3674 = vld [vmem:[%s3622 + $0x198] sm:$0xff]
  %v3675 = vld [vmem:[%s3622 + $0x1a0] sm:$0xff]
  %v3676 = vld [vmem:[%s3622 + $0x1a8] sm:$0xff]
  %v3677 = vld [vmem:[%s3622 + $0x1b0] sm:$0xff]
  %v3678 = vld [vmem:[%s3622 + $0x1b8] sm:$0xff]
  %v3679 = vld [vmem:[%s3622 + $0x1c0] sm:$0xff]
  %v3680 = vld [vmem:[%s3622 + $0x1c8] sm:$0xff]
  %v3681 = vld [vmem:[%s3622 + $0x1d0] sm:$0xff]
  %v3682 = vld [vmem:[%s3622 + $0x1d8] sm:$0xff]
  %v3683 = vld [vmem:[%s3622 + $0x1e0] sm:$0xff]
  %v3684 = vld [vmem:[%s3622 + $0x1e8] sm:$0xff]
  %v3685 = vld [vmem:[%s3622 + $0x1f0] sm:$0xff]
  %v3686 = vld [vmem:[%s3622 + $0x1f8] sm:$0xff]
  %v3687 = vld [vmem:[%s3622 + $0x200] sm:$0xff]
  %v3688 = vld [vmem:[%s3622 + $0x208] sm:$0xff]
  %v3689 = vld [vmem:[%s3622 + $0x210] sm:$0xff]
  %v3690 = vld [vmem:[%s3622 + $0x218] sm:$0xff]
  %v3691 = vld [vmem:[%s3622 + $0x220] sm:$0xff]
  %v3692 = vld [vmem:[%s3622 + $0x228] sm:$0xff]
  %v3693 = vld [vmem:[%s3622 + $0x230] sm:$0xff]
  %v3694 = vld [vmem:[%s3622 + $0x238] sm:$0xff]
  %v3695 = vld [vmem:[%s3622 + $0x240] sm:$0xff]
  %v3696 = vld [vmem:[%s3622 + $0x248] sm:$0xff]
  %v3697 = vld [vmem:[%s3622 + $0x250] sm:$0xff]
  %v3698 = vld [vmem:[%s3622 + $0x258] sm:$0xff]
  %v3699 = vld [vmem:[%s3622 + $0x260] sm:$0xff]
  %v3700 = vld [vmem:[%s3622 + $0x268] sm:$0xff]
  %v3701 = vld [vmem:[%s3622 + $0x270] sm:$0xff]
  %v3702 = vld [vmem:[%s3622 + $0x278] sm:$0xff]
  %v3703 = vld [vmem:[%s3622 + $0x280] sm:$0xff]
  %v3704 = vld [vmem:[%s3622 + $0x288] sm:$0xff]
  %v3705 = vld [vmem:[%s3622 + $0x290] sm:$0xff]
  %v3706 = vld [vmem:[%s3622 + $0x298] sm:$0xff]
  %v3707 = vld [vmem:[%s3622 + $0x2a0] sm:$0xff]
  %v3708 = vld [vmem:[%s3622 + $0x2a8] sm:$0xff]
  %v3709 = vld [vmem:[%s3622 + $0x2b0] sm:$0xff]
  %v3710 = vld [vmem:[%s3622 + $0x2b8] sm:$0xff]
  %v3711 = vld [vmem:[%s3622 + $0x2c0] sm:$0xff]
  %v3712 = vld [vmem:[%s3622 + $0x2c8] sm:$0xff]
  %v3713 = vld [vmem:[%s3622 + $0x2d0] sm:$0xff]
  %v3714 = vld [vmem:[%s3622 + $0x2d8] sm:$0xff]
  %v3715 = vld [vmem:[%s3622 + $0x2e0] sm:$0xff]
  %v3716 = vld [vmem:[%s3622 + $0x2e8] sm:$0xff]
  %v3717 = vld [vmem:[%s3622 + $0x2f0] sm:$0xff]
  %v3718 = vld [vmem:[%s3622 + $0x2f8] sm:$0xff]
  %v3719 = vld [vmem:[%s3622 + $0x300] sm:$0xff]
  %v3720 = vld [vmem:[%s3622 + $0x308] sm:$0xff]
  %v3721 = vld [vmem:[%s3622 + $0x310] sm:$0xff]
  %v3722 = vld [vmem:[%s3622 + $0x318] sm:$0xff]
  %v3723 = vld [vmem:[%s3622 + $0x320] sm:$0xff]
  %v3724 = vld [vmem:[%s3622 + $0x328] sm:$0xff]
  %v3725 = vld [vmem:[%s3622 + $0x330] sm:$0xff]
  %v3726 = vld [vmem:[%s3622 + $0x338] sm:$0xff]
  %v3727 = vld [vmem:[%s3622 + $0x340] sm:$0xff]
  %v3728 = vld [vmem:[%s3622 + $0x348] sm:$0xff]
  %v3729 = vld [vmem:[%s3622 + $0x350] sm:$0xff]
  %v3730 = vld [vmem:[%s3622 + $0x358] sm:$0xff]
  %v3731 = vld [vmem:[%s3622 + $0x360] sm:$0xff]
  %v3732 = vld [vmem:[%s3622 + $0x368] sm:$0xff]
  %v3733 = vld [vmem:[%s3622 + $0x370] sm:$0xff]
  %v3734 = vld [vmem:[%s3622 + $0x378] sm:$0xff]
  %v3735 = vld [vmem:[%s3622 + $0x380] sm:$0xff]
  %v3736 = vld [vmem:[%s3622 + $0x388] sm:$0xff]
  %v3737 = vld [vmem:[%s3622 + $0x390] sm:$0xff]
  %v3738 = vld [vmem:[%s3622 + $0x398] sm:$0xff]
  %v3739 = vld [vmem:[%s3622 + $0x3a0] sm:$0xff]
  %v3740 = vld [vmem:[%s3622 + $0x3a8] sm:$0xff]
  %v3741 = vld [vmem:[%s3622 + $0x3b0] sm:$0xff]
  %v3742 = vld [vmem:[%s3622 + $0x3b8] sm:$0xff]
  %v3743 = vld [vmem:[%s3622 + $0x3c0] sm:$0xff]
  %v3744 = vld [vmem:[%s3622 + $0x3c8] sm:$0xff]
  %v3745 = vld [vmem:[%s3622 + $0x3d0] sm:$0xff]
  %v3746 = vld [vmem:[%s3622 + $0x3d8] sm:$0xff]
  %v3747 = vld [vmem:[%s3622 + $0x3e0] sm:$0xff]
  %v3748 = vld [vmem:[%s3622 + $0x3e8] sm:$0xff]
  %v3749 = vld [vmem:[%s3622 + $0x3f0] sm:$0xff]
  %v3750 = vld [vmem:[%s3622 + $0x3f8] sm:$0xff]
  %v3751 = vpack.c.bf16 %v3579, %v3568
  %v3752 = vpack.c.bf16 %v3581, %v3571
  %v3753 = vpack.c.bf16 %v3583, %v3574
  %v3754 = vpack.c.bf16 %v3585, %v3577
  %v3755 = vpack.c.bf16 %v3599, %v3588
  %v3756 = vpack.c.bf16 %v3601, %v3591
  %v3757 = vpack.c.bf16 %v3603, %v3594
  %v3758 = vpack.c.bf16 %v3605, %v3597
  %v3759 = vld [vmem:[#allocation2] sm:$0xff]
  %v3760 = vld [vmem:[#allocation2 + $0x8] sm:$0xff]
  %v3761 = vld [vmem:[#allocation2 + $0x10] sm:$0xff]
  %v3762 = vld [vmem:[#allocation2 + $0x18] sm:$0xff]
  %v3763 = vld [vmem:[#allocation2 + $0x20] sm:$0xff]
  %v3764 = vld [vmem:[#allocation2 + $0x28] sm:$0xff]
  %v3765 = vld [vmem:[#allocation2 + $0x30] sm:$0xff]
  %v3766 = vld [vmem:[#allocation2 + $0x38] sm:$0xff]
  %v3767 = vld [vmem:[#allocation2 + $0x60] sm:$0xff]
  %v3768 = vld [vmem:[#allocation2 + $0x68] sm:$0xff]
  %v3769 = vld [vmem:[#allocation2 + $0x70] sm:$0xff]
  %v3770 = vld [vmem:[#allocation2 + $0x78] sm:$0xff]
  %v3771 = vld [vmem:[#allocation2 + $0x80] sm:$0xff]
  %v3772 = vld [vmem:[#allocation2 + $0x88] sm:$0xff]
  %v3773 = vld [vmem:[#allocation2 + $0x90] sm:$0xff]
  %v3774 = vld [vmem:[#allocation2 + $0x98] sm:$0xff]
  %v3775 = vld [vmem:[%s4] sm:$0xff]
  %v3776 = vld [vmem:[%s4 + $0x8] sm:$0xff]
  %v3777 = vld [vmem:[%s4 + $0x10] sm:$0xff]
  %v3778 = vld [vmem:[%s4 + $0x18] sm:$0xff]
  %v3779 = vld [vmem:[%s4 + $0x20] sm:$0xff]
  %v3780 = vld [vmem:[%s4 + $0x28] sm:$0xff]
  %v3781 = vld [vmem:[%s4 + $0x30] sm:$0xff]
  %v3782 = vld [vmem:[%s4 + $0x38] sm:$0xff]
  %v3783 = vld [vmem:[%s4 + $0x40] sm:$0xff]
  %v3784 = vld [vmem:[%s4 + $0x48] sm:$0xff]
  %v3785 = vld [vmem:[%s4 + $0x50] sm:$0xff]
  %v3786 = vld [vmem:[%s4 + $0x58] sm:$0xff]
  %v3787 = vld [vmem:[%s4 + $0x60] sm:$0xff]
  %v3788 = vld [vmem:[%s4 + $0x68] sm:$0xff]
  %v3789 = vld [vmem:[%s4 + $0x70] sm:$0xff]
  %v3790 = vld [vmem:[%s4 + $0x78] sm:$0xff]
  %v3791 = vld [vmem:[%s4 + $0x80] sm:$0xff]
  %v3792 = vld [vmem:[%s4 + $0x88] sm:$0xff]
  %v3793 = vld [vmem:[%s4 + $0x90] sm:$0xff]
  %v3794 = vld [vmem:[%s4 + $0x98] sm:$0xff]
  %v3795 = vld [vmem:[%s4 + $0xa0] sm:$0xff]
  %v3796 = vld [vmem:[%s4 + $0xa8] sm:$0xff]
  %v3797 = vld [vmem:[%s4 + $0xb0] sm:$0xff]
  %v3798 = vld [vmem:[%s4 + $0xb8] sm:$0xff]
  %v3799 = vld [vmem:[%s4 + $0xc0] sm:$0xff]
  %v3800 = vld [vmem:[%s4 + $0xc8] sm:$0xff]
  %v3801 = vld [vmem:[%s4 + $0xd0] sm:$0xff]
  %v3802 = vld [vmem:[%s4 + $0xd8] sm:$0xff]
  %v3803 = vld [vmem:[%s4 + $0xe0] sm:$0xff]
  %v3804 = vld [vmem:[%s4 + $0xe8] sm:$0xff]
  %v3805 = vld [vmem:[%s4 + $0xf0] sm:$0xff]
  %v3806 = vld [vmem:[%s4 + $0xf8] sm:$0xff]
  %v3807 = vld [vmem:[%s4 + $0x100] sm:$0xff]
  %v3808 = vld [vmem:[%s4 + $0x108] sm:$0xff]
  %v3809 = vld [vmem:[%s4 + $0x110] sm:$0xff]
  %v3810 = vld [vmem:[%s4 + $0x118] sm:$0xff]
  %v3811 = vld [vmem:[%s4 + $0x120] sm:$0xff]
  %v3812 = vld [vmem:[%s4 + $0x128] sm:$0xff]
  %v3813 = vld [vmem:[%s4 + $0x130] sm:$0xff]
  %v3814 = vld [vmem:[%s4 + $0x138] sm:$0xff]
  %v3815 = vld [vmem:[%s4 + $0x140] sm:$0xff]
  %v3816 = vld [vmem:[%s4 + $0x148] sm:$0xff]
  %v3817 = vld [vmem:[%s4 + $0x150] sm:$0xff]
  %v3818 = vld [vmem:[%s4 + $0x158] sm:$0xff]
  %v3819 = vld [vmem:[%s4 + $0x160] sm:$0xff]
  %v3820 = vld [vmem:[%s4 + $0x168] sm:$0xff]
  %v3821 = vld [vmem:[%s4 + $0x170] sm:$0xff]
  %v3822 = vld [vmem:[%s4 + $0x178] sm:$0xff]
  %v3823 = vld [vmem:[%s4 + $0x180] sm:$0xff]
  %v3824 = vld [vmem:[%s4 + $0x188] sm:$0xff]
  %v3825 = vld [vmem:[%s4 + $0x190] sm:$0xff]
  %v3826 = vld [vmem:[%s4 + $0x198] sm:$0xff]
  %v3827 = vld [vmem:[%s4 + $0x1a0] sm:$0xff]
  %v3828 = vld [vmem:[%s4 + $0x1a8] sm:$0xff]
  %v3829 = vld [vmem:[%s4 + $0x1b0] sm:$0xff]
  %v3830 = vld [vmem:[%s4 + $0x1b8] sm:$0xff]
  %v3831 = vld [vmem:[%s4 + $0x1c0] sm:$0xff]
  %v3832 = vld [vmem:[%s4 + $0x1c8] sm:$0xff]
  %v3833 = vld [vmem:[%s4 + $0x1d0] sm:$0xff]
  %v3834 = vld [vmem:[%s4 + $0x1d8] sm:$0xff]
  %v3835 = vld [vmem:[%s4 + $0x1e0] sm:$0xff]
  %v3836 = vld [vmem:[%s4 + $0x1e8] sm:$0xff]
  %v3837 = vld [vmem:[%s4 + $0x1f0] sm:$0xff]
  %v3838 = vld [vmem:[%s4 + $0x1f8] sm:$0xff]
  %v3839 = vld [vmem:[%s4 + $0x200] sm:$0xff]
  %v3840 = vld [vmem:[%s4 + $0x208] sm:$0xff]
  %v3841 = vld [vmem:[%s4 + $0x210] sm:$0xff]
  %v3842 = vld [vmem:[%s4 + $0x218] sm:$0xff]
  %v3843 = vld [vmem:[%s4 + $0x220] sm:$0xff]
  %v3844 = vld [vmem:[%s4 + $0x228] sm:$0xff]
  %v3845 = vld [vmem:[%s4 + $0x230] sm:$0xff]
  %v3846 = vld [vmem:[%s4 + $0x238] sm:$0xff]
  %v3847 = vld [vmem:[%s4 + $0x240] sm:$0xff]
  %v3848 = vld [vmem:[%s4 + $0x248] sm:$0xff]
  %v3849 = vld [vmem:[%s4 + $0x250] sm:$0xff]
  %v3850 = vld [vmem:[%s4 + $0x258] sm:$0xff]
  %v3851 = vld [vmem:[%s4 + $0x260] sm:$0xff]
  %v3852 = vld [vmem:[%s4 + $0x268] sm:$0xff]
  %v3853 = vld [vmem:[%s4 + $0x270] sm:$0xff]
  %v3854 = vld [vmem:[%s4 + $0x278] sm:$0xff]
  %v3855 = vld [vmem:[%s4 + $0x280] sm:$0xff]
  %v3856 = vld [vmem:[%s4 + $0x288] sm:$0xff]
  %v3857 = vld [vmem:[%s4 + $0x290] sm:$0xff]
  %v3858 = vld [vmem:[%s4 + $0x298] sm:$0xff]
  %v3859 = vld [vmem:[%s4 + $0x2a0] sm:$0xff]
  %v3860 = vld [vmem:[%s4 + $0x2a8] sm:$0xff]
  %v3861 = vld [vmem:[%s4 + $0x2b0] sm:$0xff]
  %v3862 = vld [vmem:[%s4 + $0x2b8] sm:$0xff]
  %v3863 = vld [vmem:[%s4 + $0x2c0] sm:$0xff]
  %v3864 = vld [vmem:[%s4 + $0x2c8] sm:$0xff]
  %v3865 = vld [vmem:[%s4 + $0x2d0] sm:$0xff]
  %v3866 = vld [vmem:[%s4 + $0x2d8] sm:$0xff]
  %v3867 = vld [vmem:[%s4 + $0x2e0] sm:$0xff]
  %v3868 = vld [vmem:[%s4 + $0x2e8] sm:$0xff]
  %v3869 = vld [vmem:[%s4 + $0x2f0] sm:$0xff]
  %v3870 = vld [vmem:[%s4 + $0x2f8] sm:$0xff]
  %v3871 = vld [vmem:[%s4 + $0x300] sm:$0xff]
  %v3872 = vld [vmem:[%s4 + $0x308] sm:$0xff]
  %v3873 = vld [vmem:[%s4 + $0x310] sm:$0xff]
  %v3874 = vld [vmem:[%s4 + $0x318] sm:$0xff]
  %v3875 = vld [vmem:[%s4 + $0x320] sm:$0xff]
  %v3876 = vld [vmem:[%s4 + $0x328] sm:$0xff]
  %v3877 = vld [vmem:[%s4 + $0x330] sm:$0xff]
  %v3878 = vld [vmem:[%s4 + $0x338] sm:$0xff]
  %v3879 = vld [vmem:[%s4 + $0x340] sm:$0xff]
  %v3880 = vld [vmem:[%s4 + $0x348] sm:$0xff]
  %v3881 = vld [vmem:[%s4 + $0x350] sm:$0xff]
  %v3882 = vld [vmem:[%s4 + $0x358] sm:$0xff]
  %v3883 = vld [vmem:[%s4 + $0x360] sm:$0xff]
  %v3884 = vld [vmem:[%s4 + $0x368] sm:$0xff]
  %v3885 = vld [vmem:[%s4 + $0x370] sm:$0xff]
  %v3886 = vld [vmem:[%s4 + $0x378] sm:$0xff]
  %v3887 = vld [vmem:[%s4 + $0x380] sm:$0xff]
  %v3888 = vld [vmem:[%s4 + $0x388] sm:$0xff]
  %v3889 = vld [vmem:[%s4 + $0x390] sm:$0xff]
  %v3890 = vld [vmem:[%s4 + $0x398] sm:$0xff]
  %v3891 = vld [vmem:[%s4 + $0x3a0] sm:$0xff]
  %v3892 = vld [vmem:[%s4 + $0x3a8] sm:$0xff]
  %v3893 = vld [vmem:[%s4 + $0x3b0] sm:$0xff]
  %v3894 = vld [vmem:[%s4 + $0x3b8] sm:$0xff]
  %v3895 = vld [vmem:[%s4 + $0x3c0] sm:$0xff]
  %v3896 = vld [vmem:[%s4 + $0x3c8] sm:$0xff]
  %v3897 = vld [vmem:[%s4 + $0x3d0] sm:$0xff]
  %v3898 = vld [vmem:[%s4 + $0x3d8] sm:$0xff]
  %v3899 = vld [vmem:[%s4 + $0x3e0] sm:$0xff]
  %v3900 = vld [vmem:[%s4 + $0x3e8] sm:$0xff]
  %v3901 = vld [vmem:[%s4 + $0x3f0] sm:$0xff]
  %v3902 = vld [vmem:[%s4 + $0x3f8] sm:$0xff]
  %v3903 = vpack.c.bf16 %v3763, %v3759
  %v3904 = vpack.c.bf16 %v3764, %v3760
  %v3905 = vpack.c.bf16 %v3765, %v3761
  %v3906 = vpack.c.bf16 %v3766, %v3762
  %v3907 = vpack.c.bf16 %v3771, %v3767
  %v3908 = vpack.c.bf16 %v3772, %v3768
  %v3909 = vpack.c.bf16 %v3773, %v3769
  %v3910 = vpack.c.bf16 %v3774, %v3770
  %v4039 = vunpack.c.l.b16 %v3775
  %v4040 = vunpack.c.h.b16 %v3775
  %v4041 = vunpack.c.l.b16 %v3776
  %v4042 = vunpack.c.h.b16 %v3776
  %v4043 = vunpack.c.l.b16 %v3777
  %v4044 = vunpack.c.h.b16 %v3777
  %v4045 = vunpack.c.l.b16 %v3778
  %v4046 = vunpack.c.h.b16 %v3778
  %v4047 = vunpack.c.l.b16 %v3779
  %v4048 = vunpack.c.h.b16 %v3779
  %v4049 = vunpack.c.l.b16 %v3780
  %v4050 = vunpack.c.h.b16 %v3780
  %v4051 = vunpack.c.l.b16 %v3781
  %v4052 = vunpack.c.h.b16 %v3781
  %v4053 = vunpack.c.l.b16 %v3782
  %v4054 = vunpack.c.h.b16 %v3782
  %v4055 = vunpack.c.l.b16 %v3783
  %v4056 = vunpack.c.h.b16 %v3783
  %v4057 = vunpack.c.l.b16 %v3784
  %v4058 = vunpack.c.h.b16 %v3784
  %v4059 = vunpack.c.l.b16 %v3785
  %v4060 = vunpack.c.h.b16 %v3785
  %v4061 = vunpack.c.l.b16 %v3786
  %v4062 = vunpack.c.h.b16 %v3786
  %v4063 = vunpack.c.l.b16 %v3787
  %v4064 = vunpack.c.h.b16 %v3787
  %v4065 = vunpack.c.l.b16 %v3788
  %v4066 = vunpack.c.h.b16 %v3788
  %v4067 = vunpack.c.l.b16 %v3789
  %v4068 = vunpack.c.h.b16 %v3789
  %v4069 = vunpack.c.l.b16 %v3790
  %v4070 = vunpack.c.h.b16 %v3790
  %v4071 = vunpack.c.l.b16 %v3791
  %v4072 = vunpack.c.h.b16 %v3791
  %v4073 = vunpack.c.l.b16 %v3792
  %v4074 = vunpack.c.h.b16 %v3792
  %v4075 = vunpack.c.l.b16 %v3793
  %v4076 = vunpack.c.h.b16 %v3793
  %v4077 = vunpack.c.l.b16 %v3794
  %v4078 = vunpack.c.h.b16 %v3794
  %v4079 = vunpack.c.l.b16 %v3795
  %v4080 = vunpack.c.h.b16 %v3795
  %v4081 = vunpack.c.l.b16 %v3796
  %v4082 = vunpack.c.h.b16 %v3796
  %v4083 = vunpack.c.l.b16 %v3797
  %v4084 = vunpack.c.h.b16 %v3797
  %v4085 = vunpack.c.l.b16 %v3798
  %v4086 = vunpack.c.h.b16 %v3798
  %v4087 = vunpack.c.l.b16 %v3799
  %v4088 = vunpack.c.h.b16 %v3799
  %v4089 = vunpack.c.l.b16 %v3800
  %v4090 = vunpack.c.h.b16 %v3800
  %v4091 = vunpack.c.l.b16 %v3801
  %v4092 = vunpack.c.h.b16 %v3801
  %v4093 = vunpack.c.l.b16 %v3802
  %v4094 = vunpack.c.h.b16 %v3802
  %v4095 = vunpack.c.l.b16 %v3803
  %v4096 = vunpack.c.h.b16 %v3803
  %v4097 = vunpack.c.l.b16 %v3804
  %v4098 = vunpack.c.h.b16 %v3804
  %v4099 = vunpack.c.l.b16 %v3805
  %v4100 = vunpack.c.h.b16 %v3805
  %v4101 = vunpack.c.l.b16 %v3806
  %v4102 = vunpack.c.h.b16 %v3806
  %v4103 = vunpack.c.l.b16 %v3807
  %v4104 = vunpack.c.h.b16 %v3807
  %v4105 = vunpack.c.l.b16 %v3808
  %v4106 = vunpack.c.h.b16 %v3808
  %v4107 = vunpack.c.l.b16 %v3809
  %v4108 = vunpack.c.h.b16 %v3809
  %v4109 = vunpack.c.l.b16 %v3810
  %v4110 = vunpack.c.h.b16 %v3810
  %v4111 = vunpack.c.l.b16 %v3811
  %v4112 = vunpack.c.h.b16 %v3811
  %v4113 = vunpack.c.l.b16 %v3812
  %v4114 = vunpack.c.h.b16 %v3812
  %v4115 = vunpack.c.l.b16 %v3813
  %v4116 = vunpack.c.h.b16 %v3813
  %v4117 = vunpack.c.l.b16 %v3814
  %v4118 = vunpack.c.h.b16 %v3814
  %v4119 = vunpack.c.l.b16 %v3815
  %v4120 = vunpack.c.h.b16 %v3815
  %v4121 = vunpack.c.l.b16 %v3816
  %v4122 = vunpack.c.h.b16 %v3816
  %v4123 = vunpack.c.l.b16 %v3817
  %v4124 = vunpack.c.h.b16 %v3817
  %v4125 = vunpack.c.l.b16 %v3818
  %v4126 = vunpack.c.h.b16 %v3818
  %v4127 = vunpack.c.l.b16 %v3819
  %v4128 = vunpack.c.h.b16 %v3819
  %v4129 = vunpack.c.l.b16 %v3820
  %v4130 = vunpack.c.h.b16 %v3820
  %v4131 = vunpack.c.l.b16 %v3821
  %v4132 = vunpack.c.h.b16 %v3821
  %v4133 = vunpack.c.l.b16 %v3822
  %v4134 = vunpack.c.h.b16 %v3822
  %v4135 = vunpack.c.l.b16 %v3823
  %v4136 = vunpack.c.h.b16 %v3823
  %v4137 = vunpack.c.l.b16 %v3824
  %v4138 = vunpack.c.h.b16 %v3824
  %v4139 = vunpack.c.l.b16 %v3825
  %v4140 = vunpack.c.h.b16 %v3825
  %v4141 = vunpack.c.l.b16 %v3826
  %v4142 = vunpack.c.h.b16 %v3826
  %v4143 = vunpack.c.l.b16 %v3827
  %v4144 = vunpack.c.h.b16 %v3827
  %v4145 = vunpack.c.l.b16 %v3828
  %v4146 = vunpack.c.h.b16 %v3828
  %v4147 = vunpack.c.l.b16 %v3829
  %v4148 = vunpack.c.h.b16 %v3829
  %v4149 = vunpack.c.l.b16 %v3830
  %v4150 = vunpack.c.h.b16 %v3830
  %v4151 = vunpack.c.l.b16 %v3831
  %v4152 = vunpack.c.h.b16 %v3831
  %v4153 = vunpack.c.l.b16 %v3832
  %v4154 = vunpack.c.h.b16 %v3832
  %v4155 = vunpack.c.l.b16 %v3833
  %v4156 = vunpack.c.h.b16 %v3833
  %v4157 = vunpack.c.l.b16 %v3834
  %v4158 = vunpack.c.h.b16 %v3834
  %v4159 = vunpack.c.l.b16 %v3835
  %v4160 = vunpack.c.h.b16 %v3835
  %v4161 = vunpack.c.l.b16 %v3836
  %v4162 = vunpack.c.h.b16 %v3836
  %v4163 = vunpack.c.l.b16 %v3837
  %v4164 = vunpack.c.h.b16 %v3837
  %v4165 = vunpack.c.l.b16 %v3838
  %v4166 = vunpack.c.h.b16 %v3838
  %v4167 = vunpack.c.l.b16 %v3839
  %v4168 = vunpack.c.h.b16 %v3839
  %v4169 = vunpack.c.l.b16 %v3840
  %v4170 = vunpack.c.h.b16 %v3840
  %v4171 = vunpack.c.l.b16 %v3841
  %v4172 = vunpack.c.h.b16 %v3841
  %v4173 = vunpack.c.l.b16 %v3842
  %v4174 = vunpack.c.h.b16 %v3842
  %v4175 = vunpack.c.l.b16 %v3843
  %v4176 = vunpack.c.h.b16 %v3843
  %v4177 = vunpack.c.l.b16 %v3844
  %v4178 = vunpack.c.h.b16 %v3844
  %v4179 = vunpack.c.l.b16 %v3845
  %v4180 = vunpack.c.h.b16 %v3845
  %v4181 = vunpack.c.l.b16 %v3846
  %v4182 = vunpack.c.h.b16 %v3846
  %v4183 = vunpack.c.l.b16 %v3847
  %v4184 = vunpack.c.h.b16 %v3847
  %v4185 = vunpack.c.l.b16 %v3848
  %v4186 = vunpack.c.h.b16 %v3848
  %v4187 = vunpack.c.l.b16 %v3849
  %v4188 = vunpack.c.h.b16 %v3849
  %v4189 = vunpack.c.l.b16 %v3850
  %v4190 = vunpack.c.h.b16 %v3850
  %v4191 = vunpack.c.l.b16 %v3851
  %v4192 = vunpack.c.h.b16 %v3851
  %v4193 = vunpack.c.l.b16 %v3852
  %v4194 = vunpack.c.h.b16 %v3852
  %v4195 = vunpack.c.l.b16 %v3853
  %v4196 = vunpack.c.h.b16 %v3853
  %v4197 = vunpack.c.l.b16 %v3854
  %v4198 = vunpack.c.h.b16 %v3854
  %v4199 = vunpack.c.l.b16 %v3855
  %v4200 = vunpack.c.h.b16 %v3855
  %v4201 = vunpack.c.l.b16 %v3856
  %v4202 = vunpack.c.h.b16 %v3856
  %v4203 = vunpack.c.l.b16 %v3857
  %v4204 = vunpack.c.h.b16 %v3857
  %v4205 = vunpack.c.l.b16 %v3858
  %v4206 = vunpack.c.h.b16 %v3858
  %v4207 = vunpack.c.l.b16 %v3859
  %v4208 = vunpack.c.h.b16 %v3859
  %v4209 = vunpack.c.l.b16 %v3860
  %v4210 = vunpack.c.h.b16 %v3860
  %v4211 = vunpack.c.l.b16 %v3861
  %v4212 = vunpack.c.h.b16 %v3861
  %v4213 = vunpack.c.l.b16 %v3862
  %v4214 = vunpack.c.h.b16 %v3862
  %v4215 = vunpack.c.l.b16 %v3863
  %v4216 = vunpack.c.h.b16 %v3863
  %v4217 = vunpack.c.l.b16 %v3864
  %v4218 = vunpack.c.h.b16 %v3864
  %v4219 = vunpack.c.l.b16 %v3865
  %v4220 = vunpack.c.h.b16 %v3865
  %v4221 = vunpack.c.l.b16 %v3866
  %v4222 = vunpack.c.h.b16 %v3866
  %v4223 = vunpack.c.l.b16 %v3867
  %v4224 = vunpack.c.h.b16 %v3867
  %v4225 = vunpack.c.l.b16 %v3868
  %v4226 = vunpack.c.h.b16 %v3868
  %v4227 = vunpack.c.l.b16 %v3869
  %v4228 = vunpack.c.h.b16 %v3869
  %v4229 = vunpack.c.l.b16 %v3870
  %v4230 = vunpack.c.h.b16 %v3870
  %v4231 = vunpack.c.l.b16 %v3871
  %v4232 = vunpack.c.h.b16 %v3871
  %v4233 = vunpack.c.l.b16 %v3872
  %v4234 = vunpack.c.h.b16 %v3872
  %v4235 = vunpack.c.l.b16 %v3873
  %v4236 = vunpack.c.h.b16 %v3873
  %v4237 = vunpack.c.l.b16 %v3874
  %v4238 = vunpack.c.h.b16 %v3874
  %v4239 = vunpack.c.l.b16 %v3875
  %v4240 = vunpack.c.h.b16 %v3875
  %v4241 = vunpack.c.l.b16 %v3876
  %v4242 = vunpack.c.h.b16 %v3876
  %v4243 = vunpack.c.l.b16 %v3877
  %v4244 = vunpack.c.h.b16 %v3877
  %v4245 = vunpack.c.l.b16 %v3878
  %v4246 = vunpack.c.h.b16 %v3878
  %v4247 = vunpack.c.l.b16 %v3879
  %v4248 = vunpack.c.h.b16 %v3879
  %v4249 = vunpack.c.l.b16 %v3880
  %v4250 = vunpack.c.h.b16 %v3880
  %v4251 = vunpack.c.l.b16 %v3881
  %v4252 = vunpack.c.h.b16 %v3881
  %v4253 = vunpack.c.l.b16 %v3882
  %v4254 = vunpack.c.h.b16 %v3882
  %v4255 = vunpack.c.l.b16 %v3883
  %v4256 = vunpack.c.h.b16 %v3883
  %v4257 = vunpack.c.l.b16 %v3884
  %v4258 = vunpack.c.h.b16 %v3884
  %v4259 = vunpack.c.l.b16 %v3885
  %v4260 = vunpack.c.h.b16 %v3885
  %v4261 = vunpack.c.l.b16 %v3886
  %v4262 = vunpack.c.h.b16 %v3886
  %v4263 = vunpack.c.l.b16 %v3887
  %v4264 = vunpack.c.h.b16 %v3887
  %v4265 = vunpack.c.l.b16 %v3888
  %v4266 = vunpack.c.h.b16 %v3888
  %v4267 = vunpack.c.l.b16 %v3889
  %v4268 = vunpack.c.h.b16 %v3889
  %v4269 = vunpack.c.l.b16 %v3890
  %v4270 = vunpack.c.h.b16 %v3890
  %v4271 = vunpack.c.l.b16 %v3891
  %v4272 = vunpack.c.h.b16 %v3891
  %v4273 = vunpack.c.l.b16 %v3892
  %v4274 = vunpack.c.h.b16 %v3892
  %v4275 = vunpack.c.l.b16 %v3893
  %v4276 = vunpack.c.h.b16 %v3893
  %v4277 = vunpack.c.l.b16 %v3894
  %v4278 = vunpack.c.h.b16 %v3894
  %v4279 = vunpack.c.l.b16 %v3895
  %v4280 = vunpack.c.h.b16 %v3895
  %v4281 = vunpack.c.l.b16 %v3896
  %v4282 = vunpack.c.h.b16 %v3896
  %v4283 = vunpack.c.l.b16 %v3897
  %v4284 = vunpack.c.h.b16 %v3897
  %v4285 = vunpack.c.l.b16 %v3898
  %v4286 = vunpack.c.h.b16 %v3898
  %v4287 = vunpack.c.l.b16 %v3899
  %v4288 = vunpack.c.h.b16 %v3899
  %v4289 = vunpack.c.l.b16 %v3900
  %v4290 = vunpack.c.h.b16 %v3900
  %v4291 = vunpack.c.l.b16 %v3901
  %v4292 = vunpack.c.h.b16 %v3901
  %v4293 = vunpack.c.l.b16 %v3902
  %v4294 = vunpack.c.h.b16 %v3902
  %v4295 = vpack.c.b16 %v4043, %v4039
  %v4296 = vpack.c.b16 %v4044, %v4040
  %v4297 = vpack.c.b16 %v4045, %v4041
  %v4298 = vpack.c.b16 %v4046, %v4042
  %v4299 = vpack.c.b16 %v4051, %v4047
  %v4300 = vpack.c.b16 %v4052, %v4048
  %v4301 = vpack.c.b16 %v4053, %v4049
  %v4302 = vpack.c.b16 %v4054, %v4050
  %v4303 = vpack.c.b16 %v4059, %v4055
  %v4304 = vpack.c.b16 %v4060, %v4056
  %v4305 = vpack.c.b16 %v4061, %v4057
  %v4306 = vpack.c.b16 %v4062, %v4058
  %v4307 = vpack.c.b16 %v4067, %v4063
  %v4308 = vpack.c.b16 %v4068, %v4064
  %v4309 = vpack.c.b16 %v4069, %v4065
  %v4310 = vpack.c.b16 %v4070, %v4066
  %v4311 = vpack.c.b16 %v4075, %v4071
  %v4312 = vpack.c.b16 %v4076, %v4072
  %v4313 = vpack.c.b16 %v4077, %v4073
  %v4314 = vpack.c.b16 %v4078, %v4074
  %v4315 = vpack.c.b16 %v4083, %v4079
  %v4316 = vpack.c.b16 %v4084, %v4080
  %v4317 = vpack.c.b16 %v4085, %v4081
  %v4318 = vpack.c.b16 %v4086, %v4082
  %v4319 = vpack.c.b16 %v4091, %v4087
  %v4320 = vpack.c.b16 %v4092, %v4088
  %v4321 = vpack.c.b16 %v4093, %v4089
  %v4322 = vpack.c.b16 %v4094, %v4090
  %v4323 = vpack.c.b16 %v4099, %v4095
  %v4324 = vpack.c.b16 %v4100, %v4096
  %v4325 = vpack.c.b16 %v4101, %v4097
  %v4326 = vpack.c.b16 %v4102, %v4098
  %v4327 = vpack.c.b16 %v4107, %v4103
  %v4328 = vpack.c.b16 %v4108, %v4104
  %v4329 = vpack.c.b16 %v4109, %v4105
  %v4330 = vpack.c.b16 %v4110, %v4106
  %v4331 = vpack.c.b16 %v4115, %v4111
  %v4332 = vpack.c.b16 %v4116, %v4112
  %v4333 = vpack.c.b16 %v4117, %v4113
  %v4334 = vpack.c.b16 %v4118, %v4114
  %v4335 = vpack.c.b16 %v4123, %v4119
  %v4336 = vpack.c.b16 %v4124, %v4120
  %v4337 = vpack.c.b16 %v4125, %v4121
  %v4338 = vpack.c.b16 %v4126, %v4122
  %v4339 = vpack.c.b16 %v4131, %v4127
  %v4340 = vpack.c.b16 %v4132, %v4128
  %v4341 = vpack.c.b16 %v4133, %v4129
  %v4342 = vpack.c.b16 %v4134, %v4130
  %v4343 = vpack.c.b16 %v4139, %v4135
  %v4344 = vpack.c.b16 %v4140, %v4136
  %v4345 = vpack.c.b16 %v4141, %v4137
  %v4346 = vpack.c.b16 %v4142, %v4138
  %v4347 = vpack.c.b16 %v4147, %v4143
  %v4348 = vpack.c.b16 %v4148, %v4144
  %v4349 = vpack.c.b16 %v4149, %v4145
  %v4350 = vpack.c.b16 %v4150, %v4146
  %v4351 = vpack.c.b16 %v4155, %v4151
  %v4352 = vpack.c.b16 %v4156, %v4152
  %v4353 = vpack.c.b16 %v4157, %v4153
  %v4354 = vpack.c.b16 %v4158, %v4154
  %v4355 = vpack.c.b16 %v4163, %v4159
  %v4356 = vpack.c.b16 %v4164, %v4160
  %v4357 = vpack.c.b16 %v4165, %v4161
  %v4358 = vpack.c.b16 %v4166, %v4162
  %v4359 = vpack.c.b16 %v4171, %v4167
  %v4360 = vpack.c.b16 %v4172, %v4168
  %v4361 = vpack.c.b16 %v4173, %v4169
  %v4362 = vpack.c.b16 %v4174, %v4170
  %v4363 = vpack.c.b16 %v4179, %v4175
  %v4364 = vpack.c.b16 %v4180, %v4176
  %v4365 = vpack.c.b16 %v4181, %v4177
  %v4366 = vpack.c.b16 %v4182, %v4178
  %v4367 = vpack.c.b16 %v4187, %v4183
  %v4368 = vpack.c.b16 %v4188, %v4184
  %v4369 = vpack.c.b16 %v4189, %v4185
  %v4370 = vpack.c.b16 %v4190, %v4186
  %v4371 = vpack.c.b16 %v4195, %v4191
  %v4372 = vpack.c.b16 %v4196, %v4192
  %v4373 = vpack.c.b16 %v4197, %v4193
  %v4374 = vpack.c.b16 %v4198, %v4194
  %v4375 = vpack.c.b16 %v4203, %v4199
  %v4376 = vpack.c.b16 %v4204, %v4200
  %v4377 = vpack.c.b16 %v4205, %v4201
  %v4378 = vpack.c.b16 %v4206, %v4202
  %v4379 = vpack.c.b16 %v4211, %v4207
  %v4380 = vpack.c.b16 %v4212, %v4208
  %v4381 = vpack.c.b16 %v4213, %v4209
  %v4382 = vpack.c.b16 %v4214, %v4210
  %v4383 = vpack.c.b16 %v4219, %v4215
  %v4384 = vpack.c.b16 %v4220, %v4216
  %v4385 = vpack.c.b16 %v4221, %v4217
  %v4386 = vpack.c.b16 %v4222, %v4218
  %v4387 = vpack.c.b16 %v4227, %v4223
  %v4388 = vpack.c.b16 %v4228, %v4224
  %v4389 = vpack.c.b16 %v4229, %v4225
  %v4390 = vpack.c.b16 %v4230, %v4226
  %v4391 = vpack.c.b16 %v4235, %v4231
  %v4392 = vpack.c.b16 %v4236, %v4232
  %v4393 = vpack.c.b16 %v4237, %v4233
  %v4394 = vpack.c.b16 %v4238, %v4234
  %v4395 = vpack.c.b16 %v4243, %v4239
  %v4396 = vpack.c.b16 %v4244, %v4240
  %v4397 = vpack.c.b16 %v4245, %v4241
  %v4398 = vpack.c.b16 %v4246, %v4242
  %v4399 = vpack.c.b16 %v4251, %v4247
  %v4400 = vpack.c.b16 %v4252, %v4248
  %v4401 = vpack.c.b16 %v4253, %v4249
  %v4402 = vpack.c.b16 %v4254, %v4250
  %v4403 = vpack.c.b16 %v4259, %v4255
  %v4404 = vpack.c.b16 %v4260, %v4256
  %v4405 = vpack.c.b16 %v4261, %v4257
  %v4406 = vpack.c.b16 %v4262, %v4258
  %v4407 = vpack.c.b16 %v4267, %v4263
  %v4408 = vpack.c.b16 %v4268, %v4264
  %v4409 = vpack.c.b16 %v4269, %v4265
  %v4410 = vpack.c.b16 %v4270, %v4266
  %v4411 = vpack.c.b16 %v4275, %v4271
  %v4412 = vpack.c.b16 %v4276, %v4272
  %v4413 = vpack.c.b16 %v4277, %v4273
  %v4414 = vpack.c.b16 %v4278, %v4274
  %v4415 = vpack.c.b16 %v4283, %v4279
  %v4416 = vpack.c.b16 %v4284, %v4280
  %v4417 = vpack.c.b16 %v4285, %v4281
  %v4418 = vpack.c.b16 %v4286, %v4282
  %v4419 = vpack.c.b16 %v4291, %v4287
  %v4420 = vpack.c.b16 %v4292, %v4288
  %v4421 = vpack.c.b16 %v4293, %v4289
  %v4422 = vpack.c.b16 %v4294, %v4290
  %4551 = vmatprep.subr.bf16.mxu0 %v4296
  %4552 = vmatpush1.bf16.msra.mxu0 %v4295
  %4553 = vmatprep.subr.bf16.mxu0 %v4300
  %4554 = vmatpush1.bf16.msra.mxu0 %v4299
  %4555 = vmatprep.subr.bf16.mxu0 %v4304
  %4556 = vmatpush1.bf16.msra.mxu0 %v4303
  %4557 = vmatprep.subr.bf16.mxu0 %v4308
  %4558 = vmatpush1.bf16.msra.mxu0 %v4307
  %4559 = vmatprep.subr.bf16.mxu0 %v4312
  %4560 = vmatpush1.bf16.msra.mxu0 %v4311
  %4561 = vmatprep.subr.bf16.mxu0 %v4316
  %4562 = vmatpush1.bf16.msra.mxu0 %v4315
  %4563 = vmatprep.subr.bf16.mxu0 %v4320
  %4564 = vmatpush1.bf16.msra.mxu0 %v4319
  %4565 = vmatprep.subr.bf16.mxu0 %v4324
  %4566 = vmatpush1.bf16.msra.mxu0 %v4323
  %4567 = vmatprep.subr.bf16.mxu0 %v4328
  %4568 = vmatpush1.bf16.msra.mxu0 %v4327
  %4569 = vmatprep.subr.bf16.mxu0 %v4332
  %4570 = vmatpush1.bf16.msra.mxu0 %v4331
  %4571 = vmatprep.subr.bf16.mxu0 %v4336
  %4572 = vmatpush1.bf16.msra.mxu0 %v4335
  %4573 = vmatprep.subr.bf16.mxu0 %v4340
  %4574 = vmatpush1.bf16.msra.mxu0 %v4339
  %4575 = vmatprep.subr.bf16.mxu0 %v4344
  %4576 = vmatpush1.bf16.msra.mxu0 %v4343
  %4577 = vmatprep.subr.bf16.mxu0 %v4348
  %4578 = vmatpush1.bf16.msra.mxu0 %v4347
  %4579 = vmatprep.subr.bf16.mxu0 %v4352
  %4580 = vmatpush1.bf16.msra.mxu0 %v4351
  %4581 = vmatprep.subr.bf16.mxu0 %v4356
  %4582 = vmatpush1.bf16.msra.mxu0 %v4355
  %4583 = vmatprep.mubr.bf16.mxu0 %v3904
  %4584 = vmatmul.mubr.bf16.gmra.mrb[0].mxu0 %v3903
  %v4585 = vpop.f32.mrb[0].mxu0
  %v4586 = vadd.f32 0.0, %v4585
  %v4587 = vpop.f32.mrb[0].mxu0
  %v4588 = vadd.f32 0.0, %v4587
  %v4589 = vpop.f32.mrb[0].mxu0
  %v4590 = vadd.f32 0.0, %v4589
  %v4591 = vpop.f32.mrb[0].mxu0
  %v4592 = vadd.f32 0.0, %v4591
  %4593 = vmatprep.mubr.bf16.mxu0 %v3908
  %4594 = vmatmul.mubr.bf16.gmra.mrb[0].mxu0 %v3907
  %v4595 = vpop.f32.mrb[0].mxu0
  %v4596 = vadd.f32 0.0, %v4595
  %v4597 = vpop.f32.mrb[0].mxu0
  %v4598 = vadd.f32 0.0, %v4597
  %v4599 = vpop.f32.mrb[0].mxu0
  %v4600 = vadd.f32 0.0, %v4599
  %v4601 = vpop.f32.mrb[0].mxu0
  %v4602 = vadd.f32 0.0, %v4601
  %4603 = vdwg.mxu0
  %4604 = vmatprep.subr.bf16.mxu0 %v4360
  %4605 = vmatpush1.bf16.msra.mxu0 %v4359
  %4606 = vmatprep.subr.bf16.mxu0 %v4364
  %4607 = vmatpush1.bf16.msra.mxu0 %v4363
  %4608 = vmatprep.subr.bf16.mxu0 %v4368
  %4609 = vmatpush1.bf16.msra.mxu0 %v4367
  %4610 = vmatprep.subr.bf16.mxu0 %v4372
  %4611 = vmatpush1.bf16.msra.mxu0 %v4371
  %4612 = vmatprep.subr.bf16.mxu0 %v4376
  %4613 = vmatpush1.bf16.msra.mxu0 %v4375
  %4614 = vmatprep.subr.bf16.mxu0 %v4380
  %4615 = vmatpush1.bf16.msra.mxu0 %v4379
  %4616 = vmatprep.subr.bf16.mxu0 %v4384
  %4617 = vmatpush1.bf16.msra.mxu0 %v4383
  %4618 = vmatprep.subr.bf16.mxu0 %v4388
  %4619 = vmatpush1.bf16.msra.mxu0 %v4387
  %4620 = vmatprep.subr.bf16.mxu0 %v4392
  %4621 = vmatpush1.bf16.msra.mxu0 %v4391
  %4622 = vmatprep.subr.bf16.mxu0 %v4396
  %4623 = vmatpush1.bf16.msra.mxu0 %v4395
  %4624 = vmatprep.subr.bf16.mxu0 %v4400
  %4625 = vmatpush1.bf16.msra.mxu0 %v4399
  %4626 = vmatprep.subr.bf16.mxu0 %v4404
  %4627 = vmatpush1.bf16.msra.mxu0 %v4403
  %4628 = vmatprep.subr.bf16.mxu0 %v4408
  %4629 = vmatpush1.bf16.msra.mxu0 %v4407
  %4630 = vmatprep.subr.bf16.mxu0 %v4412
  %4631 = vmatpush1.bf16.msra.mxu0 %v4411
  %4632 = vmatprep.subr.bf16.mxu0 %v4416
  %4633 = vmatpush1.bf16.msra.mxu0 %v4415
  %4634 = vmatprep.subr.bf16.mxu0 %v4420
  %4635 = vmatpush1.bf16.msra.mxu0 %v4419
  %4636 = vmatprep.mubr.bf16.mxu0 %v3906
  %4637 = vmatmul.mubr.bf16.gmra.mrb[0].mxu0 %v3905
  %v4638 = vpop.f32.mrb[0].mxu0
  %v4639 = vadd.f32 %v4586, %v4638
  %v4640 = vpop.f32.mrb[0].mxu0
  %v4641 = vadd.f32 %v4588, %v4640
  %v4642 = vpop.f32.mrb[0].mxu0
  %v4643 = vadd.f32 %v4590, %v4642
  %v4644 = vpop.f32.mrb[0].mxu0
  %v4645 = vadd.f32 %v4592, %v4644
  %4646 = vmatprep.mubr.bf16.mxu0 %v3910
  %4647 = vmatmul.mubr.bf16.gmra.mrb[0].mxu0 %v3909
  %v4648 = vpop.f32.mrb[0].mxu0
  %v4649 = vadd.f32 %v4596, %v4648
  %v4650 = vpop.f32.mrb[0].mxu0
  %v4651 = vadd.f32 %v4598, %v4650
  %v4652 = vpop.f32.mrb[0].mxu0
  %v4653 = vadd.f32 %v4600, %v4652
  %v4654 = vpop.f32.mrb[0].mxu0
  %v4655 = vadd.f32 %v4602, %v4654
  %4656 = vdwg.mxu0
  %4657 = vmatprep.subr.bf16.mxu0 %v4298
  %4658 = vmatpush1.bf16.msra.mxu0 %v4297
  %4659 = vmatprep.subr.bf16.mxu0 %v4302
  %4660 = vmatpush1.bf16.msra.mxu0 %v4301
  %4661 = vmatprep.subr.bf16.mxu0 %v4306
  %4662 = vmatpush1.bf16.msra.mxu0 %v4305
  %4663 = vmatprep.subr.bf16.mxu0 %v4310
  %4664 = vmatpush1.bf16.msra.mxu0 %v4309
  %4665 = vmatprep.subr.bf16.mxu0 %v4314
  %4666 = vmatpush1.bf16.msra.mxu0 %v4313
  %4667 = vmatprep.subr.bf16.mxu0 %v4318
  %4668 = vmatpush1.bf16.msra.mxu0 %v4317
  %4669 = vmatprep.subr.bf16.mxu0 %v4322
  %4670 = vmatpush1.bf16.msra.mxu0 %v4321
  %4671 = vmatprep.subr.bf16.mxu0 %v4326
  %4672 = vmatpush1.bf16.msra.mxu0 %v4325
  %4673 = vmatprep.subr.bf16.mxu0 %v4330
  %4674 = vmatpush1.bf16.msra.mxu0 %v4329
  %4675 = vmatprep.subr.bf16.mxu0 %v4334
  %4676 = vmatpush1.bf16.msra.mxu0 %v4333
  %4677 = vmatprep.subr.bf16.mxu0 %v4338
  %4678 = vmatpush1.bf16.msra.mxu0 %v4337
  %4679 = vmatprep.subr.bf16.mxu0 %v4342
  %4680 = vmatpush1.bf16.msra.mxu0 %v4341
  %4681 = vmatprep.subr.bf16.mxu0 %v4346
  %4682 = vmatpush1.bf16.msra.mxu0 %v4345
  %4683 = vmatprep.subr.bf16.mxu0 %v4350
  %4684 = vmatpush1.bf16.msra.mxu0 %v4349
  %4685 = vmatprep.subr.bf16.mxu0 %v4354
  %4686 = vmatpush1.bf16.msra.mxu0 %v4353
  %4687 = vmatprep.subr.bf16.mxu0 %v4358
  %4688 = vmatpush1.bf16.msra.mxu0 %v4357
  %4689 = vmatprep.mubr.bf16.mxu0 %v3904
  %4690 = vmatmul.mubr.bf16.gmra.mrb[0].mxu0 %v3903
  %v4691 = vpop.f32.mrb[0].mxu0
  %v4692 = vadd.f32 0.0, %v4691
  %v4693 = vpop.f32.mrb[0].mxu0
  %v4694 = vadd.f32 0.0, %v4693
  %v4695 = vpop.f32.mrb[0].mxu0
  %v4696 = vadd.f32 0.0, %v4695
  %v4697 = vpop.f32.mrb[0].mxu0
  %v4698 = vadd.f32 0.0, %v4697
  %4699 = vmatprep.mubr.bf16.mxu0 %v3908
  %4700 = vmatmul.mubr.bf16.gmra.mrb[0].mxu0 %v3907
  %v4701 = vpop.f32.mrb[0].mxu0
  %v4702 = vadd.f32 0.0, %v4701
  %v4703 = vpop.f32.mrb[0].mxu0
  %v4704 = vadd.f32 0.0, %v4703
  %v4705 = vpop.f32.mrb[0].mxu0
  %v4706 = vadd.f32 0.0, %v4705
  %v4707 = vpop.f32.mrb[0].mxu0
  %v4708 = vadd.f32 0.0, %v4707
  %4709 = vdwg.mxu0
  %4710 = vmatprep.subr.bf16.mxu0 %v4362
  %4711 = vmatpush1.bf16.msra.mxu0 %v4361
  %4712 = vmatprep.subr.bf16.mxu0 %v4366
  %4713 = vmatpush1.bf16.msra.mxu0 %v4365
  %4714 = vmatprep.subr.bf16.mxu0 %v4370
  %4715 = vmatpush1.bf16.msra.mxu0 %v4369
  %4716 = vmatprep.subr.bf16.mxu0 %v4374
  %4717 = vmatpush1.bf16.msra.mxu0 %v4373
  %4718 = vmatprep.subr.bf16.mxu0 %v4378
  %4719 = vmatpush1.bf16.msra.mxu0 %v4377
  %4720 = vmatprep.subr.bf16.mxu0 %v4382
  %4721 = vmatpush1.bf16.msra.mxu0 %v4381
  %4722 = vmatprep.subr.bf16.mxu0 %v4386
  %4723 = vmatpush1.bf16.msra.mxu0 %v4385
  %4724 = vmatprep.subr.bf16.mxu0 %v4390
  %4725 = vmatpush1.bf16.msra.mxu0 %v4389
  %4726 = vmatprep.subr.bf16.mxu0 %v4394
  %4727 = vmatpush1.bf16.msra.mxu0 %v4393
  %4728 = vmatprep.subr.bf16.mxu0 %v4398
  %4729 = vmatpush1.bf16.msra.mxu0 %v4397
  %4730 = vmatprep.subr.bf16.mxu0 %v4402
  %4731 = vmatpush1.bf16.msra.mxu0 %v4401
  %4732 = vmatprep.subr.bf16.mxu0 %v4406
  %4733 = vmatpush1.bf16.msra.mxu0 %v4405
  %4734 = vmatprep.subr.bf16.mxu0 %v4410
  %4735 = vmatpush1.bf16.msra.mxu0 %v4409
  %4736 = vmatprep.subr.bf16.mxu0 %v4414
  %4737 = vmatpush1.bf16.msra.mxu0 %v4413
  %4738 = vmatprep.subr.bf16.mxu0 %v4418
  %4739 = vmatpush1.bf16.msra.mxu0 %v4417
  %4740 = vmatprep.subr.bf16.mxu0 %v4422
  %4741 = vmatpush1.bf16.msra.mxu0 %v4421
  %4742 = vmatprep.mubr.bf16.mxu0 %v3906
  %4743 = vmatmul.mubr.bf16.gmra.mrb[0].mxu0 %v3905
  %v4744 = vpop.f32.mrb[0].mxu0
  %v4745 = vadd.f32 %v4692, %v4744
  %v4746 = vpop.f32.mrb[0].mxu0
  %v4747 = vadd.f32 %v4694, %v4746
  %v4748 = vpop.f32.mrb[0].mxu0
  %v4749 = vadd.f32 %v4696, %v4748
  %v4750 = vpop.f32.mrb[0].mxu0
  %v4751 = vadd.f32 %v4698, %v4750
  %4752 = vmatprep.mubr.bf16.mxu0 %v3910
  %4753 = vmatmul.mubr.bf16.gmra.mrb[0].mxu0 %v3909
  %v4754 = vpop.f32.mrb[0].mxu0
  %v4755 = vadd.f32 %v4702, %v4754
  %v4756 = vpop.f32.mrb[0].mxu0
  %v4757 = vadd.f32 %v4704, %v4756
  %v4758 = vpop.f32.mrb[0].mxu0
  %v4759 = vadd.f32 %v4706, %v4758
  %v4760 = vpop.f32.mrb[0].mxu0
  %v4761 = vadd.f32 %v4708, %v4760
  %4762 = vdwg.mxu0
  %v4891 = vunpack.c.l.b16 %v3623
  %v4892 = vunpack.c.h.b16 %v3623
  %v4893 = vunpack.c.l.b16 %v3624
  %v4894 = vunpack.c.h.b16 %v3624
  %v4895 = vunpack.c.l.b16 %v3625
  %v4896 = vunpack.c.h.b16 %v3625
  %v4897 = vunpack.c.l.b16 %v3626
  %v4898 = vunpack.c.h.b16 %v3626
  %v4899 = vunpack.c.l.b16 %v3627
  %v4900 = vunpack.c.h.b16 %v3627
  %v4901 = vunpack.c.l.b16 %v3628
  %v4902 = vunpack.c.h.b16 %v3628
  %v4903 = vunpack.c.l.b16 %v3629
  %v4904 = vunpack.c.h.b16 %v3629
  %v4905 = vunpack.c.l.b16 %v3630
  %v4906 = vunpack.c.h.b16 %v3630
  %v4907 = vunpack.c.l.b16 %v3631
  %v4908 = vunpack.c.h.b16 %v3631
  %v4909 = vunpack.c.l.b16 %v3632
  %v4910 = vunpack.c.h.b16 %v3632
  %v4911 = vunpack.c.l.b16 %v3633
  %v4912 = vunpack.c.h.b16 %v3633
  %v4913 = vunpack.c.l.b16 %v3634
  %v4914 = vunpack.c.h.b16 %v3634
  %v4915 = vunpack.c.l.b16 %v3635
  %v4916 = vunpack.c.h.b16 %v3635
  %v4917 = vunpack.c.l.b16 %v3636
  %v4918 = vunpack.c.h.b16 %v3636
  %v4919 = vunpack.c.l.b16 %v3637
  %v4920 = vunpack.c.h.b16 %v3637
  %v4921 = vunpack.c.l.b16 %v3638
  %v4922 = vunpack.c.h.b16 %v3638
  %v4923 = vunpack.c.l.b16 %v3639
  %v4924 = vunpack.c.h.b16 %v3639
  %v4925 = vunpack.c.l.b16 %v3640
  %v4926 = vunpack.c.h.b16 %v3640
  %v4927 = vunpack.c.l.b16 %v3641
  %v4928 = vunpack.c.h.b16 %v3641
  %v4929 = vunpack.c.l.b16 %v3642
  %v4930 = vunpack.c.h.b16 %v3642
  %v4931 = vunpack.c.l.b16 %v3643
  %v4932 = vunpack.c.h.b16 %v3643
  %v4933 = vunpack.c.l.b16 %v3644
  %v4934 = vunpack.c.h.b16 %v3644
  %v4935 = vunpack.c.l.b16 %v3645
  %v4936 = vunpack.c.h.b16 %v3645
  %v4937 = vunpack.c.l.b16 %v3646
  %v4938 = vunpack.c.h.b16 %v3646
  %v4939 = vunpack.c.l.b16 %v3647
  %v4940 = vunpack.c.h.b16 %v3647
  %v4941 = vunpack.c.l.b16 %v3648
  %v4942 = vunpack.c.h.b16 %v3648
  %v4943 = vunpack.c.l.b16 %v3649
  %v4944 = vunpack.c.h.b16 %v3649
  %v4945 = vunpack.c.l.b16 %v3650
  %v4946 = vunpack.c.h.b16 %v3650
  %v4947 = vunpack.c.l.b16 %v3651
  %v4948 = vunpack.c.h.b16 %v3651
  %v4949 = vunpack.c.l.b16 %v3652
  %v4950 = vunpack.c.h.b16 %v3652
  %v4951 = vunpack.c.l.b16 %v3653
  %v4952 = vunpack.c.h.b16 %v3653
  %v4953 = vunpack.c.l.b16 %v3654
  %v4954 = vunpack.c.h.b16 %v3654
  %v4955 = vunpack.c.l.b16 %v3655
  %v4956 = vunpack.c.h.b16 %v3655
  %v4957 = vunpack.c.l.b16 %v3656
  %v4958 = vunpack.c.h.b16 %v3656
  %v4959 = vunpack.c.l.b16 %v3657
  %v4960 = vunpack.c.h.b16 %v3657
  %v4961 = vunpack.c.l.b16 %v3658
  %v4962 = vunpack.c.h.b16 %v3658
  %v4963 = vunpack.c.l.b16 %v3659
  %v4964 = vunpack.c.h.b16 %v3659
  %v4965 = vunpack.c.l.b16 %v3660
  %v4966 = vunpack.c.h.b16 %v3660
  %v4967 = vunpack.c.l.b16 %v3661
  %v4968 = vunpack.c.h.b16 %v3661
  %v4969 = vunpack.c.l.b16 %v3662
  %v4970 = vunpack.c.h.b16 %v3662
  %v4971 = vunpack.c.l.b16 %v3663
  %v4972 = vunpack.c.h.b16 %v3663
  %v4973 = vunpack.c.l.b16 %v3664
  %v4974 = vunpack.c.h.b16 %v3664
  %v4975 = vunpack.c.l.b16 %v3665
  %v4976 = vunpack.c.h.b16 %v3665
  %v4977 = vunpack.c.l.b16 %v3666
  %v4978 = vunpack.c.h.b16 %v3666
  %v4979 = vunpack.c.l.b16 %v3667
  %v4980 = vunpack.c.h.b16 %v3667
  %v4981 = vunpack.c.l.b16 %v3668
  %v4982 = vunpack.c.h.b16 %v3668
  %v4983 = vunpack.c.l.b16 %v3669
  %v4984 = vunpack.c.h.b16 %v3669
  %v4985 = vunpack.c.l.b16 %v3670
  %v4986 = vunpack.c.h.b16 %v3670
  %v4987 = vunpack.c.l.b16 %v3671
  %v4988 = vunpack.c.h.b16 %v3671
  %v4989 = vunpack.c.l.b16 %v3672
  %v4990 = vunpack.c.h.b16 %v3672
  %v4991 = vunpack.c.l.b16 %v3673
  %v4992 = vunpack.c.h.b16 %v3673
  %v4993 = vunpack.c.l.b16 %v3674
  %v4994 = vunpack.c.h.b16 %v3674
  %v4995 = vunpack.c.l.b16 %v3675
  %v4996 = vunpack.c.h.b16 %v3675
  %v4997 = vunpack.c.l.b16 %v3676
  %v4998 = vunpack.c.h.b16 %v3676
  %v4999 = vunpack.c.l.b16 %v3677
  %v5000 = vunpack.c.h.b16 %v3677
  %v5001 = vunpack.c.l.b16 %v3678
  %v5002 = vunpack.c.h.b16 %v3678
  %v5003 = vunpack.c.l.b16 %v3679
  %v5004 = vunpack.c.h.b16 %v3679
  %v5005 = vunpack.c.l.b16 %v3680
  %v5006 = vunpack.c.h.b16 %v3680
  %v5007 = vunpack.c.l.b16 %v3681
  %v5008 = vunpack.c.h.b16 %v3681
  %v5009 = vunpack.c.l.b16 %v3682
  %v5010 = vunpack.c.h.b16 %v3682
  %v5011 = vunpack.c.l.b16 %v3683
  %v5012 = vunpack.c.h.b16 %v3683
  %v5013 = vunpack.c.l.b16 %v3684
  %v5014 = vunpack.c.h.b16 %v3684
  %v5015 = vunpack.c.l.b16 %v3685
  %v5016 = vunpack.c.h.b16 %v3685
  %v5017 = vunpack.c.l.b16 %v3686
  %v5018 = vunpack.c.h.b16 %v3686
  %v5019 = vunpack.c.l.b16 %v3687
  %v5020 = vunpack.c.h.b16 %v3687
  %v5021 = vunpack.c.l.b16 %v3688
  %v5022 = vunpack.c.h.b16 %v3688
  %v5023 = vunpack.c.l.b16 %v3689
  %v5024 = vunpack.c.h.b16 %v3689
  %v5025 = vunpack.c.l.b16 %v3690
  %v5026 = vunpack.c.h.b16 %v3690
  %v5027 = vunpack.c.l.b16 %v3691
  %v5028 = vunpack.c.h.b16 %v3691
  %v5029 = vunpack.c.l.b16 %v3692
  %v5030 = vunpack.c.h.b16 %v3692
  %v5031 = vunpack.c.l.b16 %v3693
  %v5032 = vunpack.c.h.b16 %v3693
  %v5033 = vunpack.c.l.b16 %v3694
  %v5034 = vunpack.c.h.b16 %v3694
  %v5035 = vunpack.c.l.b16 %v3695
  %v5036 = vunpack.c.h.b16 %v3695
  %v5037 = vunpack.c.l.b16 %v3696
  %v5038 = vunpack.c.h.b16 %v3696
  %v5039 = vunpack.c.l.b16 %v3697
  %v5040 = vunpack.c.h.b16 %v3697
  %v5041 = vunpack.c.l.b16 %v3698
  %v5042 = vunpack.c.h.b16 %v3698
  %v5043 = vunpack.c.l.b16 %v3699
  %v5044 = vunpack.c.h.b16 %v3699
  %v5045 = vunpack.c.l.b16 %v3700
  %v5046 = vunpack.c.h.b16 %v3700
  %v5047 = vunpack.c.l.b16 %v3701
  %v5048 = vunpack.c.h.b16 %v3701
  %v5049 = vunpack.c.l.b16 %v3702
  %v5050 = vunpack.c.h.b16 %v3702
  %v5051 = vunpack.c.l.b16 %v3703
  %v5052 = vunpack.c.h.b16 %v3703
  %v5053 = vunpack.c.l.b16 %v3704
  %v5054 = vunpack.c.h.b16 %v3704
  %v5055 = vunpack.c.l.b16 %v3705
  %v5056 = vunpack.c.h.b16 %v3705
  %v5057 = vunpack.c.l.b16 %v3706
  %v5058 = vunpack.c.h.b16 %v3706
  %v5059 = vunpack.c.l.b16 %v3707
  %v5060 = vunpack.c.h.b16 %v3707
  %v5061 = vunpack.c.l.b16 %v3708
  %v5062 = vunpack.c.h.b16 %v3708
  %v5063 = vunpack.c.l.b16 %v3709
  %v5064 = vunpack.c.h.b16 %v3709
  %v5065 = vunpack.c.l.b16 %v3710
  %v5066 = vunpack.c.h.b16 %v3710
  %v5067 = vunpack.c.l.b16 %v3711
  %v5068 = vunpack.c.h.b16 %v3711
  %v5069 = vunpack.c.l.b16 %v3712
  %v5070 = vunpack.c.h.b16 %v3712
  %v5071 = vunpack.c.l.b16 %v3713
  %v5072 = vunpack.c.h.b16 %v3713
  %v5073 = vunpack.c.l.b16 %v3714
  %v5074 = vunpack.c.h.b16 %v3714
  %v5075 = vunpack.c.l.b16 %v3715
  %v5076 = vunpack.c.h.b16 %v3715
  %v5077 = vunpack.c.l.b16 %v3716
  %v5078 = vunpack.c.h.b16 %v3716
  %v5079 = vunpack.c.l.b16 %v3717
  %v5080 = vunpack.c.h.b16 %v3717
  %v5081 = vunpack.c.l.b16 %v3718
  %v5082 = vunpack.c.h.b16 %v3718
  %v5083 = vunpack.c.l.b16 %v3719
  %v5084 = vunpack.c.h.b16 %v3719
  %v5085 = vunpack.c.l.b16 %v3720
  %v5086 = vunpack.c.h.b16 %v3720
  %v5087 = vunpack.c.l.b16 %v3721
  %v5088 = vunpack.c.h.b16 %v3721
  %v5089 = vunpack.c.l.b16 %v3722
  %v5090 = vunpack.c.h.b16 %v3722
  %v5091 = vunpack.c.l.b16 %v3723
  %v5092 = vunpack.c.h.b16 %v3723
  %v5093 = vunpack.c.l.b16 %v3724
  %v5094 = vunpack.c.h.b16 %v3724
  %v5095 = vunpack.c.l.b16 %v3725
  %v5096 = vunpack.c.h.b16 %v3725
  %v5097 = vunpack.c.l.b16 %v3726
  %v5098 = vunpack.c.h.b16 %v3726
  %v5099 = vunpack.c.l.b16 %v3727
  %v5100 = vunpack.c.h.b16 %v3727
  %v5101 = vunpack.c.l.b16 %v3728
  %v5102 = vunpack.c.h.b16 %v3728
  %v5103 = vunpack.c.l.b16 %v3729
  %v5104 = vunpack.c.h.b16 %v3729
  %v5105 = vunpack.c.l.b16 %v3730
  %v5106 = vunpack.c.h.b16 %v3730
  %v5107 = vunpack.c.l.b16 %v3731
  %v5108 = vunpack.c.h.b16 %v3731
  %v5109 = vunpack.c.l.b16 %v3732
  %v5110 = vunpack.c.h.b16 %v3732
  %v5111 = vunpack.c.l.b16 %v3733
  %v5112 = vunpack.c.h.b16 %v3733
  %v5113 = vunpack.c.l.b16 %v3734
  %v5114 = vunpack.c.h.b16 %v3734
  %v5115 = vunpack.c.l.b16 %v3735
  %v5116 = vunpack.c.h.b16 %v3735
  %v5117 = vunpack.c.l.b16 %v3736
  %v5118 = vunpack.c.h.b16 %v3736
  %v5119 = vunpack.c.l.b16 %v3737
  %v5120 = vunpack.c.h.b16 %v3737
  %v5121 = vunpack.c.l.b16 %v3738
  %v5122 = vunpack.c.h.b16 %v3738
  %v5123 = vunpack.c.l.b16 %v3739
  %v5124 = vunpack.c.h.b16 %v3739
  %v5125 = vunpack.c.l.b16 %v3740
  %v5126 = vunpack.c.h.b16 %v3740
  %v5127 = vunpack.c.l.b16 %v3741
  %v5128 = vunpack.c.h.b16 %v3741
  %v5129 = vunpack.c.l.b16 %v3742
  %v5130 = vunpack.c.h.b16 %v3742
  %v5131 = vunpack.c.l.b16 %v3743
  %v5132 = vunpack.c.h.b16 %v3743
  %v5133 = vunpack.c.l.b16 %v3744
  %v5134 = vunpack.c.h.b16 %v3744
  %v5135 = vunpack.c.l.b16 %v3745
  %v5136 = vunpack.c.h.b16 %v3745
  %v5137 = vunpack.c.l.b16 %v3746
  %v5138 = vunpack.c.h.b16 %v3746
  %v5139 = vunpack.c.l.b16 %v3747
  %v5140 = vunpack.c.h.b16 %v3747
  %v5141 = vunpack.c.l.b16 %v3748
  %v5142 = vunpack.c.h.b16 %v3748
  %v5143 = vunpack.c.l.b16 %v3749
  %v5144 = vunpack.c.h.b16 %v3749
  %v5145 = vunpack.c.l.b16 %v3750
  %v5146 = vunpack.c.h.b16 %v3750
  %v5147 = vpack.c.b16 %v4895, %v4891
  %v5148 = vpack.c.b16 %v4896, %v4892
  %v5149 = vpack.c.b16 %v4897, %v4893
  %v5150 = vpack.c.b16 %v4898, %v4894
  %v5151 = vpack.c.b16 %v4903, %v4899
  %v5152 = vpack.c.b16 %v4904, %v4900
  %v5153 = vpack.c.b16 %v4905, %v4901
  %v5154 = vpack.c.b16 %v4906, %v4902
  %v5155 = vpack.c.b16 %v4911, %v4907
  %v5156 = vpack.c.b16 %v4912, %v4908
  %v5157 = vpack.c.b16 %v4913, %v4909
  %v5158 = vpack.c.b16 %v4914, %v4910
  %v5159 = vpack.c.b16 %v4919, %v4915
  %v5160 = vpack.c.b16 %v4920, %v4916
  %v5161 = vpack.c.b16 %v4921, %v4917
  %v5162 = vpack.c.b16 %v4922, %v4918
  %v5163 = vpack.c.b16 %v4927, %v4923
  %v5164 = vpack.c.b16 %v4928, %v4924
  %v5165 = vpack.c.b16 %v4929, %v4925
  %v5166 = vpack.c.b16 %v4930, %v4926
  %v5167 = vpack.c.b16 %v4935, %v4931
  %v5168 = vpack.c.b16 %v4936, %v4932
  %v5169 = vpack.c.b16 %v4937, %v4933
  %v5170 = vpack.c.b16 %v4938, %v4934
  %v5171 = vpack.c.b16 %v4943, %v4939
  %v5172 = vpack.c.b16 %v4944, %v4940
  %v5173 = vpack.c.b16 %v4945, %v4941
  %v5174 = vpack.c.b16 %v4946, %v4942
  %v5175 = vpack.c.b16 %v4951, %v4947
  %v5176 = vpack.c.b16 %v4952, %v4948
  %v5177 = vpack.c.b16 %v4953, %v4949
  %v5178 = vpack.c.b16 %v4954, %v4950
  %v5179 = vpack.c.b16 %v4959, %v4955
  %v5180 = vpack.c.b16 %v4960, %v4956
  %v5181 = vpack.c.b16 %v4961, %v4957
  %v5182 = vpack.c.b16 %v4962, %v4958
  %v5183 = vpack.c.b16 %v4967, %v4963
  %v5184 = vpack.c.b16 %v4968, %v4964
  %v5185 = vpack.c.b16 %v4969, %v4965
  %v5186 = vpack.c.b16 %v4970, %v4966
  %v5187 = vpack.c.b16 %v4975, %v4971
  %v5188 = vpack.c.b16 %v4976, %v4972
  %v5189 = vpack.c.b16 %v4977, %v4973
  %v5190 = vpack.c.b16 %v4978, %v4974
  %v5191 = vpack.c.b16 %v4983, %v4979
  %v5192 = vpack.c.b16 %v4984, %v4980
  %v5193 = vpack.c.b16 %v4985, %v4981
  %v5194 = vpack.c.b16 %v4986, %v4982
  %v5195 = vpack.c.b16 %v4991, %v4987
  %v5196 = vpack.c.b16 %v4992, %v4988
  %v5197 = vpack.c.b16 %v4993, %v4989
  %v5198 = vpack.c.b16 %v4994, %v4990
  %v5199 = vpack.c.b16 %v4999, %v4995
  %v5200 = vpack.c.b16 %v5000, %v4996
  %v5201 = vpack.c.b16 %v5001, %v4997
  %v5202 = vpack.c.b16 %v5002, %v4998
  %v5203 = vpack.c.b16 %v5007, %v5003
  %v5204 = vpack.c.b16 %v5008, %v5004
  %v5205 = vpack.c.b16 %v5009, %v5005
  %v5206 = vpack.c.b16 %v5010, %v5006
  %v5207 = vpack.c.b16 %v5015, %v5011
  %v5208 = vpack.c.b16 %v5016, %v5012
  %v5209 = vpack.c.b16 %v5017, %v5013
  %v5210 = vpack.c.b16 %v5018, %v5014
  %v5211 = vpack.c.b16 %v5023, %v5019
  %v5212 = vpack.c.b16 %v5024, %v5020
  %v5213 = vpack.c.b16 %v5025, %v5021
  %v5214 = vpack.c.b16 %v5026, %v5022
  %v5215 = vpack.c.b16 %v5031, %v5027
  %v5216 = vpack.c.b16 %v5032, %v5028
  %v5217 = vpack.c.b16 %v5033, %v5029
  %v5218 = vpack.c.b16 %v5034, %v5030
  %v5219 = vpack.c.b16 %v5039, %v5035
  %v5220 = vpack.c.b16 %v5040, %v5036
  %v5221 = vpack.c.b16 %v5041, %v5037
  %v5222 = vpack.c.b16 %v5042, %v5038
  %v5223 = vpack.c.b16 %v5047, %v5043
  %v5224 = vpack.c.b16 %v5048, %v5044
  %v5225 = vpack.c.b16 %v5049, %v5045
  %v5226 = vpack.c.b16 %v5050, %v5046
  %v5227 = vpack.c.b16 %v5055, %v5051
  %v5228 = vpack.c.b16 %v5056, %v5052
  %v5229 = vpack.c.b16 %v5057, %v5053
  %v5230 = vpack.c.b16 %v5058, %v5054
  %v5231 = vpack.c.b16 %v5063, %v5059
  %v5232 = vpack.c.b16 %v5064, %v5060
  %v5233 = vpack.c.b16 %v5065, %v5061
  %v5234 = vpack.c.b16 %v5066, %v5062
  %v5235 = vpack.c.b16 %v5071, %v5067
  %v5236 = vpack.c.b16 %v5072, %v5068
  %v5237 = vpack.c.b16 %v5073, %v5069
  %v5238 = vpack.c.b16 %v5074, %v5070
  %v5239 = vpack.c.b16 %v5079, %v5075
  %v5240 = vpack.c.b16 %v5080, %v5076
  %v5241 = vpack.c.b16 %v5081, %v5077
  %v5242 = vpack.c.b16 %v5082, %v5078
  %v5243 = vpack.c.b16 %v5087, %v5083
  %v5244 = vpack.c.b16 %v5088, %v5084
  %v5245 = vpack.c.b16 %v5089, %v5085
  %v5246 = vpack.c.b16 %v5090, %v5086
  %v5247 = vpack.c.b16 %v5095, %v5091
  %v5248 = vpack.c.b16 %v5096, %v5092
  %v5249 = vpack.c.b16 %v5097, %v5093
  %v5250 = vpack.c.b16 %v5098, %v5094
  %v5251 = vpack.c.b16 %v5103, %v5099
  %v5252 = vpack.c.b16 %v5104, %v5100
  %v5253 = vpack.c.b16 %v5105, %v5101
  %v5254 = vpack.c.b16 %v5106, %v5102
  %v5255 = vpack.c.b16 %v5111, %v5107
  %v5256 = vpack.c.b16 %v5112, %v5108
  %v5257 = vpack.c.b16 %v5113, %v5109
  %v5258 = vpack.c.b16 %v5114, %v5110
  %v5259 = vpack.c.b16 %v5119, %v5115
  %v5260 = vpack.c.b16 %v5120, %v5116
  %v5261 = vpack.c.b16 %v5121, %v5117
  %v5262 = vpack.c.b16 %v5122, %v5118
  %v5263 = vpack.c.b16 %v5127, %v5123
  %v5264 = vpack.c.b16 %v5128, %v5124
  %v5265 = vpack.c.b16 %v5129, %v5125
  %v5266 = vpack.c.b16 %v5130, %v5126
  %v5267 = vpack.c.b16 %v5135, %v5131
  %v5268 = vpack.c.b16 %v5136, %v5132
  %v5269 = vpack.c.b16 %v5137, %v5133
  %v5270 = vpack.c.b16 %v5138, %v5134
  %v5271 = vpack.c.b16 %v5143, %v5139
  %v5272 = vpack.c.b16 %v5144, %v5140
  %v5273 = vpack.c.b16 %v5145, %v5141
  %v5274 = vpack.c.b16 %v5146, %v5142
  %5403 = vmatprep.subr.bf16.mxu0 %v5148
  %5404 = vmatpush1.bf16.msra.mxu0 %v5147
  %5405 = vmatprep.subr.bf16.mxu0 %v5152
  %5406 = vmatpush1.bf16.msra.mxu0 %v5151
  %5407 = vmatprep.subr.bf16.mxu0 %v5156
  %5408 = vmatpush1.bf16.msra.mxu0 %v5155
  %5409 = vmatprep.subr.bf16.mxu0 %v5160
  %5410 = vmatpush1.bf16.msra.mxu0 %v5159
  %5411 = vmatprep.subr.bf16.mxu0 %v5164
  %5412 = vmatpush1.bf16.msra.mxu0 %v5163
  %5413 = vmatprep.subr.bf16.mxu0 %v5168
  %5414 = vmatpush1.bf16.msra.mxu0 %v5167
  %5415 = vmatprep.subr.bf16.mxu0 %v5172
  %5416 = vmatpush1.bf16.msra.mxu0 %v5171
  %5417 = vmatprep.subr.bf16.mxu0 %v5176
  %5418 = vmatpush1.bf16.msra.mxu0 %v5175
  %5419 = vmatprep.subr.bf16.mxu0 %v5180
  %5420 = vmatpush1.bf16.msra.mxu0 %v5179
  %5421 = vmatprep.subr.bf16.mxu0 %v5184
  %5422 = vmatpush1.bf16.msra.mxu0 %v5183
  %5423 = vmatprep.subr.bf16.mxu0 %v5188
  %5424 = vmatpush1.bf16.msra.mxu0 %v5187
  %5425 = vmatprep.subr.bf16.mxu0 %v5192
  %5426 = vmatpush1.bf16.msra.mxu0 %v5191
  %5427 = vmatprep.subr.bf16.mxu0 %v5196
  %5428 = vmatpush1.bf16.msra.mxu0 %v5195
  %5429 = vmatprep.subr.bf16.mxu0 %v5200
  %5430 = vmatpush1.bf16.msra.mxu0 %v5199
  %5431 = vmatprep.subr.bf16.mxu0 %v5204
  %5432 = vmatpush1.bf16.msra.mxu0 %v5203
  %5433 = vmatprep.subr.bf16.mxu0 %v5208
  %5434 = vmatpush1.bf16.msra.mxu0 %v5207
  %5435 = vmatprep.mubr.bf16.mxu0 %v3752
  %5436 = vmatmul.mubr.bf16.gmra.mrb[0].mxu0 %v3751
  %v5437 = vpop.f32.mrb[0].mxu0
  %v5438 = vadd.f32 %v4639, %v5437
  %v5439 = vpop.f32.mrb[0].mxu0
  %v5440 = vadd.f32 %v4641, %v5439
  %v5441 = vpop.f32.mrb[0].mxu0
  %v5442 = vadd.f32 %v4643, %v5441
  %v5443 = vpop.f32.mrb[0].mxu0
  %v5444 = vadd.f32 %v4645, %v5443
  %5445 = vmatprep.mubr.bf16.mxu0 %v3756
  %5446 = vmatmul.mubr.bf16.gmra.mrb[0].mxu0 %v3755
  %v5447 = vpop.f32.mrb[0].mxu0
  %v5448 = vadd.f32 %v4649, %v5447
  %v5449 = vpop.f32.mrb[0].mxu0
  %v5450 = vadd.f32 %v4651, %v5449
  %v5451 = vpop.f32.mrb[0].mxu0
  %v5452 = vadd.f32 %v4653, %v5451
  %v5453 = vpop.f32.mrb[0].mxu0
  %v5454 = vadd.f32 %v4655, %v5453
  %5455 = vdwg.mxu0
  %5456 = vmatprep.subr.bf16.mxu0 %v5212
  %5457 = vmatpush1.bf16.msra.mxu0 %v5211
  %5458 = vmatprep.subr.bf16.mxu0 %v5216
  %5459 = vmatpush1.bf16.msra.mxu0 %v5215
  %5460 = vmatprep.subr.bf16.mxu0 %v5220
  %5461 = vmatpush1.bf16.msra.mxu0 %v5219
  %5462 = vmatprep.subr.bf16.mxu0 %v5224
  %5463 = vmatpush1.bf16.msra.mxu0 %v5223
  %5464 = vmatprep.subr.bf16.mxu0 %v5228
  %5465 = vmatpush1.bf16.msra.mxu0 %v5227
  %5466 = vmatprep.subr.bf16.mxu0 %v5232
  %5467 = vmatpush1.bf16.msra.mxu0 %v5231
  %5468 = vmatprep.subr.bf16.mxu0 %v5236
  %5469 = vmatpush1.bf16.msra.mxu0 %v5235
  %5470 = vmatprep.subr.bf16.mxu0 %v5240
  %5471 = vmatpush1.bf16.msra.mxu0 %v5239
  %5472 = vmatprep.subr.bf16.mxu0 %v5244
  %5473 = vmatpush1.bf16.msra.mxu0 %v5243
  %5474 = vmatprep.subr.bf16.mxu0 %v5248
  %5475 = vmatpush1.bf16.msra.mxu0 %v5247
  %5476 = vmatprep.subr.bf16.mxu0 %v5252
  %5477 = vmatpush1.bf16.msra.mxu0 %v5251
  %5478 = vmatprep.subr.bf16.mxu0 %v5256
  %5479 = vmatpush1.bf16.msra.mxu0 %v5255
  %5480 = vmatprep.subr.bf16.mxu0 %v5260
  %5481 = vmatpush1.bf16.msra.mxu0 %v5259
  %5482 = vmatprep.subr.bf16.mxu0 %v5264
  %5483 = vmatpush1.bf16.msra.mxu0 %v5263
  %5484 = vmatprep.subr.bf16.mxu0 %v5268
  %5485 = vmatpush1.bf16.msra.mxu0 %v5267
  %5486 = vmatprep.subr.bf16.mxu0 %v5272
  %5487 = vmatpush1.bf16.msra.mxu0 %v5271
  %5488 = vmatprep.mubr.bf16.mxu0 %v3754
  %5489 = vmatmul.mubr.bf16.gmra.mrb[0].mxu0 %v3753
  %v5490 = vpop.f32.mrb[0].mxu0
  %v5491 = vadd.f32 %v5438, %v5490
  %v5492 = vpop.f32.mrb[0].mxu0
  %v5493 = vadd.f32 %v5440, %v5492
  %v5494 = vpop.f32.mrb[0].mxu0
  %v5495 = vadd.f32 %v5442, %v5494
  %v5496 = vpop.f32.mrb[0].mxu0
  %v5497 = vadd.f32 %v5444, %v5496
  %5498 = vmatprep.mubr.bf16.mxu0 %v3758
  %5499 = vmatmul.mubr.bf16.gmra.mrb[0].mxu0 %v3757
  %v5500 = vpop.f32.mrb[0].mxu0
  %v5501 = vadd.f32 %v5448, %v5500
  %v5502 = vpop.f32.mrb[0].mxu0
  %v5503 = vadd.f32 %v5450, %v5502
  %v5504 = vpop.f32.mrb[0].mxu0
  %v5505 = vadd.f32 %v5452, %v5504
  %v5506 = vpop.f32.mrb[0].mxu0
  %v5507 = vadd.f32 %v5454, %v5506
  %5508 = vdwg.mxu0
  %5509 = vmatprep.subr.bf16.mxu0 %v5150
  %5510 = vmatpush1.bf16.msra.mxu0 %v5149
  %5511 = vmatprep.subr.bf16.mxu0 %v5154
  %5512 = vmatpush1.bf16.msra.mxu0 %v5153
  %5513 = vmatprep.subr.bf16.mxu0 %v5158
  %5514 = vmatpush1.bf16.msra.mxu0 %v5157
  %5515 = vmatprep.subr.bf16.mxu0 %v5162
  %5516 = vmatpush1.bf16.msra.mxu0 %v5161
  %5517 = vmatprep.subr.bf16.mxu0 %v5166
  %5518 = vmatpush1.bf16.msra.mxu0 %v5165
  %5519 = vmatprep.subr.bf16.mxu0 %v5170
  %5520 = vmatpush1.bf16.msra.mxu0 %v5169
  %5521 = vmatprep.subr.bf16.mxu0 %v5174
  %5522 = vmatpush1.bf16.msra.mxu0 %v5173
  %5523 = vmatprep.subr.bf16.mxu0 %v5178
  %5524 = vmatpush1.bf16.msra.mxu0 %v5177
  %5525 = vmatprep.subr.bf16.mxu0 %v5182
  %5526 = vmatpush1.bf16.msra.mxu0 %v5181
  %5527 = vmatprep.subr.bf16.mxu0 %v5186
  %5528 = vmatpush1.bf16.msra.mxu0 %v5185
  %5529 = vmatprep.subr.bf16.mxu0 %v5190
  %5530 = vmatpush1.bf16.msra.mxu0 %v5189
  %5531 = vmatprep.subr.bf16.mxu0 %v5194
  %5532 = vmatpush1.bf16.msra.mxu0 %v5193
  %5533 = vmatprep.subr.bf16.mxu0 %v5198
  %5534 = vmatpush1.bf16.msra.mxu0 %v5197
  %5535 = vmatprep.subr.bf16.mxu0 %v5202
  %5536 = vmatpush1.bf16.msra.mxu0 %v5201
  %5537 = vmatprep.subr.bf16.mxu0 %v5206
  %5538 = vmatpush1.bf16.msra.mxu0 %v5205
  %5539 = vmatprep.subr.bf16.mxu0 %v5210
  %5540 = vmatpush1.bf16.msra.mxu0 %v5209
  %5541 = vmatprep.mubr.bf16.mxu0 %v3752
  %5542 = vmatmul.mubr.bf16.gmra.mrb[0].mxu0 %v3751
  %v5543 = vpop.f32.mrb[0].mxu0
  %v5544 = vadd.f32 %v4745, %v5543
  %v5545 = vpop.f32.mrb[0].mxu0
  %v5546 = vadd.f32 %v4747, %v5545
  %v5547 = vpop.f32.mrb[0].mxu0
  %v5548 = vadd.f32 %v4749, %v5547
  %v5549 = vpop.f32.mrb[0].mxu0
  %v5550 = vadd.f32 %v4751, %v5549
  %5551 = vmatprep.mubr.bf16.mxu0 %v3756
  %5552 = vmatmul.mubr.bf16.gmra.mrb[0].mxu0 %v3755
  %v5553 = vpop.f32.mrb[0].mxu0
  %v5554 = vadd.f32 %v4755, %v5553
  %v5555 = vpop.f32.mrb[0].mxu0
  %v5556 = vadd.f32 %v4757, %v5555
  %v5557 = vpop.f32.mrb[0].mxu0
  %v5558 = vadd.f32 %v4759, %v5557
  %v5559 = vpop.f32.mrb[0].mxu0
  %v5560 = vadd.f32 %v4761, %v5559
  %5561 = vdwg.mxu0
  %5562 = vmatprep.subr.bf16.mxu0 %v5214
  %5563 = vmatpush1.bf16.msra.mxu0 %v5213
  %5564 = vmatprep.subr.bf16.mxu0 %v5218
  %5565 = vmatpush1.bf16.msra.mxu0 %v5217
  %5566 = vmatprep.subr.bf16.mxu0 %v5222
  %5567 = vmatpush1.bf16.msra.mxu0 %v5221
  %5568 = vmatprep.subr.bf16.mxu0 %v5226
  %5569 = vmatpush1.bf16.msra.mxu0 %v5225
  %5570 = vmatprep.subr.bf16.mxu0 %v5230
  %5571 = vmatpush1.bf16.msra.mxu0 %v5229
  %5572 = vmatprep.subr.bf16.mxu0 %v5234
  %5573 = vmatpush1.bf16.msra.mxu0 %v5233
  %5574 = vmatprep.subr.bf16.mxu0 %v5238
  %5575 = vmatpush1.bf16.msra.mxu0 %v5237
  %5576 = vmatprep.subr.bf16.mxu0 %v5242
  %5577 = vmatpush1.bf16.msra.mxu0 %v5241
  %5578 = vmatprep.subr.bf16.mxu0 %v5246
  %5579 = vmatpush1.bf16.msra.mxu0 %v5245
  %5580 = vmatprep.subr.bf16.mxu0 %v5250
  %5581 = vmatpush1.bf16.msra.mxu0 %v5249
  %5582 = vmatprep.subr.bf16.mxu0 %v5254
  %5583 = vmatpush1.bf16.msra.mxu0 %v5253
  %5584 = vmatprep.subr.bf16.mxu0 %v5258
  %5585 = vmatpush1.bf16.msra.mxu0 %v5257
  %5586 = vmatprep.subr.bf16.mxu0 %v5262
  %5587 = vmatpush1.bf16.msra.mxu0 %v5261
  %5588 = vmatprep.subr.bf16.mxu0 %v5266
  %5589 = vmatpush1.bf16.msra.mxu0 %v5265
  %5590 = vmatprep.subr.bf16.mxu0 %v5270
  %5591 = vmatpush1.bf16.msra.mxu0 %v5269
  %5592 = vmatprep.subr.bf16.mxu0 %v5274
  %5593 = vmatpush1.bf16.msra.mxu0 %v5273
  %5594 = vmatprep.mubr.bf16.mxu0 %v3754
  %5595 = vmatmul.mubr.bf16.gmra.mrb[0].mxu0 %v3753
  %v5596 = vpop.f32.mrb[0].mxu0
  %v5597 = vadd.f32 %v5544, %v5596
  %v5598 = vpop.f32.mrb[0].mxu0
  %v5599 = vadd.f32 %v5546, %v5598
  %v5600 = vpop.f32.mrb[0].mxu0
  %v5601 = vadd.f32 %v5548, %v5600
  %v5602 = vpop.f32.mrb[0].mxu0
  %v5603 = vadd.f32 %v5550, %v5602
  %5604 = vmatprep.mubr.bf16.mxu0 %v3758
  %5605 = vmatmul.mubr.bf16.gmra.mrb[0].mxu0 %v3757
  %v5606 = vpop.f32.mrb[0].mxu0
  %v5607 = vadd.f32 %v5554, %v5606
  %v5608 = vpop.f32.mrb[0].mxu0
  %v5609 = vadd.f32 %v5556, %v5608
  %v5610 = vpop.f32.mrb[0].mxu0
  %v5611 = vadd.f32 %v5558, %v5610
  %v5612 = vpop.f32.mrb[0].mxu0
  %v5613 = vadd.f32 %v5560, %v5612
  %5614 = vdwg.mxu0
  %v5615 = vld [vmem:[#allocation2] sm:$0xfc]
  %v5616 = vld [vmem:[#allocation2 + $0x8] sm:$0xfc]
  %v5617 = vld [vmem:[#allocation2 + $0x10] sm:$0xfc]
  %v5618 = vld [vmem:[#allocation2 + $0x18] sm:$0xfc]
  %v5619 = vld [vmem:[#allocation2 + $0x40] sm:$0x3]
  %v5620 = vld [vmem:[#allocation2 + $0x48] sm:$0x3]
  %v5621 = vld [vmem:[#allocation2 + $0x50] sm:$0x3]
  %v5622 = vld [vmem:[#allocation2 + $0x58] sm:$0x3]
  %v5623 = vld [vmem:[#allocation2 + $0x60] sm:$0xfc]
  %v5624 = vld [vmem:[#allocation2 + $0x68] sm:$0xfc]
  %v5625 = vld [vmem:[#allocation2 + $0x70] sm:$0xfc]
  %v5626 = vld [vmem:[#allocation2 + $0x78] sm:$0xfc]
  %v5627 = vld [vmem:[#allocation2 + $0xa0] sm:$0x3]
  %v5628 = vld [vmem:[#allocation2 + $0xa8] sm:$0x3]
  %v5629 = vld [vmem:[#allocation2 + $0xb0] sm:$0x3]
  %v5630 = vld [vmem:[#allocation2 + $0xb8] sm:$0x3]
  %v5647 = vrot.slane %v5615, 2
  %v5648 = vrot.slane %v3522, 2
  %v5649 = vsel %vm2276, %v5647, %v5648
  %v5650 = vrot.slane %v5616, 2
  %v5651 = vrot.slane %v3523, 2
  %v5652 = vsel %vm2276, %v5650, %v5651
  %v5653 = vrot.slane %v5617, 2
  %v5654 = vrot.slane %v3524, 2
  %v5655 = vsel %vm2276, %v5653, %v5654
  %v5656 = vrot.slane %v5618, 2
  %v5657 = vrot.slane %v3525, 2
  %v5658 = vsel %vm2276, %v5656, %v5657
  %v5659 = vrot.slane %v5619, 2
  %v5660 = vsel %vm2276, %v5648, %v5659
  %v5661 = vrot.slane %v5620, 2
  %v5662 = vsel %vm2276, %v5651, %v5661
  %v5663 = vrot.slane %v5621, 2
  %v5664 = vsel %vm2276, %v5654, %v5663
  %v5665 = vrot.slane %v5622, 2
  %v5666 = vsel %vm2276, %v5657, %v5665
  %v5667 = vrot.slane %v5623, 2
  %v5668 = vrot.slane %v3534, 2
  %v5669 = vsel %vm2276, %v5667, %v5668
  %v5670 = vrot.slane %v5624, 2
  %v5671 = vrot.slane %v3535, 2
  %v5672 = vsel %vm2276, %v5670, %v5671
  %v5673 = vrot.slane %v5625, 2
  %v5674 = vrot.slane %v3536, 2
  %v5675 = vsel %vm2276, %v5673, %v5674
  %v5676 = vrot.slane %v5626, 2
  %v5677 = vrot.slane %v3537, 2
  %v5678 = vsel %vm2276, %v5676, %v5677
  %v5679 = vrot.slane %v5627, 2
  %v5680 = vsel %vm2276, %v5668, %v5679
  %v5681 = vrot.slane %v5628, 2
  %v5682 = vsel %vm2276, %v5671, %v5681
  %v5683 = vrot.slane %v5629, 2
  %v5684 = vsel %vm2276, %v5674, %v5683
  %v5685 = vrot.slane %v5630, 2
  %v5686 = vsel %vm2276, %v5677, %v5685
  %s5703 = scalar_lea.vmem %s4, 2048
  %v5704 = vld [vmem:[%s5703] sm:$0xff]
  %v5705 = vld [vmem:[%s5703 + $0x8] sm:$0xff]
  %v5706 = vld [vmem:[%s5703 + $0x10] sm:$0xff]
  %v5707 = vld [vmem:[%s5703 + $0x18] sm:$0xff]
  %v5708 = vld [vmem:[%s5703 + $0x20] sm:$0xff]
  %v5709 = vld [vmem:[%s5703 + $0x28] sm:$0xff]
  %v5710 = vld [vmem:[%s5703 + $0x30] sm:$0xff]
  %v5711 = vld [vmem:[%s5703 + $0x38] sm:$0xff]
  %v5712 = vld [vmem:[%s5703 + $0x40] sm:$0xff]
  %v5713 = vld [vmem:[%s5703 + $0x48] sm:$0xff]
  %v5714 = vld [vmem:[%s5703 + $0x50] sm:$0xff]
  %v5715 = vld [vmem:[%s5703 + $0x58] sm:$0xff]
  %v5716 = vld [vmem:[%s5703 + $0x60] sm:$0xff]
  %v5717 = vld [vmem:[%s5703 + $0x68] sm:$0xff]
  %v5718 = vld [vmem:[%s5703 + $0x70] sm:$0xff]
  %v5719 = vld [vmem:[%s5703 + $0x78] sm:$0xff]
  %v5720 = vld [vmem:[%s5703 + $0x80] sm:$0xff]
  %v5721 = vld [vmem:[%s5703 + $0x88] sm:$0xff]
  %v5722 = vld [vmem:[%s5703 + $0x90] sm:$0xff]
  %v5723 = vld [vmem:[%s5703 + $0x98] sm:$0xff]
  %v5724 = vld [vmem:[%s5703 + $0xa0] sm:$0xff]
  %v5725 = vld [vmem:[%s5703 + $0xa8] sm:$0xff]
  %v5726 = vld [vmem:[%s5703 + $0xb0] sm:$0xff]
  %v5727 = vld [vmem:[%s5703 + $0xb8] sm:$0xff]
  %v5728 = vld [vmem:[%s5703 + $0xc0] sm:$0xff]
  %v5729 = vld [vmem:[%s5703 + $0xc8] sm:$0xff]
  %v5730 = vld [vmem:[%s5703 + $0xd0] sm:$0xff]
  %v5731 = vld [vmem:[%s5703 + $0xd8] sm:$0xff]
  %v5732 = vld [vmem:[%s5703 + $0xe0] sm:$0xff]
  %v5733 = vld [vmem:[%s5703 + $0xe8] sm:$0xff]
  %v5734 = vld [vmem:[%s5703 + $0xf0] sm:$0xff]
  %v5735 = vld [vmem:[%s5703 + $0xf8] sm:$0xff]
  %v5736 = vld [vmem:[%s5703 + $0x100] sm:$0xff]
  %v5737 = vld [vmem:[%s5703 + $0x108] sm:$0xff]
  %v5738 = vld [vmem:[%s5703 + $0x110] sm:$0xff]
  %v5739 = vld [vmem:[%s5703 + $0x118] sm:$0xff]
  %v5740 = vld [vmem:[%s5703 + $0x120] sm:$0xff]
  %v5741 = vld [vmem:[%s5703 + $0x128] sm:$0xff]
  %v5742 = vld [vmem:[%s5703 + $0x130] sm:$0xff]
  %v5743 = vld [vmem:[%s5703 + $0x138] sm:$0xff]
  %v5744 = vld [vmem:[%s5703 + $0x140] sm:$0xff]
  %v5745 = vld [vmem:[%s5703 + $0x148] sm:$0xff]
  %v5746 = vld [vmem:[%s5703 + $0x150] sm:$0xff]
  %v5747 = vld [vmem:[%s5703 + $0x158] sm:$0xff]
  %v5748 = vld [vmem:[%s5703 + $0x160] sm:$0xff]
  %v5749 = vld [vmem:[%s5703 + $0x168] sm:$0xff]
  %v5750 = vld [vmem:[%s5703 + $0x170] sm:$0xff]
  %v5751 = vld [vmem:[%s5703 + $0x178] sm:$0xff]
  %v5752 = vld [vmem:[%s5703 + $0x180] sm:$0xff]
  %v5753 = vld [vmem:[%s5703 + $0x188] sm:$0xff]
  %v5754 = vld [vmem:[%s5703 + $0x190] sm:$0xff]
  %v5755 = vld [vmem:[%s5703 + $0x198] sm:$0xff]
  %v5756 = vld [vmem:[%s5703 + $0x1a0] sm:$0xff]
  %v5757 = vld [vmem:[%s5703 + $0x1a8] sm:$0xff]
  %v5758 = vld [vmem:[%s5703 + $0x1b0] sm:$0xff]
  %v5759 = vld [vmem:[%s5703 + $0x1b8] sm:$0xff]
  %v5760 = vld [vmem:[%s5703 + $0x1c0] sm:$0xff]
  %v5761 = vld [vmem:[%s5703 + $0x1c8] sm:$0xff]
  %v5762 = vld [vmem:[%s5703 + $0x1d0] sm:$0xff]
  %v5763 = vld [vmem:[%s5703 + $0x1d8] sm:$0xff]
  %v5764 = vld [vmem:[%s5703 + $0x1e0] sm:$0xff]
  %v5765 = vld [vmem:[%s5703 + $0x1e8] sm:$0xff]
  %v5766 = vld [vmem:[%s5703 + $0x1f0] sm:$0xff]
  %v5767 = vld [vmem:[%s5703 + $0x1f8] sm:$0xff]
  %v5768 = vld [vmem:[%s5703 + $0x200] sm:$0xff]
  %v5769 = vld [vmem:[%s5703 + $0x208] sm:$0xff]
  %v5770 = vld [vmem:[%s5703 + $0x210] sm:$0xff]
  %v5771 = vld [vmem:[%s5703 + $0x218] sm:$0xff]
  %v5772 = vld [vmem:[%s5703 + $0x220] sm:$0xff]
  %v5773 = vld [vmem:[%s5703 + $0x228] sm:$0xff]
  %v5774 = vld [vmem:[%s5703 + $0x230] sm:$0xff]
  %v5775 = vld [vmem:[%s5703 + $0x238] sm:$0xff]
  %v5776 = vld [vmem:[%s5703 + $0x240] sm:$0xff]
  %v5777 = vld [vmem:[%s5703 + $0x248] sm:$0xff]
  %v5778 = vld [vmem:[%s5703 + $0x250] sm:$0xff]
  %v5779 = vld [vmem:[%s5703 + $0x258] sm:$0xff]
  %v5780 = vld [vmem:[%s5703 + $0x260] sm:$0xff]
  %v5781 = vld [vmem:[%s5703 + $0x268] sm:$0xff]
  %v5782 = vld [vmem:[%s5703 + $0x270] sm:$0xff]
  %v5783 = vld [vmem:[%s5703 + $0x278] sm:$0xff]
  %v5784 = vld [vmem:[%s5703 + $0x280] sm:$0xff]
  %v5785 = vld [vmem:[%s5703 + $0x288] sm:$0xff]
  %v5786 = vld [vmem:[%s5703 + $0x290] sm:$0xff]
  %v5787 = vld [vmem:[%s5703 + $0x298] sm:$0xff]
  %v5788 = vld [vmem:[%s5703 + $0x2a0] sm:$0xff]
  %v5789 = vld [vmem:[%s5703 + $0x2a8] sm:$0xff]
  %v5790 = vld [vmem:[%s5703 + $0x2b0] sm:$0xff]
  %v5791 = vld [vmem:[%s5703 + $0x2b8] sm:$0xff]
  %v5792 = vld [vmem:[%s5703 + $0x2c0] sm:$0xff]
  %v5793 = vld [vmem:[%s5703 + $0x2c8] sm:$0xff]
  %v5794 = vld [vmem:[%s5703 + $0x2d0] sm:$0xff]
  %v5795 = vld [vmem:[%s5703 + $0x2d8] sm:$0xff]
  %v5796 = vld [vmem:[%s5703 + $0x2e0] sm:$0xff]
  %v5797 = vld [vmem:[%s5703 + $0x2e8] sm:$0xff]
  %v5798 = vld [vmem:[%s5703 + $0x2f0] sm:$0xff]
  %v5799 = vld [vmem:[%s5703 + $0x2f8] sm:$0xff]
  %v5800 = vld [vmem:[%s5703 + $0x300] sm:$0xff]
  %v5801 = vld [vmem:[%s5703 + $0x308] sm:$0xff]
  %v5802 = vld [vmem:[%s5703 + $0x310] sm:$0xff]
  %v5803 = vld [vmem:[%s5703 + $0x318] sm:$0xff]
  %v5804 = vld [vmem:[%s5703 + $0x320] sm:$0xff]
  %v5805 = vld [vmem:[%s5703 + $0x328] sm:$0xff]
  %v5806 = vld [vmem:[%s5703 + $0x330] sm:$0xff]
  %v5807 = vld [vmem:[%s5703 + $0x338] sm:$0xff]
  %v5808 = vld [vmem:[%s5703 + $0x340] sm:$0xff]
  %v5809 = vld [vmem:[%s5703 + $0x348] sm:$0xff]
  %v5810 = vld [vmem:[%s5703 + $0x350] sm:$0xff]
  %v5811 = vld [vmem:[%s5703 + $0x358] sm:$0xff]
  %v5812 = vld [vmem:[%s5703 + $0x360] sm:$0xff]
  %v5813 = vld [vmem:[%s5703 + $0x368] sm:$0xff]
  %v5814 = vld [vmem:[%s5703 + $0x370] sm:$0xff]
  %v5815 = vld [vmem:[%s5703 + $0x378] sm:$0xff]
  %v5816 = vld [vmem:[%s5703 + $0x380] sm:$0xff]
  %v5817 = vld [vmem:[%s5703 + $0x388] sm:$0xff]
  %v5818 = vld [vmem:[%s5703 + $0x390] sm:$0xff]
  %v5819 = vld [vmem:[%s5703 + $0x398] sm:$0xff]
  %v5820 = vld [vmem:[%s5703 + $0x3a0] sm:$0xff]
  %v5821 = vld [vmem:[%s5703 + $0x3a8] sm:$0xff]
  %v5822 = vld [vmem:[%s5703 + $0x3b0] sm:$0xff]
  %v5823 = vld [vmem:[%s5703 + $0x3b8] sm:$0xff]
  %v5824 = vld [vmem:[%s5703 + $0x3c0] sm:$0xff]
  %v5825 = vld [vmem:[%s5703 + $0x3c8] sm:$0xff]
  %v5826 = vld [vmem:[%s5703 + $0x3d0] sm:$0xff]
  %v5827 = vld [vmem:[%s5703 + $0x3d8] sm:$0xff]
  %v5828 = vld [vmem:[%s5703 + $0x3e0] sm:$0xff]
  %v5829 = vld [vmem:[%s5703 + $0x3e8] sm:$0xff]
  %v5830 = vld [vmem:[%s5703 + $0x3f0] sm:$0xff]
  %v5831 = vld [vmem:[%s5703 + $0x3f8] sm:$0xff]
  %v5832 = vpack.c.bf16 %v5660, %v5649
  %v5833 = vpack.c.bf16 %v5662, %v5652
  %v5834 = vpack.c.bf16 %v5664, %v5655
  %v5835 = vpack.c.bf16 %v5666, %v5658
  %v5836 = vpack.c.bf16 %v5680, %v5669
  %v5837 = vpack.c.bf16 %v5682, %v5672
  %v5838 = vpack.c.bf16 %v5684, %v5675
  %v5839 = vpack.c.bf16 %v5686, %v5678
  %v5968 = vunpack.c.l.b16 %v5704
  %v5969 = vunpack.c.h.b16 %v5704
  %v5970 = vunpack.c.l.b16 %v5705
  %v5971 = vunpack.c.h.b16 %v5705
  %v5972 = vunpack.c.l.b16 %v5706
  %v5973 = vunpack.c.h.b16 %v5706
  %v5974 = vunpack.c.l.b16 %v5707
  %v5975 = vunpack.c.h.b16 %v5707
  %v5976 = vunpack.c.l.b16 %v5708
  %v5977 = vunpack.c.h.b16 %v5708
  %v5978 = vunpack.c.l.b16 %v5709
  %v5979 = vunpack.c.h.b16 %v5709
  %v5980 = vunpack.c.l.b16 %v5710
  %v5981 = vunpack.c.h.b16 %v5710
  %v5982 = vunpack.c.l.b16 %v5711
  %v5983 = vunpack.c.h.b16 %v5711
  %v5984 = vunpack.c.l.b16 %v5712
  %v5985 = vunpack.c.h.b16 %v5712
  %v5986 = vunpack.c.l.b16 %v5713
  %v5987 = vunpack.c.h.b16 %v5713
  %v5988 = vunpack.c.l.b16 %v5714
  %v5989 = vunpack.c.h.b16 %v5714
  %v5990 = vunpack.c.l.b16 %v5715
  %v5991 = vunpack.c.h.b16 %v5715
  %v5992 = vunpack.c.l.b16 %v5716
  %v5993 = vunpack.c.h.b16 %v5716
  %v5994 = vunpack.c.l.b16 %v5717
  %v5995 = vunpack.c.h.b16 %v5717
  %v5996 = vunpack.c.l.b16 %v5718
  %v5997 = vunpack.c.h.b16 %v5718
  %v5998 = vunpack.c.l.b16 %v5719
  %v5999 = vunpack.c.h.b16 %v5719
  %v6000 = vunpack.c.l.b16 %v5720
  %v6001 = vunpack.c.h.b16 %v5720
  %v6002 = vunpack.c.l.b16 %v5721
  %v6003 = vunpack.c.h.b16 %v5721
  %v6004 = vunpack.c.l.b16 %v5722
  %v6005 = vunpack.c.h.b16 %v5722
  %v6006 = vunpack.c.l.b16 %v5723
  %v6007 = vunpack.c.h.b16 %v5723
  %v6008 = vunpack.c.l.b16 %v5724
  %v6009 = vunpack.c.h.b16 %v5724
  %v6010 = vunpack.c.l.b16 %v5725
  %v6011 = vunpack.c.h.b16 %v5725
  %v6012 = vunpack.c.l.b16 %v5726
  %v6013 = vunpack.c.h.b16 %v5726
  %v6014 = vunpack.c.l.b16 %v5727
  %v6015 = vunpack.c.h.b16 %v5727
  %v6016 = vunpack.c.l.b16 %v5728
  %v6017 = vunpack.c.h.b16 %v5728
  %v6018 = vunpack.c.l.b16 %v5729
  %v6019 = vunpack.c.h.b16 %v5729
  %v6020 = vunpack.c.l.b16 %v5730
  %v6021 = vunpack.c.h.b16 %v5730
  %v6022 = vunpack.c.l.b16 %v5731
  %v6023 = vunpack.c.h.b16 %v5731
  %v6024 = vunpack.c.l.b16 %v5732
  %v6025 = vunpack.c.h.b16 %v5732
  %v6026 = vunpack.c.l.b16 %v5733
  %v6027 = vunpack.c.h.b16 %v5733
  %v6028 = vunpack.c.l.b16 %v5734
  %v6029 = vunpack.c.h.b16 %v5734
  %v6030 = vunpack.c.l.b16 %v5735
  %v6031 = vunpack.c.h.b16 %v5735
  %v6032 = vunpack.c.l.b16 %v5736
  %v6033 = vunpack.c.h.b16 %v5736
  %v6034 = vunpack.c.l.b16 %v5737
  %v6035 = vunpack.c.h.b16 %v5737
  %v6036 = vunpack.c.l.b16 %v5738
  %v6037 = vunpack.c.h.b16 %v5738
  %v6038 = vunpack.c.l.b16 %v5739
  %v6039 = vunpack.c.h.b16 %v5739
  %v6040 = vunpack.c.l.b16 %v5740
  %v6041 = vunpack.c.h.b16 %v5740
  %v6042 = vunpack.c.l.b16 %v5741
  %v6043 = vunpack.c.h.b16 %v5741
  %v6044 = vunpack.c.l.b16 %v5742
  %v6045 = vunpack.c.h.b16 %v5742
  %v6046 = vunpack.c.l.b16 %v5743
  %v6047 = vunpack.c.h.b16 %v5743
  %v6048 = vunpack.c.l.b16 %v5744
  %v6049 = vunpack.c.h.b16 %v5744
  %v6050 = vunpack.c.l.b16 %v5745
  %v6051 = vunpack.c.h.b16 %v5745
  %v6052 = vunpack.c.l.b16 %v5746
  %v6053 = vunpack.c.h.b16 %v5746
  %v6054 = vunpack.c.l.b16 %v5747
  %v6055 = vunpack.c.h.b16 %v5747
  %v6056 = vunpack.c.l.b16 %v5748
  %v6057 = vunpack.c.h.b16 %v5748
  %v6058 = vunpack.c.l.b16 %v5749
  %v6059 = vunpack.c.h.b16 %v5749
  %v6060 = vunpack.c.l.b16 %v5750
  %v6061 = vunpack.c.h.b16 %v5750
  %v6062 = vunpack.c.l.b16 %v5751
  %v6063 = vunpack.c.h.b16 %v5751
  %v6064 = vunpack.c.l.b16 %v5752
  %v6065 = vunpack.c.h.b16 %v5752
  %v6066 = vunpack.c.l.b16 %v5753
  %v6067 = vunpack.c.h.b16 %v5753
  %v6068 = vunpack.c.l.b16 %v5754
  %v6069 = vunpack.c.h.b16 %v5754
  %v6070 = vunpack.c.l.b16 %v5755
  %v6071 = vunpack.c.h.b16 %v5755
  %v6072 = vunpack.c.l.b16 %v5756
  %v6073 = vunpack.c.h.b16 %v5756
  %v6074 = vunpack.c.l.b16 %v5757
  %v6075 = vunpack.c.h.b16 %v5757
  %v6076 = vunpack.c.l.b16 %v5758
  %v6077 = vunpack.c.h.b16 %v5758
  %v6078 = vunpack.c.l.b16 %v5759
  %v6079 = vunpack.c.h.b16 %v5759
  %v6080 = vunpack.c.l.b16 %v5760
  %v6081 = vunpack.c.h.b16 %v5760
  %v6082 = vunpack.c.l.b16 %v5761
  %v6083 = vunpack.c.h.b16 %v5761
  %v6084 = vunpack.c.l.b16 %v5762
  %v6085 = vunpack.c.h.b16 %v5762
  %v6086 = vunpack.c.l.b16 %v5763
  %v6087 = vunpack.c.h.b16 %v5763
  %v6088 = vunpack.c.l.b16 %v5764
  %v6089 = vunpack.c.h.b16 %v5764
  %v6090 = vunpack.c.l.b16 %v5765
  %v6091 = vunpack.c.h.b16 %v5765
  %v6092 = vunpack.c.l.b16 %v5766
  %v6093 = vunpack.c.h.b16 %v5766
  %v6094 = vunpack.c.l.b16 %v5767
  %v6095 = vunpack.c.h.b16 %v5767
  %v6096 = vunpack.c.l.b16 %v5768
  %v6097 = vunpack.c.h.b16 %v5768
  %v6098 = vunpack.c.l.b16 %v5769
  %v6099 = vunpack.c.h.b16 %v5769
  %v6100 = vunpack.c.l.b16 %v5770
  %v6101 = vunpack.c.h.b16 %v5770
  %v6102 = vunpack.c.l.b16 %v5771
  %v6103 = vunpack.c.h.b16 %v5771
  %v6104 = vunpack.c.l.b16 %v5772
  %v6105 = vunpack.c.h.b16 %v5772
  %v6106 = vunpack.c.l.b16 %v5773
  %v6107 = vunpack.c.h.b16 %v5773
  %v6108 = vunpack.c.l.b16 %v5774
  %v6109 = vunpack.c.h.b16 %v5774
  %v6110 = vunpack.c.l.b16 %v5775
  %v6111 = vunpack.c.h.b16 %v5775
  %v6112 = vunpack.c.l.b16 %v5776
  %v6113 = vunpack.c.h.b16 %v5776
  %v6114 = vunpack.c.l.b16 %v5777
  %v6115 = vunpack.c.h.b16 %v5777
  %v6116 = vunpack.c.l.b16 %v5778
  %v6117 = vunpack.c.h.b16 %v5778
  %v6118 = vunpack.c.l.b16 %v5779
  %v6119 = vunpack.c.h.b16 %v5779
  %v6120 = vunpack.c.l.b16 %v5780
  %v6121 = vunpack.c.h.b16 %v5780
  %v6122 = vunpack.c.l.b16 %v5781
  %v6123 = vunpack.c.h.b16 %v5781
  %v6124 = vunpack.c.l.b16 %v5782
  %v6125 = vunpack.c.h.b16 %v5782
  %v6126 = vunpack.c.l.b16 %v5783
  %v6127 = vunpack.c.h.b16 %v5783
  %v6128 = vunpack.c.l.b16 %v5784
  %v6129 = vunpack.c.h.b16 %v5784
  %v6130 = vunpack.c.l.b16 %v5785
  %v6131 = vunpack.c.h.b16 %v5785
  %v6132 = vunpack.c.l.b16 %v5786
  %v6133 = vunpack.c.h.b16 %v5786
  %v6134 = vunpack.c.l.b16 %v5787
  %v6135 = vunpack.c.h.b16 %v5787
  %v6136 = vunpack.c.l.b16 %v5788
  %v6137 = vunpack.c.h.b16 %v5788
  %v6138 = vunpack.c.l.b16 %v5789
  %v6139 = vunpack.c.h.b16 %v5789
  %v6140 = vunpack.c.l.b16 %v5790
  %v6141 = vunpack.c.h.b16 %v5790
  %v6142 = vunpack.c.l.b16 %v5791
  %v6143 = vunpack.c.h.b16 %v5791
  %v6144 = vunpack.c.l.b16 %v5792
  %v6145 = vunpack.c.h.b16 %v5792
  %v6146 = vunpack.c.l.b16 %v5793
  %v6147 = vunpack.c.h.b16 %v5793
  %v6148 = vunpack.c.l.b16 %v5794
  %v6149 = vunpack.c.h.b16 %v5794
  %v6150 = vunpack.c.l.b16 %v5795
  %v6151 = vunpack.c.h.b16 %v5795
  %v6152 = vunpack.c.l.b16 %v5796
  %v6153 = vunpack.c.h.b16 %v5796
  %v6154 = vunpack.c.l.b16 %v5797
  %v6155 = vunpack.c.h.b16 %v5797
  %v6156 = vunpack.c.l.b16 %v5798
  %v6157 = vunpack.c.h.b16 %v5798
  %v6158 = vunpack.c.l.b16 %v5799
  %v6159 = vunpack.c.h.b16 %v5799
  %v6160 = vunpack.c.l.b16 %v5800
  %v6161 = vunpack.c.h.b16 %v5800
  %v6162 = vunpack.c.l.b16 %v5801
  %v6163 = vunpack.c.h.b16 %v5801
  %v6164 = vunpack.c.l.b16 %v5802
  %v6165 = vunpack.c.h.b16 %v5802
  %v6166 = vunpack.c.l.b16 %v5803
  %v6167 = vunpack.c.h.b16 %v5803
  %v6168 = vunpack.c.l.b16 %v5804
  %v6169 = vunpack.c.h.b16 %v5804
  %v6170 = vunpack.c.l.b16 %v5805
  %v6171 = vunpack.c.h.b16 %v5805
  %v6172 = vunpack.c.l.b16 %v5806
  %v6173 = vunpack.c.h.b16 %v5806
  %v6174 = vunpack.c.l.b16 %v5807
  %v6175 = vunpack.c.h.b16 %v5807
  %v6176 = vunpack.c.l.b16 %v5808
  %v6177 = vunpack.c.h.b16 %v5808
  %v6178 = vunpack.c.l.b16 %v5809
  %v6179 = vunpack.c.h.b16 %v5809
  %v6180 = vunpack.c.l.b16 %v5810
  %v6181 = vunpack.c.h.b16 %v5810
  %v6182 = vunpack.c.l.b16 %v5811
  %v6183 = vunpack.c.h.b16 %v5811
  %v6184 = vunpack.c.l.b16 %v5812
  %v6185 = vunpack.c.h.b16 %v5812
  %v6186 = vunpack.c.l.b16 %v5813
  %v6187 = vunpack.c.h.b16 %v5813
  %v6188 = vunpack.c.l.b16 %v5814
  %v6189 = vunpack.c.h.b16 %v5814
  %v6190 = vunpack.c.l.b16 %v5815
  %v6191 = vunpack.c.h.b16 %v5815
  %v6192 = vunpack.c.l.b16 %v5816
  %v6193 = vunpack.c.h.b16 %v5816
  %v6194 = vunpack.c.l.b16 %v5817
  %v6195 = vunpack.c.h.b16 %v5817
  %v6196 = vunpack.c.l.b16 %v5818
  %v6197 = vunpack.c.h.b16 %v5818
  %v6198 = vunpack.c.l.b16 %v5819
  %v6199 = vunpack.c.h.b16 %v5819
  %v6200 = vunpack.c.l.b16 %v5820
  %v6201 = vunpack.c.h.b16 %v5820
  %v6202 = vunpack.c.l.b16 %v5821
  %v6203 = vunpack.c.h.b16 %v5821
  %v6204 = vunpack.c.l.b16 %v5822
  %v6205 = vunpack.c.h.b16 %v5822
  %v6206 = vunpack.c.l.b16 %v5823
  %v6207 = vunpack.c.h.b16 %v5823
  %v6208 = vunpack.c.l.b16 %v5824
  %v6209 = vunpack.c.h.b16 %v5824
  %v6210 = vunpack.c.l.b16 %v5825
  %v6211 = vunpack.c.h.b16 %v5825
  %v6212 = vunpack.c.l.b16 %v5826
  %v6213 = vunpack.c.h.b16 %v5826
  %v6214 = vunpack.c.l.b16 %v5827
  %v6215 = vunpack.c.h.b16 %v5827
  %v6216 = vunpack.c.l.b16 %v5828
  %v6217 = vunpack.c.h.b16 %v5828
  %v6218 = vunpack.c.l.b16 %v5829
  %v6219 = vunpack.c.h.b16 %v5829
  %v6220 = vunpack.c.l.b16 %v5830
  %v6221 = vunpack.c.h.b16 %v5830
  %v6222 = vunpack.c.l.b16 %v5831
  %v6223 = vunpack.c.h.b16 %v5831
  %v6224 = vpack.c.b16 %v5972, %v5968
  %v6225 = vpack.c.b16 %v5973, %v5969
  %v6226 = vpack.c.b16 %v5974, %v5970
  %v6227 = vpack.c.b16 %v5975, %v5971
  %v6228 = vpack.c.b16 %v5980, %v5976
  %v6229 = vpack.c.b16 %v5981, %v5977
  %v6230 = vpack.c.b16 %v5982, %v5978
  %v6231 = vpack.c.b16 %v5983, %v5979
  %v6232 = vpack.c.b16 %v5988, %v5984
  %v6233 = vpack.c.b16 %v5989, %v5985
  %v6234 = vpack.c.b16 %v5990, %v5986
  %v6235 = vpack.c.b16 %v5991, %v5987
  %v6236 = vpack.c.b16 %v5996, %v5992
  %v6237 = vpack.c.b16 %v5997, %v5993
  %v6238 = vpack.c.b16 %v5998, %v5994
  %v6239 = vpack.c.b16 %v5999, %v5995
  %v6240 = vpack.c.b16 %v6004, %v6000
  %v6241 = vpack.c.b16 %v6005, %v6001
  %v6242 = vpack.c.b16 %v6006, %v6002
  %v6243 = vpack.c.b16 %v6007, %v6003
  %v6244 = vpack.c.b16 %v6012, %v6008
  %v6245 = vpack.c.b16 %v6013, %v6009
  %v6246 = vpack.c.b16 %v6014, %v6010
  %v6247 = vpack.c.b16 %v6015, %v6011
  %v6248 = vpack.c.b16 %v6020, %v6016
  %v6249 = vpack.c.b16 %v6021, %v6017
  %v6250 = vpack.c.b16 %v6022, %v6018
  %v6251 = vpack.c.b16 %v6023, %v6019
  %v6252 = vpack.c.b16 %v6028, %v6024
  %v6253 = vpack.c.b16 %v6029, %v6025
  %v6254 = vpack.c.b16 %v6030, %v6026
  %v6255 = vpack.c.b16 %v6031, %v6027
  %v6256 = vpack.c.b16 %v6036, %v6032
  %v6257 = vpack.c.b16 %v6037, %v6033
  %v6258 = vpack.c.b16 %v6038, %v6034
  %v6259 = vpack.c.b16 %v6039, %v6035
  %v6260 = vpack.c.b16 %v6044, %v6040
  %v6261 = vpack.c.b16 %v6045, %v6041
  %v6262 = vpack.c.b16 %v6046, %v6042
  %v6263 = vpack.c.b16 %v6047, %v6043
  %v6264 = vpack.c.b16 %v6052, %v6048
  %v6265 = vpack.c.b16 %v6053, %v6049
  %v6266 = vpack.c.b16 %v6054, %v6050
  %v6267 = vpack.c.b16 %v6055, %v6051
  %v6268 = vpack.c.b16 %v6060, %v6056
  %v6269 = vpack.c.b16 %v6061, %v6057
  %v6270 = vpack.c.b16 %v6062, %v6058
  %v6271 = vpack.c.b16 %v6063, %v6059
  %v6272 = vpack.c.b16 %v6068, %v6064
  %v6273 = vpack.c.b16 %v6069, %v6065
  %v6274 = vpack.c.b16 %v6070, %v6066
  %v6275 = vpack.c.b16 %v6071, %v6067
  %v6276 = vpack.c.b16 %v6076, %v6072
  %v6277 = vpack.c.b16 %v6077, %v6073
  %v6278 = vpack.c.b16 %v6078, %v6074
  %v6279 = vpack.c.b16 %v6079, %v6075
  %v6280 = vpack.c.b16 %v6084, %v6080
  %v6281 = vpack.c.b16 %v6085, %v6081
  %v6282 = vpack.c.b16 %v6086, %v6082
  %v6283 = vpack.c.b16 %v6087, %v6083
  %v6284 = vpack.c.b16 %v6092, %v6088
  %v6285 = vpack.c.b16 %v6093, %v6089
  %v6286 = vpack.c.b16 %v6094, %v6090
  %v6287 = vpack.c.b16 %v6095, %v6091
  %v6288 = vpack.c.b16 %v6100, %v6096
  %v6289 = vpack.c.b16 %v6101, %v6097
  %v6290 = vpack.c.b16 %v6102, %v6098
  %v6291 = vpack.c.b16 %v6103, %v6099
  %v6292 = vpack.c.b16 %v6108, %v6104
  %v6293 = vpack.c.b16 %v6109, %v6105
  %v6294 = vpack.c.b16 %v6110, %v6106
  %v6295 = vpack.c.b16 %v6111, %v6107
  %v6296 = vpack.c.b16 %v6116, %v6112
  %v6297 = vpack.c.b16 %v6117, %v6113
  %v6298 = vpack.c.b16 %v6118, %v6114
  %v6299 = vpack.c.b16 %v6119, %v6115
  %v6300 = vpack.c.b16 %v6124, %v6120
  %v6301 = vpack.c.b16 %v6125, %v6121
  %v6302 = vpack.c.b16 %v6126, %v6122
  %v6303 = vpack.c.b16 %v6127, %v6123
  %v6304 = vpack.c.b16 %v6132, %v6128
  %v6305 = vpack.c.b16 %v6133, %v6129
  %v6306 = vpack.c.b16 %v6134, %v6130
  %v6307 = vpack.c.b16 %v6135, %v6131
  %v6308 = vpack.c.b16 %v6140, %v6136
  %v6309 = vpack.c.b16 %v6141, %v6137
  %v6310 = vpack.c.b16 %v6142, %v6138
  %v6311 = vpack.c.b16 %v6143, %v6139
  %v6312 = vpack.c.b16 %v6148, %v6144
  %v6313 = vpack.c.b16 %v6149, %v6145
  %v6314 = vpack.c.b16 %v6150, %v6146
  %v6315 = vpack.c.b16 %v6151, %v6147
  %v6316 = vpack.c.b16 %v6156, %v6152
  %v6317 = vpack.c.b16 %v6157, %v6153
  %v6318 = vpack.c.b16 %v6158, %v6154
  %v6319 = vpack.c.b16 %v6159, %v6155
  %v6320 = vpack.c.b16 %v6164, %v6160
  %v6321 = vpack.c.b16 %v6165, %v6161
  %v6322 = vpack.c.b16 %v6166, %v6162
  %v6323 = vpack.c.b16 %v6167, %v6163
  %v6324 = vpack.c.b16 %v6172, %v6168
  %v6325 = vpack.c.b16 %v6173, %v6169
  %v6326 = vpack.c.b16 %v6174, %v6170
  %v6327 = vpack.c.b16 %v6175, %v6171
  %v6328 = vpack.c.b16 %v6180, %v6176
  %v6329 = vpack.c.b16 %v6181, %v6177
  %v6330 = vpack.c.b16 %v6182, %v6178
  %v6331 = vpack.c.b16 %v6183, %v6179
  %v6332 = vpack.c.b16 %v6188, %v6184
  %v6333 = vpack.c.b16 %v6189, %v6185
  %v6334 = vpack.c.b16 %v6190, %v6186
  %v6335 = vpack.c.b16 %v6191, %v6187
  %v6336 = vpack.c.b16 %v6196, %v6192
  %v6337 = vpack.c.b16 %v6197, %v6193
  %v6338 = vpack.c.b16 %v6198, %v6194
  %v6339 = vpack.c.b16 %v6199, %v6195
  %v6340 = vpack.c.b16 %v6204, %v6200
  %v6341 = vpack.c.b16 %v6205, %v6201
  %v6342 = vpack.c.b16 %v6206, %v6202
  %v6343 = vpack.c.b16 %v6207, %v6203
  %v6344 = vpack.c.b16 %v6212, %v6208
  %v6345 = vpack.c.b16 %v6213, %v6209
  %v6346 = vpack.c.b16 %v6214, %v6210
  %v6347 = vpack.c.b16 %v6215, %v6211
  %v6348 = vpack.c.b16 %v6220, %v6216
  %v6349 = vpack.c.b16 %v6221, %v6217
  %v6350 = vpack.c.b16 %v6222, %v6218
  %v6351 = vpack.c.b16 %v6223, %v6219
  %6480 = vmatprep.subr.bf16.mxu0 %v6225
  %6481 = vmatpush1.bf16.msra.mxu0 %v6224
  %6482 = vmatprep.subr.bf16.mxu0 %v6229
  %6483 = vmatpush1.bf16.msra.mxu0 %v6228
  %6484 = vmatprep.subr.bf16.mxu0 %v6233
  %6485 = vmatpush1.bf16.msra.mxu0 %v6232
  %6486 = vmatprep.subr.bf16.mxu0 %v6237
  %6487 = vmatpush1.bf16.msra.mxu0 %v6236
  %6488 = vmatprep.subr.bf16.mxu0 %v6241
  %6489 = vmatpush1.bf16.msra.mxu0 %v6240
  %6490 = vmatprep.subr.bf16.mxu0 %v6245
  %6491 = vmatpush1.bf16.msra.mxu0 %v6244
  %6492 = vmatprep.subr.bf16.mxu0 %v6249
  %6493 = vmatpush1.bf16.msra.mxu0 %v6248
  %6494 = vmatprep.subr.bf16.mxu0 %v6253
  %6495 = vmatpush1.bf16.msra.mxu0 %v6252
  %6496 = vmatprep.subr.bf16.mxu0 %v6257
  %6497 = vmatpush1.bf16.msra.mxu0 %v6256
  %6498 = vmatprep.subr.bf16.mxu0 %v6261
  %6499 = vmatpush1.bf16.msra.mxu0 %v6260
  %6500 = vmatprep.subr.bf16.mxu0 %v6265
  %6501 = vmatpush1.bf16.msra.mxu0 %v6264
  %6502 = vmatprep.subr.bf16.mxu0 %v6269
  %6503 = vmatpush1.bf16.msra.mxu0 %v6268
  %6504 = vmatprep.subr.bf16.mxu0 %v6273
  %6505 = vmatpush1.bf16.msra.mxu0 %v6272
  %6506 = vmatprep.subr.bf16.mxu0 %v6277
  %6507 = vmatpush1.bf16.msra.mxu0 %v6276
  %6508 = vmatprep.subr.bf16.mxu0 %v6281
  %6509 = vmatpush1.bf16.msra.mxu0 %v6280
  %6510 = vmatprep.subr.bf16.mxu0 %v6285
  %6511 = vmatpush1.bf16.msra.mxu0 %v6284
  %6512 = vmatprep.mubr.bf16.mxu0 %v5833
  %6513 = vmatmul.mubr.bf16.gmra.mrb[0].mxu0 %v5832
  %v6514 = vpop.f32.mrb[0].mxu0
  %v6515 = vadd.f32 0.0, %v6514
  %v6516 = vpop.f32.mrb[0].mxu0
  %v6517 = vadd.f32 0.0, %v6516
  %v6518 = vpop.f32.mrb[0].mxu0
  %v6519 = vadd.f32 0.0, %v6518
  %v6520 = vpop.f32.mrb[0].mxu0
  %v6521 = vadd.f32 0.0, %v6520
  %6522 = vmatprep.mubr.bf16.mxu0 %v5837
  %6523 = vmatmul.mubr.bf16.gmra.mrb[0].mxu0 %v5836
  %v6524 = vpop.f32.mrb[0].mxu0
  %v6525 = vadd.f32 0.0, %v6524
  %v6526 = vpop.f32.mrb[0].mxu0
  %v6527 = vadd.f32 0.0, %v6526
  %v6528 = vpop.f32.mrb[0].mxu0
  %v6529 = vadd.f32 0.0, %v6528
  %v6530 = vpop.f32.mrb[0].mxu0
  %v6531 = vadd.f32 0.0, %v6530
  %6532 = vdwg.mxu0
  %6533 = vmatprep.subr.bf16.mxu0 %v6289
  %6534 = vmatpush1.bf16.msra.mxu0 %v6288
  %6535 = vmatprep.subr.bf16.mxu0 %v6293
  %6536 = vmatpush1.bf16.msra.mxu0 %v6292
  %6537 = vmatprep.subr.bf16.mxu0 %v6297
  %6538 = vmatpush1.bf16.msra.mxu0 %v6296
  %6539 = vmatprep.subr.bf16.mxu0 %v6301
  %6540 = vmatpush1.bf16.msra.mxu0 %v6300
  %6541 = vmatprep.subr.bf16.mxu0 %v6305
  %6542 = vmatpush1.bf16.msra.mxu0 %v6304
  %6543 = vmatprep.subr.bf16.mxu0 %v6309
  %6544 = vmatpush1.bf16.msra.mxu0 %v6308
  %6545 = vmatprep.subr.bf16.mxu0 %v6313
  %6546 = vmatpush1.bf16.msra.mxu0 %v6312
  %6547 = vmatprep.subr.bf16.mxu0 %v6317
  %6548 = vmatpush1.bf16.msra.mxu0 %v6316
  %6549 = vmatprep.subr.bf16.mxu0 %v6321
  %6550 = vmatpush1.bf16.msra.mxu0 %v6320
  %6551 = vmatprep.subr.bf16.mxu0 %v6325
  %6552 = vmatpush1.bf16.msra.mxu0 %v6324
  %6553 = vmatprep.subr.bf16.mxu0 %v6329
  %6554 = vmatpush1.bf16.msra.mxu0 %v6328
  %6555 = vmatprep.subr.bf16.mxu0 %v6333
  %6556 = vmatpush1.bf16.msra.mxu0 %v6332
  %6557 = vmatprep.subr.bf16.mxu0 %v6337
  %6558 = vmatpush1.bf16.msra.mxu0 %v6336
  %6559 = vmatprep.subr.bf16.mxu0 %v6341
  %6560 = vmatpush1.bf16.msra.mxu0 %v6340
  %6561 = vmatprep.subr.bf16.mxu0 %v6345
  %6562 = vmatpush1.bf16.msra.mxu0 %v6344
  %6563 = vmatprep.subr.bf16.mxu0 %v6349
  %6564 = vmatpush1.bf16.msra.mxu0 %v6348
  %6565 = vmatprep.mubr.bf16.mxu0 %v5835
  %6566 = vmatmul.mubr.bf16.gmra.mrb[0].mxu0 %v5834
  %v6567 = vpop.f32.mrb[0].mxu0
  %v6568 = vadd.f32 %v6515, %v6567
  %v6569 = vpop.f32.mrb[0].mxu0
  %v6570 = vadd.f32 %v6517, %v6569
  %v6571 = vpop.f32.mrb[0].mxu0
  %v6572 = vadd.f32 %v6519, %v6571
  %v6573 = vpop.f32.mrb[0].mxu0
  %v6574 = vadd.f32 %v6521, %v6573
  %6575 = vmatprep.mubr.bf16.mxu0 %v5839
  %6576 = vmatmul.mubr.bf16.gmra.mrb[0].mxu0 %v5838
  %v6577 = vpop.f32.mrb[0].mxu0
  %v6578 = vadd.f32 %v6525, %v6577
  %v6579 = vpop.f32.mrb[0].mxu0
  %v6580 = vadd.f32 %v6527, %v6579
  %v6581 = vpop.f32.mrb[0].mxu0
  %v6582 = vadd.f32 %v6529, %v6581
  %v6583 = vpop.f32.mrb[0].mxu0
  %v6584 = vadd.f32 %v6531, %v6583
  %6585 = vdwg.mxu0
  %6586 = vmatprep.subr.bf16.mxu0 %v6227
  %6587 = vmatpush1.bf16.msra.mxu0 %v6226
  %6588 = vmatprep.subr.bf16.mxu0 %v6231
  %6589 = vmatpush1.bf16.msra.mxu0 %v6230
  %6590 = vmatprep.subr.bf16.mxu0 %v6235
  %6591 = vmatpush1.bf16.msra.mxu0 %v6234
  %6592 = vmatprep.subr.bf16.mxu0 %v6239
  %6593 = vmatpush1.bf16.msra.mxu0 %v6238
  %6594 = vmatprep.subr.bf16.mxu0 %v6243
  %6595 = vmatpush1.bf16.msra.mxu0 %v6242
  %6596 = vmatprep.subr.bf16.mxu0 %v6247
  %6597 = vmatpush1.bf16.msra.mxu0 %v6246
  %6598 = vmatprep.subr.bf16.mxu0 %v6251
  %6599 = vmatpush1.bf16.msra.mxu0 %v6250
  %6600 = vmatprep.subr.bf16.mxu0 %v6255
  %6601 = vmatpush1.bf16.msra.mxu0 %v6254
  %6602 = vmatprep.subr.bf16.mxu0 %v6259
  %6603 = vmatpush1.bf16.msra.mxu0 %v6258
  %6604 = vmatprep.subr.bf16.mxu0 %v6263
  %6605 = vmatpush1.bf16.msra.mxu0 %v6262
  %6606 = vmatprep.subr.bf16.mxu0 %v6267
  %6607 = vmatpush1.bf16.msra.mxu0 %v6266
  %6608 = vmatprep.subr.bf16.mxu0 %v6271
  %6609 = vmatpush1.bf16.msra.mxu0 %v6270
  %6610 = vmatprep.subr.bf16.mxu0 %v6275
  %6611 = vmatpush1.bf16.msra.mxu0 %v6274
  %6612 = vmatprep.subr.bf16.mxu0 %v6279
  %6613 = vmatpush1.bf16.msra.mxu0 %v6278
  %6614 = vmatprep.subr.bf16.mxu0 %v6283
  %6615 = vmatpush1.bf16.msra.mxu0 %v6282
  %6616 = vmatprep.subr.bf16.mxu0 %v6287
  %6617 = vmatpush1.bf16.msra.mxu0 %v6286
  %6618 = vmatprep.mubr.bf16.mxu0 %v5833
  %6619 = vmatmul.mubr.bf16.gmra.mrb[0].mxu0 %v5832
  %v6620 = vpop.f32.mrb[0].mxu0
  %v6621 = vadd.f32 0.0, %v6620
  %v6622 = vpop.f32.mrb[0].mxu0
  %v6623 = vadd.f32 0.0, %v6622
  %v6624 = vpop.f32.mrb[0].mxu0
  %v6625 = vadd.f32 0.0, %v6624
  %v6626 = vpop.f32.mrb[0].mxu0
  %v6627 = vadd.f32 0.0, %v6626
  %6628 = vmatprep.mubr.bf16.mxu0 %v5837
  %6629 = vmatmul.mubr.bf16.gmra.mrb[0].mxu0 %v5836
  %v6630 = vpop.f32.mrb[0].mxu0
  %v6631 = vadd.f32 0.0, %v6630
  %v6632 = vpop.f32.mrb[0].mxu0
  %v6633 = vadd.f32 0.0, %v6632
  %v6634 = vpop.f32.mrb[0].mxu0
  %v6635 = vadd.f32 0.0, %v6634
  %v6636 = vpop.f32.mrb[0].mxu0
  %v6637 = vadd.f32 0.0, %v6636
  %6638 = vdwg.mxu0
  %6639 = vmatprep.subr.bf16.mxu0 %v6291
  %6640 = vmatpush1.bf16.msra.mxu0 %v6290
  %6641 = vmatprep.subr.bf16.mxu0 %v6295
  %6642 = vmatpush1.bf16.msra.mxu0 %v6294
  %6643 = vmatprep.subr.bf16.mxu0 %v6299
  %6644 = vmatpush1.bf16.msra.mxu0 %v6298
  %6645 = vmatprep.subr.bf16.mxu0 %v6303
  %6646 = vmatpush1.bf16.msra.mxu0 %v6302
  %6647 = vmatprep.subr.bf16.mxu0 %v6307
  %6648 = vmatpush1.bf16.msra.mxu0 %v6306
  %6649 = vmatprep.subr.bf16.mxu0 %v6311
  %6650 = vmatpush1.bf16.msra.mxu0 %v6310
  %6651 = vmatprep.subr.bf16.mxu0 %v6315
  %6652 = vmatpush1.bf16.msra.mxu0 %v6314
  %6653 = vmatprep.subr.bf16.mxu0 %v6319
  %6654 = vmatpush1.bf16.msra.mxu0 %v6318
  %6655 = vmatprep.subr.bf16.mxu0 %v6323
  %6656 = vmatpush1.bf16.msra.mxu0 %v6322
  %6657 = vmatprep.subr.bf16.mxu0 %v6327
  %6658 = vmatpush1.bf16.msra.mxu0 %v6326
  %6659 = vmatprep.subr.bf16.mxu0 %v6331
  %6660 = vmatpush1.bf16.msra.mxu0 %v6330
  %6661 = vmatprep.subr.bf16.mxu0 %v6335
  %6662 = vmatpush1.bf16.msra.mxu0 %v6334
  %6663 = vmatprep.subr.bf16.mxu0 %v6339
  %6664 = vmatpush1.bf16.msra.mxu0 %v6338
  %6665 = vmatprep.subr.bf16.mxu0 %v6343
  %6666 = vmatpush1.bf16.msra.mxu0 %v6342
  %6667 = vmatprep.subr.bf16.mxu0 %v6347
  %6668 = vmatpush1.bf16.msra.mxu0 %v6346
  %6669 = vmatprep.subr.bf16.mxu0 %v6351
  %6670 = vmatpush1.bf16.msra.mxu0 %v6350
  %6671 = vmatprep.mubr.bf16.mxu0 %v5835
  %6672 = vmatmul.mubr.bf16.gmra.mrb[0].mxu0 %v5834
  %v6673 = vpop.f32.mrb[0].mxu0
  %v6674 = vadd.f32 %v6621, %v6673
  %v6675 = vpop.f32.mrb[0].mxu0
  %v6676 = vadd.f32 %v6623, %v6675
  %v6677 = vpop.f32.mrb[0].mxu0
  %v6678 = vadd.f32 %v6625, %v6677
  %v6679 = vpop.f32.mrb[0].mxu0
  %v6680 = vadd.f32 %v6627, %v6679
  %6681 = vmatprep.mubr.bf16.mxu0 %v5839
  %6682 = vmatmul.mubr.bf16.gmra.mrb[0].mxu0 %v5838
  %v6683 = vpop.f32.mrb[0].mxu0
  %v6684 = vadd.f32 %v6631, %v6683
  %v6685 = vpop.f32.mrb[0].mxu0
  %v6686 = vadd.f32 %v6633, %v6685
  %v6687 = vpop.f32.mrb[0].mxu0
  %v6688 = vadd.f32 %v6635, %v6687
  %v6689 = vpop.f32.mrb[0].mxu0
  %v6690 = vadd.f32 %v6637, %v6689
  %6691 = vdwg.mxu0
  %v6692 = vadd.f32 %v5491, %v6568
  %v6693 = vadd.f32 %v5493, %v6570
  %v6694 = vadd.f32 %v5597, %v6674
  %v6695 = vadd.f32 %v5599, %v6676
  %v6696 = vadd.f32 %v5495, %v6572
  %v6697 = vadd.f32 %v5497, %v6574
  %v6698 = vadd.f32 %v5601, %v6678
  %v6699 = vadd.f32 %v5603, %v6680
  %v6700 = vadd.f32 %v5501, %v6578
  %v6701 = vadd.f32 %v5503, %v6580
  %v6702 = vadd.f32 %v5607, %v6684
  %v6703 = vadd.f32 %v5609, %v6686
  %v6704 = vadd.f32 %v5505, %v6582
  %v6705 = vadd.f32 %v5507, %v6584
  %v6706 = vadd.f32 %v5611, %v6688
  %v6707 = vadd.f32 %v5613, %v6690
  %v6708 = vld [vmem:[%s5] sm:$0xf]
  %v6710 = vlaneseq
  %v6711 = vshrl.u32 %v6710, 7
  %v6712 = vsub.s32 0, %v6711
  %v6713 = vrot.slane %v6708, %v6712
  %v6714 = vlaneseq
  %v6715 = vshrl.u32 %v6714, 7
  %v6716 = vsub.s32 1, %v6715
  %v6717 = vrot.slane %v6708, %v6716
  %v6718 = vlaneseq
  %v6719 = vshrl.u32 %v6718, 7
  %v6720 = vsub.s32 2, %v6719
  %v6721 = vrot.slane %v6708, %v6720
  %v6722 = vlaneseq
  %v6723 = vshrl.u32 %v6722, 7
  %v6724 = vsub.s32 3, %v6723
  %v6725 = vrot.slane %v6708, %v6724
  %v6730 = vmul.f32 %v6692, %v6713
  %v6731 = vmul.f32 %v6693, %v6717
  %v6732 = vmul.f32 %v6694, %v6721
  %v6733 = vmul.f32 %v6695, %v6725
  %v6734 = vmul.f32 %v6696, %v6713
  %v6735 = vmul.f32 %v6697, %v6717
  %v6736 = vmul.f32 %v6698, %v6721
  %v6737 = vmul.f32 %v6699, %v6725
  %v6738 = vmul.f32 %v6700, %v6713
  %v6739 = vmul.f32 %v6701, %v6717
  %v6740 = vmul.f32 %v6702, %v6721
  %v6741 = vmul.f32 %v6703, %v6725
  %v6742 = vmul.f32 %v6704, %v6713
  %v6743 = vmul.f32 %v6705, %v6717
  %v6744 = vmul.f32 %v6706, %v6721
  %v6745 = vmul.f32 %v6707, %v6725
  %v6746 = vld [vmem:[%s6] sm:$0xf]
  %v6748 = vlaneseq
  %v6749 = vshrl.u32 %v6748, 7
  %v6750 = vsub.s32 0, %v6749
  %v6751 = vrot.slane %v6746, %v6750
  %v6752 = vlaneseq
  %v6753 = vshrl.u32 %v6752, 7
  %v6754 = vsub.s32 1, %v6753
  %v6755 = vrot.slane %v6746, %v6754
  %v6756 = vlaneseq
  %v6757 = vshrl.u32 %v6756, 7
  %v6758 = vsub.s32 2, %v6757
  %v6759 = vrot.slane %v6746, %v6758
  %v6760 = vlaneseq
  %v6761 = vshrl.u32 %v6760, 7
  %v6762 = vsub.s32 3, %v6761
  %v6763 = vrot.slane %v6746, %v6762
  %v6768 = vadd.f32 %v6730, %v6751
  %v6769 = vadd.f32 %v6731, %v6755
  %v6770 = vadd.f32 %v6732, %v6759
  %v6771 = vadd.f32 %v6733, %v6763
  %v6772 = vadd.f32 %v6734, %v6751
  %v6773 = vadd.f32 %v6735, %v6755
  %v6774 = vadd.f32 %v6736, %v6759
  %v6775 = vadd.f32 %v6737, %v6763
  %v6776 = vadd.f32 %v6738, %v6751
  %v6777 = vadd.f32 %v6739, %v6755
  %v6778 = vadd.f32 %v6740, %v6759
  %v6779 = vadd.f32 %v6741, %v6763
  %v6780 = vadd.f32 %v6742, %v6751
  %v6781 = vadd.f32 %v6743, %v6755
  %v6782 = vadd.f32 %v6744, %v6759
  %v6783 = vadd.f32 %v6745, %v6763
  %v6784 = vadd.f32 %v6768, %v41
  %v6785 = vadd.f32 %v6769, %v42
  %v6786 = vadd.f32 %v6770, %v43
  %v6787 = vadd.f32 %v6771, %v44
  %v6788 = vadd.f32 %v6772, %v45
  %v6789 = vadd.f32 %v6773, %v46
  %v6790 = vadd.f32 %v6774, %v47
  %v6791 = vadd.f32 %v6775, %v48
  %v6792 = vadd.f32 %v6776, %v49
  %v6793 = vadd.f32 %v6777, %v50
  %v6794 = vadd.f32 %v6778, %v51
  %v6795 = vadd.f32 %v6779, %v52
  %v6796 = vadd.f32 %v6780, %v53
  %v6797 = vadd.f32 %v6781, %v54
  %v6798 = vadd.f32 %v6782, %v55
  %v6799 = vadd.f32 %v6783, %v56
  %v6800 = vmax.f32 %v6784, 0.0
  %v6801 = vmax.f32 %v6785, 0.0
  %v6802 = vmax.f32 %v6786, 0.0
  %v6803 = vmax.f32 %v6787, 0.0
  %v6804 = vmax.f32 %v6788, 0.0
  %v6805 = vmax.f32 %v6789, 0.0
  %v6806 = vmax.f32 %v6790, 0.0
  %v6807 = vmax.f32 %v6791, 0.0
  %v6808 = vmax.f32 %v6792, 0.0
  %v6809 = vmax.f32 %v6793, 0.0
  %v6810 = vmax.f32 %v6794, 0.0
  %v6811 = vmax.f32 %v6795, 0.0
  %v6812 = vmax.f32 %v6796, 0.0
  %v6813 = vmax.f32 %v6797, 0.0
  %v6814 = vmax.f32 %v6798, 0.0
  %v6815 = vmax.f32 %v6799, 0.0
  %6816 = vst [vmem:[%s7] sm:$0xff] %v6800
  %6817 = vst [vmem:[%s7 + $0x8] sm:$0xff] %v6801
  %6818 = vst [vmem:[%s7 + $0x10] sm:$0xff] %v6802
  %6819 = vst [vmem:[%s7 + $0x18] sm:$0xff] %v6803
  %6820 = vst [vmem:[%s7 + $0x20] sm:$0xff] %v6804
  %6821 = vst [vmem:[%s7 + $0x28] sm:$0xff] %v6805
  %6822 = vst [vmem:[%s7 + $0x30] sm:$0xff] %v6806
  %6823 = vst [vmem:[%s7 + $0x38] sm:$0xff] %v6807
  %6824 = vst [vmem:[%s7 + $0x40] sm:$0xff] %v6808
  %6825 = vst [vmem:[%s7 + $0x48] sm:$0xff] %v6809
  %6826 = vst [vmem:[%s7 + $0x50] sm:$0xff] %v6810
  %6827 = vst [vmem:[%s7 + $0x58] sm:$0xff] %v6811
  %6828 = vst [vmem:[%s7 + $0x60] sm:$0xff] %v6812
  %6829 = vst [vmem:[%s7 + $0x68] sm:$0xff] %v6813
  %6830 = vst [vmem:[%s7 + $0x70] sm:$0xff] %v6814
  %6831 = vst [vmem:[%s7 + $0x78] sm:$0xff] %v6815
  // Predicated region
  $region30: #{residual_block.1} parent=0 // pred_check
    _
  $region31: #{residual_block.1} parent=0 // pred_check_branch
    %6833 = sbr.rel (0) target = $region33
  $region32: #{residual_block.1} parent=0 // pred_region
    _
  $region33: #{residual_block.1} parent=0 // pred_fallthru
    _
  // Predicated region
  $region34: #{residual_block.1} parent=0 // pred_check
    _
  $region35: #{residual_block.1} parent=0 // pred_check_branch
    %6835 = sbr.rel (0) target = $region37
  $region36: #{residual_block.1} parent=0 // pred_region
    _
  $region37: #{residual_block.1} parent=0 // pred_fallthru
    _

</llo_original>
